<compile_context>
chip_gen: v7x
topology: tpu7x:2x2x1
jax: 0.10.0
libtpu: 0.0.40
codegen_flags: <defaults>
</compile_context>

<pallas_src>
import functools

import jax
import jax.numpy as jnp
from jax.experimental import pallas as pl
from jax.experimental.pallas import tpu as pltpu


# ---------------------------------------------------------------------------
# Kernel: one (batch, C2-tile, H-row-tile) grid step
# ---------------------------------------------------------------------------
def _repvgg_kernel(x_ref, w_ref, b_ref, o_ref, *, TH, W, C1p, big_k):
    """
    x_ref : (1, H+2, W+2, C1p) bf16   zero-padded image, resident per batch
    w_ref : (9*C1p, TC2) bf16         (big_k)   folded 3x3 weight, rows (kh, kw, ci)
            (9, C1p, TC2) bf16        (!big_k)  folded 3x3 weight per tap (kh*3+kw)
    b_ref : (1, TC2) f32              folded bias (both branches)
    o_ref : (1, TH, W, TC2)           output tile
    """
    h = pl.program_id(2)
    row0 = pl.multiple_of(h * TH, TH)
    win = x_ref[0, pl.ds(row0, TH + 2), :, :]              # (TH+2, W+2, C1p)

    if big_k:
        # Lane-aligned (C1p % 128 == 0): gather the 9 taps once (plain vreg
        # copies), single big-K MXU matmul.
        taps = [win[kh:kh + TH, kw:kw + W, :] for kh in range(3) for kw in range(3)]
        col = jnp.concatenate(taps, axis=-1).reshape(TH * W, 9 * C1p)
        acc = jnp.dot(col, w_ref[...], preferred_element_type=jnp.float32)
    else:
        # Lane-misaligned C1p: 9 accumulating matmuls with K = C1p directly on
        # the window slices (no cross-lane concat, no zero-padded K).
        acc = None
        for kh in range(3):
            for kw in range(3):
                tap = win[kh:kh + TH, kw:kw + W, :].reshape(TH * W, C1p)
                part = jnp.dot(tap, w_ref[kh * 3 + kw],
                               preferred_element_type=jnp.float32)
                acc = part if acc is None else acc + part

    y = acc + b_ref[...]                                   # fused conv+BN bias (both branches)
    y = y * jax.nn.sigmoid(y)                              # SiLU (EUP slot, ~free)
    # TODO(synk): chunk this f32 epilogue over M if bundle dumps show spills at
    # very large TH*W x TC2 tiles.
    o_ref[...] = y.reshape(1, TH, W, y.shape[-1]).astype(o_ref.dtype)


# ---------------------------------------------------------------------------
# Wrapper
# ---------------------------------------------------------------------------
def _round_up(x, m):
    return (x + m - 1) // m * m


def _vmem_budget_bytes():
    """Generation-aware VMEM budget, leaving headroom for compiler scratch."""
    cap = 64 * 1024 * 1024
    try:
        cap = int(pltpu.get_tpu_info().vmem_capacity_bytes)
    except Exception:  # conservative fallback if the query is unavailable
        pass
    if cap <= 64 * 1024 * 1024:            # v7x-class: 64 MiB per TensorCore
        return max(min(cap - 8 * 1024 * 1024, 56 * 1024 * 1024), 16 * 1024 * 1024)
    return min(int(cap * 0.85), 112 * 1024 * 1024)          # v5e / v6e: 128 MiB


def fold_repvgg_params(raw):
    """RepVGG re-parameterization (same math as get_equivalent_kernel_bias,
    exact for eval-mode BN).  Returns (HWIO 3x3 kernel, bias)."""
    def fuse(w_oihw, bn):
        gamma, beta, mean, var, eps = bn
        s = gamma / jnp.sqrt(var + eps)                      # (C2,)
        return w_oihw * s[:, None, None, None], beta - mean * s

    w3, b3 = fuse(raw["w3_oihw"], raw["bn3"])
    w1, b1 = fuse(raw["w1_oihw"], raw["bn1"])
    w1_3x3 = jnp.pad(w1, ((0, 0), (0, 0), (1, 1), (1, 1)))   # 1x1 -> center tap
    # TODO(synk): when bn=True and c1 == c2, also fold the BN-identity kernel/bias.
    w_eq_oihw = w3 + w1_3x3
    bias = b3 + b1
    return jnp.transpose(w_eq_oihw, (2, 3, 1, 0)), bias      # (3,3,C1,C2), (C2,)


def repvgg_block(x_nchw, w_eq_hwio, bias, out_dtype=jnp.float32):
    """x_nchw: (N, C1, H, W) f32 -> (N, C2, H, W) out_dtype via the fused Pallas kernel."""
    N, C1, H, W = x_nchw.shape
    C2 = w_eq_hwio.shape[-1]

    C1p = _round_up(C1, 8)        # contraction-dim granularity
    C2p = _round_up(C2, 128)      # lane-dense output stores
    Hp, Wp = H + 2, W + 2
    big_k = (C1 % 128 == 0)       # lane-aligned concat only; else 9 K=C1p matmuls

    budget = _vmem_budget_bytes()
    out_isz = jnp.dtype(out_dtype).itemsize

    # Batch-resident padded image: single-buffer when double-buffering would eat
    # a big slice of the budget (v7x 64 MiB case) -- its block index only changes
    # with n, so the second buffer buys almost nothing.
    x_img_bytes = Hp * Wp * C1p * 2
    x_single_buffer = (2 * x_img_bytes > budget // 4)
    x_block_bytes = x_img_bytes * (1 if x_single_buffer else 2)

    def footprint(th, tc2):
        w_b = 2 * 9 * C1p * tc2 * 2                          # weight block (dbl-buf)
        b_b = 2 * tc2 * 4
        o_b = 2 * th * W * tc2 * out_isz                     # output tile (dbl-buf)
        col_b = th * W * (9 * C1p if big_k else C1p) * 2     # tap-gather temporaries
        acc_b = th * W * tc2 * 4                             # f32 accumulator
        return x_block_bytes + w_b + b_b + o_b + col_b + acc_b

    # ---- tile selection: largest TC2 (ideally all of C2p), TH targeting >=512
    #      matmul rows (or the whole image), bounded by the VMEM budget.
    div_h = [d for d in range(H, 0, -1) if H % d == 0]
    tc2_cands = [t for t in range(C2p, 0, -128) if C2p % t == 0]
    MAX_ROWS = 4096
    target_rows = min(512, H * W)

    choice = None
    for tc2 in tc2_cands:
        for th in div_h:
            if th * W > MAX_ROWS or th * W < target_rows:
                continue
            if footprint(th, tc2) <= budget:
                choice = (th, tc2)
                break
        if choice:
            break
    if choice is None:                                       # fallback: anything that fits
        for tc2 in list(reversed(tc2_cands)):
            for th in div_h:
                if th * W <= MAX_ROWS and footprint(th, tc2) <= budget:
                    choice = (th, tc2)
                    break
            if choice:
                break
    if choice is None:
        # TODO(synk): for images too large even for minimal tiles, switch the input
        # to halo row-strip manual DMA (pl.ANY + make_async_copy into VMEM scratch).
        choice = (div_h[-1], 128)
    TH, TC2 = choice
    HT, CT = H // TH, C2p // TC2

    # ---- input: NCHW -> NHWC, zero halo (k=3, p=1), channel pad, bf16 cast.
    # TODO(synk): these are extra HBM passes kept only to honour the PyTorch
    # NCHW/f32 contract; a real pipeline should feed NHWC (ideally bf16) and let
    # the kernel own the zero halo.
    x_nhwc = jnp.transpose(x_nchw, (0, 2, 3, 1))
    xpad = jnp.pad(x_nhwc, ((0, 0), (1, 1), (1, 1), (0, C1p - C1))).astype(jnp.bfloat16)

    # ---- weight / bias: folded equivalent 3x3 kernel, channel-padded, bf16.
    w = jnp.pad(w_eq_hwio, ((0, 0), (0, 0), (0, C1p - C1), (0, C2p - C2)))
    if big_k:
        w_arr = w.reshape(9 * C1p, C2p).astype(jnp.bfloat16)    # rows ordered (kh, kw, ci)
        w_spec = pl.BlockSpec((9 * C1p, TC2), lambda n, c, h: (0, c))
    else:
        w_arr = w.reshape(9, C1p, C2p).astype(jnp.bfloat16)     # per-tap (kh*3 + kw)
        w_spec = pl.BlockSpec((9, C1p, TC2), lambda n, c, h: (0, 0, c))
    b_pad = jnp.pad(bias, (0, C2p - C2)).astype(jnp.float32).reshape(1, C2p)

    x_spec_kwargs = {}
    if x_single_buffer:
        x_spec_kwargs["pipeline_mode"] = pl.Buffered(1)
    x_spec = pl.BlockSpec((1, Hp, Wp, C1p), lambda n, c, h: (n, 0, 0, 0),
                          **x_spec_kwargs)

    vmem_limit = int(min(budget, max(int(1.5 * footprint(TH, TC2)), 16 * 1024 * 1024)))

    kernel = functools.partial(_repvgg_kernel, TH=TH, W=W, C1p=C1p, big_k=big_k)

    out = pl.pallas_call(
        kernel,
        out_shape=jax.ShapeDtypeStruct((N, H, W, C2p), out_dtype),
        grid=(N, CT, HT),
        in_specs=[x_spec, w_spec,
                  pl.BlockSpec((1, TC2), lambda n, c, h: (0, c))],
        out_specs=pl.BlockSpec((1, TH, W, TC2), lambda n, c, h: (n, h, 0, c)),
        compiler_params=pltpu.CompilerParams(
            dimension_semantics=("parallel", "parallel", "parallel"),
            vmem_limit_bytes=vmem_limit,
        ),
    )(xpad, w_arr, b_pad)

    # TODO(synk): if CT > 1 ever remains, reorder the grid to (N, HT, CT) with the
    # c axis "arbitrary" and cache the tap gather in a VMEM scratch.
    # TODO(synk): emit bf16 and keep NHWC downstream to halve writeback and delete
    # this slice + transpose pass.
    return jnp.transpose(out[..., :C2], (0, 3, 1, 2))


# ---------------------------------------------------------------------------
# Synthetic parameters + pure-JAX reference of the *unfused* forward()
# ---------------------------------------------------------------------------
def init_raw_params(key, c1, c2, eps=1e-5):
    ks = jax.random.split(key, 4)
    w3 = 0.1 * jax.random.normal(ks[0], (c2, c1, 3, 3), jnp.float32)    # OIHW
    w1 = 0.1 * jax.random.normal(ks[1], (c2, c1, 1, 1), jnp.float32)    # OIHW

    def bn(k):
        kg, kb, km, kv = jax.random.split(k, 4)
        gamma = jax.random.uniform(kg, (c2,), jnp.float32, 0.5, 1.5)
        beta = 0.1 * jax.random.normal(kb, (c2,), jnp.float32)
        mean = 0.1 * jax.random.normal(km, (c2,), jnp.float32)
        var = jax.random.uniform(kv, (c2,), jnp.float32, 0.5, 1.5)
        return (gamma, beta, mean, var, eps)

    return {"w3_oihw": w3, "w1_oihw": w1, "bn3": bn(ks[2]), "bn1": bn(ks[3])}


def _reference(x_nchw, raw):
    """Matches RepVggBlock.forward: SiLU(BN(conv3x3(x)) + BN(conv1x1(x)))."""
    def branch(w_oihw, bn, pad):
        w_hwio = jnp.transpose(w_oihw, (2, 3, 1, 0))
        dn = jax.lax.conv_dimension_numbers(x_nchw.shape, w_hwio.shape,
                                            ("NCHW", "HWIO", "NCHW"))
        y = jax.lax.conv_general_dilated(x_nchw, w_hwio, (1, 1),
                                         ((pad, pad), (pad, pad)),
                                         dimension_numbers=dn)
        gamma, beta, mean, var, eps = bn
        s = gamma / jnp.sqrt(var + eps)
        return (y - mean.reshape(1, -1, 1, 1)) * s.reshape(1, -1, 1, 1) + beta.reshape(1, -1, 1, 1)

    y = branch(raw["w3_oihw"], raw["bn3"], 1) + branch(raw["w1_oihw"], raw["bn1"], 0)
    return y * jax.nn.sigmoid(y)


if __name__ == "__main__":
    key = jax.random.PRNGKey(0)
    k_x, k_p = jax.random.split(key)

    N, C1, C2, H, W = 2, 4, 8, 16, 16
    x = jax.random.normal(k_x, (N, C1, H, W), jnp.float32)          # PyTorch NCHW input
    raw = init_raw_params(k_p, C1, C2)

    w_eq, bias = fold_repvgg_params(raw)                            # RepVGG re-param (wrapper)
    out = jax.block_until_ready(repvgg_block(x, w_eq, bias))

    ref = _reference(x, raw)
    assert out.shape == (N, C2, H, W)
    max_err = float(jnp.max(jnp.abs(out - ref)))
    assert jnp.allclose(out, ref, rtol=3e-2, atol=3e-2), f"mismatch vs reference, max|err|={max_err}"

    print("KERNEL_OK")
</pallas_src>

<mosaic_0001>
module attributes {stable_mosaic.version = 11 : i64} {
  func.func @_repvgg_kernel(%arg0: i32, %arg1: i32, %arg2: i32, %arg3: memref<1x18x18x8xbf16, #tpu.memory_space<vmem>>, %arg4: memref<9x8x128xbf16, #tpu.memory_space<vmem>>, %arg5: memref<1x128xf32, #tpu.memory_space<vmem>>, %arg6: memref<1x16x16x128xf32, #tpu.memory_space<vmem>>) attributes {dimension_semantics = [#tpu.dimension_semantics<parallel>, #tpu.dimension_semantics<parallel>, #tpu.dimension_semantics<parallel>], iteration_bounds = array<i64: 2, 1, 1>, scalar_prefetch = 0 : i64, scratch_operands = 0 : i64, tpu.core_type = #tpu.core_type<tc>, window_params = [{transform_indices = @transform_0, window_bounds = array<i64: 1, 18, 18, 8>}, {transform_indices = @transform_1, window_bounds = array<i64: 9, 8, 128>}, {transform_indices = @transform_2, window_bounds = array<i64: 1, 128>}, {transform_indices = @transform_3, window_bounds = array<i64: 1, 16, 16, 128>}]} {
    %c16_i32 = arith.constant 16 : i32
    %0 = arith.muli %arg2, %c16_i32 : i32
    %1 = tpu.assume_multiple %0, 16 : i32
    %c0 = arith.constant 0 : index
    %2 = arith.index_cast %1 : i32 to index
    %c0_0 = arith.constant 0 : index
    %c0_1 = arith.constant 0 : index
    %3 = vector.load %arg3[%c0, %2, %c0_0, %c0_1] : memref<1x18x18x8xbf16, #tpu.memory_space<vmem>>, vector<1x18x18x8xbf16>
    %4 = vector.shape_cast %3 : vector<1x18x18x8xbf16> to vector<18x18x8xbf16>
    %5 = vector.extract_strided_slice %4 {offsets = [0, 0, 0], sizes = [16, 16, 8], strides = [1, 1, 1]} : vector<18x18x8xbf16> to vector<16x16x8xbf16>
    %6 = vector.shape_cast %5 : vector<16x16x8xbf16> to vector<256x8xbf16>
    %c0_2 = arith.constant 0 : index
    %c0_3 = arith.constant 0 : index
    %c0_4 = arith.constant 0 : index
    %7 = vector.load %arg4[%c0_2, %c0_3, %c0_4] : memref<9x8x128xbf16, #tpu.memory_space<vmem>>, vector<1x8x128xbf16>
    %8 = vector.shape_cast %7 : vector<1x8x128xbf16> to vector<8x128xbf16>
    %cst = arith.constant dense<0.000000e+00> : vector<256x128xf32>
    %9 = tpu.matmul %6, %8, %cst {dimension_numbers = #tpu.dot_dimension_numbers<[1], [0], [0], [1], [0, 0, 1, 1], [], []>} : vector<256x8xbf16>, vector<8x128xbf16>, vector<256x128xf32> -> vector<256x128xf32>
    %10 = vector.extract_strided_slice %4 {offsets = [0, 1, 0], sizes = [16, 16, 8], strides = [1, 1, 1]} : vector<18x18x8xbf16> to vector<16x16x8xbf16>
    %11 = vector.shape_cast %10 : vector<16x16x8xbf16> to vector<256x8xbf16>
    %c1 = arith.constant 1 : index
    %c0_5 = arith.constant 0 : index
    %c0_6 = arith.constant 0 : index
    %12 = vector.load %arg4[%c1, %c0_5, %c0_6] : memref<9x8x128xbf16, #tpu.memory_space<vmem>>, vector<1x8x128xbf16>
    %13 = vector.shape_cast %12 : vector<1x8x128xbf16> to vector<8x128xbf16>
    %cst_7 = arith.constant dense<0.000000e+00> : vector<256x128xf32>
    %14 = tpu.matmul %11, %13, %cst_7 {dimension_numbers = #tpu.dot_dimension_numbers<[1], [0], [0], [1], [0, 0, 1, 1], [], []>} : vector<256x8xbf16>, vector<8x128xbf16>, vector<256x128xf32> -> vector<256x128xf32>
    %15 = arith.addf %9, %14 : vector<256x128xf32>
    %16 = vector.extract_strided_slice %4 {offsets = [0, 2, 0], sizes = [16, 16, 8], strides = [1, 1, 1]} : vector<18x18x8xbf16> to vector<16x16x8xbf16>
    %17 = vector.shape_cast %16 : vector<16x16x8xbf16> to vector<256x8xbf16>
    %c2 = arith.constant 2 : index
    %c0_8 = arith.constant 0 : index
    %c0_9 = arith.constant 0 : index
    %18 = vector.load %arg4[%c2, %c0_8, %c0_9] : memref<9x8x128xbf16, #tpu.memory_space<vmem>>, vector<1x8x128xbf16>
    %19 = vector.shape_cast %18 : vector<1x8x128xbf16> to vector<8x128xbf16>
    %cst_10 = arith.constant dense<0.000000e+00> : vector<256x128xf32>
    %20 = tpu.matmul %17, %19, %cst_10 {dimension_numbers = #tpu.dot_dimension_numbers<[1], [0], [0], [1], [0, 0, 1, 1], [], []>} : vector<256x8xbf16>, vector<8x128xbf16>, vector<256x128xf32> -> vector<256x128xf32>
    %21 = arith.addf %15, %20 : vector<256x128xf32>
    %22 = vector.extract_strided_slice %4 {offsets = [1, 0, 0], sizes = [16, 16, 8], strides = [1, 1, 1]} : vector<18x18x8xbf16> to vector<16x16x8xbf16>
    %23 = vector.shape_cast %22 : vector<16x16x8xbf16> to vector<256x8xbf16>
    %c3 = arith.constant 3 : index
    %c0_11 = arith.constant 0 : index
    %c0_12 = arith.constant 0 : index
    %24 = vector.load %arg4[%c3, %c0_11, %c0_12] : memref<9x8x128xbf16, #tpu.memory_space<vmem>>, vector<1x8x128xbf16>
    %25 = vector.shape_cast %24 : vector<1x8x128xbf16> to vector<8x128xbf16>
    %cst_13 = arith.constant dense<0.000000e+00> : vector<256x128xf32>
    %26 = tpu.matmul %23, %25, %cst_13 {dimension_numbers = #tpu.dot_dimension_numbers<[1], [0], [0], [1], [0, 0, 1, 1], [], []>} : vector<256x8xbf16>, vector<8x128xbf16>, vector<256x128xf32> -> vector<256x128xf32>
    %27 = arith.addf %21, %26 : vector<256x128xf32>
    %28 = vector.extract_strided_slice %4 {offsets = [1, 1, 0], sizes = [16, 16, 8], strides = [1, 1, 1]} : vector<18x18x8xbf16> to vector<16x16x8xbf16>
    %29 = vector.shape_cast %28 : vector<16x16x8xbf16> to vector<256x8xbf16>
    %c4 = arith.constant 4 : index
    %c0_14 = arith.constant 0 : index
    %c0_15 = arith.constant 0 : index
    %30 = vector.load %arg4[%c4, %c0_14, %c0_15] : memref<9x8x128xbf16, #tpu.memory_space<vmem>>, vector<1x8x128xbf16>
    %31 = vector.shape_cast %30 : vector<1x8x128xbf16> to vector<8x128xbf16>
    %cst_16 = arith.constant dense<0.000000e+00> : vector<256x128xf32>
    %32 = tpu.matmul %29, %31, %cst_16 {dimension_numbers = #tpu.dot_dimension_numbers<[1], [0], [0], [1], [0, 0, 1, 1], [], []>} : vector<256x8xbf16>, vector<8x128xbf16>, vector<256x128xf32> -> vector<256x128xf32>
    %33 = arith.addf %27, %32 : vector<256x128xf32>
    %34 = vector.extract_strided_slice %4 {offsets = [1, 2, 0], sizes = [16, 16, 8], strides = [1, 1, 1]} : vector<18x18x8xbf16> to vector<16x16x8xbf16>
    %35 = vector.shape_cast %34 : vector<16x16x8xbf16> to vector<256x8xbf16>
    %c5 = arith.constant 5 : index
    %c0_17 = arith.constant 0 : index
    %c0_18 = arith.constant 0 : index
    %36 = vector.load %arg4[%c5, %c0_17, %c0_18] : memref<9x8x128xbf16, #tpu.memory_space<vmem>>, vector<1x8x128xbf16>
    %37 = vector.shape_cast %36 : vector<1x8x128xbf16> to vector<8x128xbf16>
    %cst_19 = arith.constant dense<0.000000e+00> : vector<256x128xf32>
    %38 = tpu.matmul %35, %37, %cst_19 {dimension_numbers = #tpu.dot_dimension_numbers<[1], [0], [0], [1], [0, 0, 1, 1], [], []>} : vector<256x8xbf16>, vector<8x128xbf16>, vector<256x128xf32> -> vector<256x128xf32>
    %39 = arith.addf %33, %38 : vector<256x128xf32>
    %40 = vector.extract_strided_slice %4 {offsets = [2, 0, 0], sizes = [16, 16, 8], strides = [1, 1, 1]} : vector<18x18x8xbf16> to vector<16x16x8xbf16>
    %41 = vector.shape_cast %40 : vector<16x16x8xbf16> to vector<256x8xbf16>
    %c6 = arith.constant 6 : index
    %c0_20 = arith.constant 0 : index
    %c0_21 = arith.constant 0 : index
    %42 = vector.load %arg4[%c6, %c0_20, %c0_21] : memref<9x8x128xbf16, #tpu.memory_space<vmem>>, vector<1x8x128xbf16>
    %43 = vector.shape_cast %42 : vector<1x8x128xbf16> to vector<8x128xbf16>
    %cst_22 = arith.constant dense<0.000000e+00> : vector<256x128xf32>
    %44 = tpu.matmul %41, %43, %cst_22 {dimension_numbers = #tpu.dot_dimension_numbers<[1], [0], [0], [1], [0, 0, 1, 1], [], []>} : vector<256x8xbf16>, vector<8x128xbf16>, vector<256x128xf32> -> vector<256x128xf32>
    %45 = arith.addf %39, %44 : vector<256x128xf32>
    %46 = vector.extract_strided_slice %4 {offsets = [2, 1, 0], sizes = [16, 16, 8], strides = [1, 1, 1]} : vector<18x18x8xbf16> to vector<16x16x8xbf16>
    %47 = vector.shape_cast %46 : vector<16x16x8xbf16> to vector<256x8xbf16>
    %c7 = arith.constant 7 : index
    %c0_23 = arith.constant 0 : index
    %c0_24 = arith.constant 0 : index
    %48 = vector.load %arg4[%c7, %c0_23, %c0_24] : memref<9x8x128xbf16, #tpu.memory_space<vmem>>, vector<1x8x128xbf16>
    %49 = vector.shape_cast %48 : vector<1x8x128xbf16> to vector<8x128xbf16>
    %cst_25 = arith.constant dense<0.000000e+00> : vector<256x128xf32>
    %50 = tpu.matmul %47, %49, %cst_25 {dimension_numbers = #tpu.dot_dimension_numbers<[1], [0], [0], [1], [0, 0, 1, 1], [], []>} : vector<256x8xbf16>, vector<8x128xbf16>, vector<256x128xf32> -> vector<256x128xf32>
    %51 = arith.addf %45, %50 : vector<256x128xf32>
    %52 = vector.extract_strided_slice %4 {offsets = [2, 2, 0], sizes = [16, 16, 8], strides = [1, 1, 1]} : vector<18x18x8xbf16> to vector<16x16x8xbf16>
    %53 = vector.shape_cast %52 : vector<16x16x8xbf16> to vector<256x8xbf16>
    %c8 = arith.constant 8 : index
    %c0_26 = arith.constant 0 : index
    %c0_27 = arith.constant 0 : index
    %54 = vector.load %arg4[%c8, %c0_26, %c0_27] : memref<9x8x128xbf16, #tpu.memory_space<vmem>>, vector<1x8x128xbf16>
    %55 = vector.shape_cast %54 : vector<1x8x128xbf16> to vector<8x128xbf16>
    %cst_28 = arith.constant dense<0.000000e+00> : vector<256x128xf32>
    %56 = tpu.matmul %53, %55, %cst_28 {dimension_numbers = #tpu.dot_dimension_numbers<[1], [0], [0], [1], [0, 0, 1, 1], [], []>} : vector<256x8xbf16>, vector<8x128xbf16>, vector<256x128xf32> -> vector<256x128xf32>
    %57 = arith.addf %51, %56 : vector<256x128xf32>
    %c0_29 = arith.constant 0 : index
    %c0_30 = arith.constant 0 : index
    %58 = vector.load %arg5[%c0_29, %c0_30] : memref<1x128xf32, #tpu.memory_space<vmem>>, vector<1x128xf32>
    %59 = vector.broadcast %58 : vector<1x128xf32> to vector<256x128xf32>
    %60 = arith.addf %57, %59 : vector<256x128xf32>
    %61 = arith.negf %60 : vector<256x128xf32>
    %62 = math.exp %61 : vector<256x128xf32>
    %cst_31 = arith.constant 1.000000e+00 : f32
    %63 = vector.broadcast %cst_31 : f32 to vector<256x128xf32>
    %64 = arith.addf %63, %62 : vector<256x128xf32>
    %65 = arith.divf %63, %64 : vector<256x128xf32>
    %66 = arith.mulf %60, %65 : vector<256x128xf32>
    %67 = vector.shape_cast %66 : vector<256x128xf32> to vector<1x16x16x128xf32>
    %c0_32 = arith.constant 0 : index
    %c0_33 = arith.constant 0 : index
    %c0_34 = arith.constant 0 : index
    %c0_35 = arith.constant 0 : index
    %68 = vector.load %arg6[%c0_32, %c0_33, %c0_34, %c0_35] : memref<1x16x16x128xf32, #tpu.memory_space<vmem>>, vector<1x16x16x128xf32>
    tpu.vector_store %arg6[%c0_32, %c0_33, %c0_34, %c0_35], %67 {strides = array<i32>} : memref<1x16x16x128xf32, #tpu.memory_space<vmem>>, vector<1x16x16x128xf32>,
    return
  }
  func.func @transform_0(%arg0: i32, %arg1: i32, %arg2: i32) -> (i32, i32, i32, i32) {
    %c0_i32 = arith.constant 0 : i32
    %c0_i32_0 = arith.constant 0 : i32
    %c0_i32_1 = arith.constant 0 : i32
    %c0_i32_2 = arith.constant 0 : i32
    return %arg0, %c0_i32, %c0_i32_0, %c0_i32_1 : i32, i32, i32, i32
  }
  func.func @transform_1(%arg0: i32, %arg1: i32, %arg2: i32) -> (i32, i32, i32) {
    %c0_i32 = arith.constant 0 : i32
    %c0_i32_0 = arith.constant 0 : i32
    %c0_i32_1 = arith.constant 0 : i32
    return %c0_i32, %c0_i32_0, %arg1 : i32, i32, i32
  }
  func.func @transform_2(%arg0: i32, %arg1: i32, %arg2: i32) -> (i32, i32) {
    %c0_i32 = arith.constant 0 : i32
    %c0_i32_0 = arith.constant 0 : i32
    return %c0_i32, %arg1 : i32, i32
  }
  func.func @transform_3(%arg0: i32, %arg1: i32, %arg2: i32) -> (i32, i32, i32, i32) {
    %c0_i32 = arith.constant 0 : i32
    %c0_i32_0 = arith.constant 0 : i32
    return %arg0, %arg2, %c0_i32, %arg1 : i32, i32, i32, i32
  }
}

</mosaic_0001>

<llo_original>
// kernel: tpu_custom_call.1
$region0: #{tpu_custom_call.1}
  #allocation0 [shape = 'u32[]', space=smem, size = 0x4, offset = 0x4, fixed_abs, tag = 'smem constant byte address 0x4 - core index']
  #allocation1 [shape = 'u32[144,128]{1,0:T(1,128)}', space=vmem, size = 0x12000, scoped, tag = 'internal scratch']
  %s0 = inlined_call_operand.vmem [shape: bf16[2,18,18,8], index: 0, kind: input, shape index: {}]
  %s1 = inlined_call_operand.vmem [shape: bf16[9,8,128], index: 1, kind: input, shape index: {}]
  %s2 = inlined_call_operand.vmem [shape: f32[1,128], index: 2, kind: input, shape index: {}]
  %s3 = inlined_call_operand.hbm [shape: f32[2,16,16,128], index: 3, kind: output, shape index: {}]
  %s4 = sld [smem:[#allocation0]]
  $region45: #{tpu_custom_call.1} parent=0
    _
  %s6 = ssub.s32 1, %s4
  %s7 = scalar_select 0, %s6, %s4
  $region1: #{tpu_custom_call.1} parent=0
    #allocation2 [shape = 'u8[262144]{0}', space=vmem, size = 0x40000, scoped, tag = 'output window, operand 0']
    #allocation3 [shape = 's32[2]{0}', space=sflag, size = 0x8, scoped, tag = 'scoped memory for tpu_custom_call.1']
    %8 = vsyncpa [#allocation3], 0
    %s9 = scalar_lea.sflag [#allocation3], 1
    %10 = vsyncpa %s9, 0
    loop: start=0, step=1, limit=4
    $region2: #{tpu_custom_call.1} parent=1 // loop_pre_header
      _
    $region3: #{tpu_custom_call.1} parent=1 // loop_header
      %s12 = sphi 0, %s16
      %p13 = scmp.ge.s32.totalorder %s12, 4
      %s19 = sphi 0, %s38
      %s20 = sphi 0, %s34
      %s21 = sphi 0, %s30
      %s22 = sphi 0, %s19
      %s23 = sphi 0, %s20
      %s24 = sphi 0, %s21
      %s25 = sphi 0, %s22
      %s26 = sphi 0, %s23
      %s27 = sphi 0, %s24
      %s41 = sphi 0, %s43
      %s44 = sphi 0, %s41
      %s45 = sphi 0, %s44
      %s61 = sphi 0, %s45
      %s67 = sphi 0, %s69
      %s70 = sphi 0, %s67
      %s71 = sphi 0, %s70
      %s87 = sphi 0, %s71
      %s93 = sphi 0, %s95
      %s96 = sphi 0, %s93
      %s97 = sphi 0, %s96
      %s113 = sphi 0, %s97
      %s123 = sphi 0, %s125
      %s126 = sphi 0, %s123
      %s127 = sphi 0, %s126
      %s143 = sphi 0, %s127
    $region4: #{tpu_custom_call.1} parent=1 // loop_header_branch
      %15 = sbr.rel (%p13) target = $region8
    $region5: #{tpu_custom_call.1} parent=1 // loop_body
      %s17 = ssub.s32 %s12, 1
      %s18 = ssub.s32 %s12, 2
      %s28 = sadd.s32 1, %s21
      %p29 = scmp.ge.s32.totalorder %s28, 1
      %s30 = scalar_select %p29, 0, %s28
      %s31 = sadd.s32 1, %s20
      %s32 = scalar_select %p29, %s31, %s20
      %p33 = scmp.ge.s32.totalorder %s32, 1
      %s34 = scalar_select %p33, 0, %s32
      %s35 = sadd.s32 1, %s19
      %s36 = scalar_select %p33, %s35, %s19
      %p37 = scmp.ge.s32.totalorder %s36, 2
      %s38 = scalar_select %p37, 0, %s36
      %s39 = ssub.s32 %s19, %s38
      %p40 = scmp.eq.s32.totalorder %s39, 0
      %s42 = sadd.s32 %s41, 1
      %s43 = scalar_select %p40, %s41, %s42
      %p46 = pneg %p40
      %p47 = scmp.eq.s32.totalorder %s12, 1
      %p48 = por %p46, %p47
      %p49 = scmp.ne.s32.totalorder %s41, %s44
      %p50 = scmp.eq.s32.totalorder %s12, 0
      %p51 = por %p49, %p50
      %p52 = scmp.ne.s32.totalorder %s41, %s44
      %p53 = scmp.eq.s32.totalorder %s17, 1
      %p54 = por %p52, %p53
      %p55 = scmp.ne.s32.totalorder %s44, %s45
      %p56 = scmp.eq.s32.totalorder %s17, 0
      %p57 = por %p55, %p56
      %p58 = scmp.ne.s32.totalorder %s44, %s45
      %p59 = scmp.eq.s32.totalorder %s18, 1
      %p60 = por %p58, %p59
      %p62 = scmp.ne.s32.totalorder %s45, %s61
      %p63 = scmp.eq.s32.totalorder %s18, 0
      %p64 = por %p62, %p63
      %s65 = ssub.s32 %s20, %s34
      %p66 = scmp.eq.s32.totalorder %s65, 0
      %s68 = sadd.s32 %s67, 1
      %s69 = scalar_select %p66, %s67, %s68
      %p72 = pneg %p66
      %p73 = scmp.eq.s32.totalorder %s12, 1
      %p74 = por %p72, %p73
      %p75 = scmp.ne.s32.totalorder %s67, %s70
      %p76 = scmp.eq.s32.totalorder %s12, 0
      %p77 = por %p75, %p76
      %p78 = scmp.ne.s32.totalorder %s67, %s70
      %p79 = scmp.eq.s32.totalorder %s17, 1
      %p80 = por %p78, %p79
      %p81 = scmp.ne.s32.totalorder %s70, %s71
      %p82 = scmp.eq.s32.totalorder %s17, 0
      %p83 = por %p81, %p82
      %p84 = scmp.ne.s32.totalorder %s70, %s71
      %p85 = scmp.eq.s32.totalorder %s18, 1
      %p86 = por %p84, %p85
      %p88 = scmp.ne.s32.totalorder %s71, %s87
      %p89 = scmp.eq.s32.totalorder %s18, 0
      %p90 = por %p88, %p89
      %s91 = ssub.s32 %s20, %s34
      %p92 = scmp.eq.s32.totalorder %s91, 0
      %s94 = sadd.s32 %s93, 1
      %s95 = scalar_select %p92, %s93, %s94
      %p98 = pneg %p92
      %p99 = scmp.eq.s32.totalorder %s12, 1
      %p100 = por %p98, %p99
      %p101 = scmp.ne.s32.totalorder %s93, %s96
      %p102 = scmp.eq.s32.totalorder %s12, 0
      %p103 = por %p101, %p102
      %p104 = scmp.ne.s32.totalorder %s93, %s96
      %p105 = scmp.eq.s32.totalorder %s17, 1
      %p106 = por %p104, %p105
      %p107 = scmp.ne.s32.totalorder %s96, %s97
      %p108 = scmp.eq.s32.totalorder %s17, 0
      %p109 = por %p107, %p108
      %p110 = scmp.ne.s32.totalorder %s96, %s97
      %p111 = scmp.eq.s32.totalorder %s18, 1
      %p112 = por %p110, %p111
      %p114 = scmp.ne.s32.totalorder %s97, %s113
      %p115 = scmp.eq.s32.totalorder %s18, 0
      %p116 = por %p114, %p115
      %s117 = ssub.s32 %s19, %s38
      %s118 = ssub.s32 %s21, %s30
      %s119 = sor.u32 %s117, %s118
      %s120 = ssub.s32 %s20, %s34
      %s121 = sor.u32 %s119, %s120
      %p122 = scmp.eq.s32.totalorder %s121, 0
      %s124 = sadd.s32 %s123, 1
      %s125 = scalar_select %p122, %s123, %s124
      %p128 = pneg %p122
      %p129 = scmp.eq.s32.totalorder %s12, 1
      %p130 = por %p128, %p129
      %p131 = scmp.ne.s32.totalorder %s123, %s126
      %p132 = scmp.eq.s32.totalorder %s12, 0
      %p133 = por %p131, %p132
      %p134 = scmp.ne.s32.totalorder %s123, %s126
      %p135 = scmp.eq.s32.totalorder %s17, 1
      %p136 = por %p134, %p135
      %p137 = scmp.ne.s32.totalorder %s126, %s127
      %p138 = scmp.eq.s32.totalorder %s17, 0
      %p139 = por %p137, %p138
      %p140 = scmp.ne.s32.totalorder %s126, %s127
      %p141 = scmp.eq.s32.totalorder %s18, 1
      %p142 = por %p140, %p141
      %p144 = scmp.ne.s32.totalorder %s127, %s143
      %p145 = scmp.eq.s32.totalorder %s18, 0
      %p146 = por %p144, %p145
      %p147 = scmp.le.s32.totalorder 1, %s12
      %p148 = scmp.lt.s32.totalorder %s12, 3
      %p149 = pnand %p147, %p148
      %p150 = pneg %p149
      // Predicated region
      $region9: #{tpu_custom_call.1} parent=5 // pred_check
        _
      $region10: #{tpu_custom_call.1} parent=5 // pred_check_branch
        %152 = sbr.rel (%p149) target = $region12
      $region11: #{tpu_custom_call.1} parent=5 // pred_region
        %s153 = ssub.s32 %s12, 1
        // Predicated region
        $region13: #{tpu_custom_call.1} parent=11 // pred_check
          %p154 = pneg %p83
        $region14: #{tpu_custom_call.1} parent=11 // pred_check_branch
          %156 = sbr.rel (%p154) target = $region16
        $region15: #{tpu_custom_call.1} parent=11 // pred_region
          %p157 = scmp.lt.s32.totalorder %s23, 0
          %s158 = scalar_select %p157, %s23, 0
          %s159 = smul.addr %s158, 4
          %s160 = scalar_lea.vmem %s1, %s159
        $region16: #{tpu_custom_call.1} parent=11 // pred_fallthru
          _
        // Predicated region
        $region17: #{tpu_custom_call.1} parent=11 // pred_check
          %p161 = pneg %p109
        $region18: #{tpu_custom_call.1} parent=11 // pred_check_branch
          %163 = sbr.rel (%p161) target = $region20
        $region19: #{tpu_custom_call.1} parent=11 // pred_region
          %p164 = scmp.lt.s32.totalorder %s23, 0
          %s165 = scalar_select %p164, %s23, 0
          %s166 = scalar_lea.vmem %s2, %s165
        $region20: #{tpu_custom_call.1} parent=11 // pred_fallthru
          _
      $region12: #{tpu_custom_call.1} parent=5 // pred_fallthru
        _
      %p167 = scmp.lt.s32.totalorder %s12, 2
      // Predicated region
      $region21: #{tpu_custom_call.1} parent=5 // pred_check
        %p168 = pneg %p167
      $region22: #{tpu_custom_call.1} parent=5 // pred_check_branch
        %170 = sbr.rel (%p168) target = $region24
      $region23: #{tpu_custom_call.1} parent=5 // pred_region
        // Predicated region
        $region25: #{tpu_custom_call.1} parent=23 // pred_check
          %p171 = pneg %p51
        $region26: #{tpu_custom_call.1} parent=23 // pred_check_branch
          %173 = sbr.rel (%p171) target = $region28
        $region27: #{tpu_custom_call.1} parent=23 // pred_region
          %p174 = scmp.lt.s32.totalorder %s19, 1
          %s175 = scalar_select %p174, %s19, 1
          %s176 = smul.addr %s175, 54
          %s177 = smul.addr %s176, 4
          %s178 = scalar_lea.vmem %s0, %s177
        $region28: #{tpu_custom_call.1} parent=23 // pred_fallthru
          _
      $region24: #{tpu_custom_call.1} parent=5 // pred_fallthru
        _
      %p179 = scmp.le.s32.totalorder 1, %s12
      %p180 = scmp.lt.s32.totalorder %s12, 3
      %p181 = pnand %p179, %p180
      %p182 = pneg %p181
      // Predicated region
      $region29: #{tpu_custom_call.1} parent=5 // pred_check
        _
      $region30: #{tpu_custom_call.1} parent=5 // pred_check_branch
        %184 = sbr.rel (%p181) target = $region32
      $region31: #{tpu_custom_call.1} parent=5 // pred_region
        %s185 = ssub.s32 %s12, 1
        %p186 = scmp.lt.s32.totalorder %s22, 1
        %s187 = scalar_select %p186, %s22, 1
        %s188 = smul.addr %s187, 54
        %s189 = smul.addr %s188, 4
        %s190 = scalar_lea.vmem %s0, %s189
        %p191 = pneg %p57
        %p192 = pneg %p54
        %p193 = scmp.lt.s32.totalorder %s23, 0
        %s194 = scalar_select %p193, %s23, 0
        %s195 = smul.addr %s194, 4
        %s196 = scalar_lea.vmem %s1, %s195
        %p197 = pneg %p83
        %p198 = pneg %p80
        %p199 = scmp.lt.s32.totalorder %s23, 0
        %s200 = scalar_select %p199, %s23, 0
        %s201 = scalar_lea.vmem %s2, %s200
        %p202 = pneg %p109
        %p203 = pneg %p106
        %p204 = pneg %p139
        %p205 = pneg %p136
        %s206 = sand.u32 %s126, 1
        %s207 = scalar_lea.sflag [#allocation3], %s206
        %s208 = sand.u32 %s126, 1
        %s209 = smul.addr %s208, 256
        %s210 = scalar_lea.vmem [#allocation2], %s209
        %p211 = scmp.lt.s32.totalorder %s22, 1
        %s212 = scalar_select %p211, %s22, 1
        %s213 = smul.addr %s212, 54
        %s214 = smul.addr %s213, 4
        %s215 = scalar_lea.vmem %s0, %s214
        %p216 = scmp.lt.s32.totalorder %s23, 0
        %s217 = scalar_select %p216, %s23, 0
        %s218 = smul.addr %s217, 4
        %s219 = scalar_lea.vmem %s1, %s218
        %p220 = scmp.lt.s32.totalorder %s23, 0
        %s221 = scalar_select %p220, %s23, 0
        %s222 = scalar_lea.vmem %s2, %s221
        %s223 = smul.u32 16, %s24
        %s225 = smul.u32 %s24, 16
        %s226 = smul.u32 %s225, 3
        %s227 = smul.addr %s226, 4
        %s228 = scalar_lea.vmem %s215, %s227
        %v229 = vld [vmem:[%s228] sm:$0xf]
        %v230 = vld [vmem:[%s228 + $0x4] sm:$0xf]
        %v231 = vld [vmem:[%s228 + $0x8] sm:$0x1]
        %v232 = vld [vmem:[%s228 + $0xc] sm:$0xf]
        %v233 = vld [vmem:[%s228 + $0x10] sm:$0xf]
        %v234 = vld [vmem:[%s228 + $0x14] sm:$0x1]
        %v235 = vld [vmem:[%s228 + $0x18] sm:$0xf]
        %v236 = vld [vmem:[%s228 + $0x1c] sm:$0xf]
        %v237 = vld [vmem:[%s228 + $0x20] sm:$0x1]
        %v238 = vld [vmem:[%s228 + $0x24] sm:$0xf]
        %v239 = vld [vmem:[%s228 + $0x28] sm:$0xf]
        %v240 = vld [vmem:[%s228 + $0x2c] sm:$0x1]
        %v241 = vld [vmem:[%s228 + $0x30] sm:$0xf]
        %v242 = vld [vmem:[%s228 + $0x34] sm:$0xf]
        %v243 = vld [vmem:[%s228 + $0x38] sm:$0x1]
        %v244 = vld [vmem:[%s228 + $0x3c] sm:$0xf]
        %v245 = vld [vmem:[%s228 + $0x40] sm:$0xf]
        %v246 = vld [vmem:[%s228 + $0x44] sm:$0x1]
        %v247 = vld [vmem:[%s228 + $0x48] sm:$0xf]
        %v248 = vld [vmem:[%s228 + $0x4c] sm:$0xf]
        %v249 = vld [vmem:[%s228 + $0x50] sm:$0x1]
        %v250 = vld [vmem:[%s228 + $0x54] sm:$0xf]
        %v251 = vld [vmem:[%s228 + $0x58] sm:$0xf]
        %v252 = vld [vmem:[%s228 + $0x5c] sm:$0x1]
        %v253 = vld [vmem:[%s228 + $0x60] sm:$0xf]
        %v254 = vld [vmem:[%s228 + $0x64] sm:$0xf]
        %v255 = vld [vmem:[%s228 + $0x68] sm:$0x1]
        %v256 = vld [vmem:[%s228 + $0x6c] sm:$0xf]
        %v257 = vld [vmem:[%s228 + $0x70] sm:$0xf]
        %v258 = vld [vmem:[%s228 + $0x74] sm:$0x1]
        %v259 = vld [vmem:[%s228 + $0x78] sm:$0xf]
        %v260 = vld [vmem:[%s228 + $0x7c] sm:$0xf]
        %v261 = vld [vmem:[%s228 + $0x80] sm:$0x1]
        %v262 = vld [vmem:[%s228 + $0x84] sm:$0xf]
        %v263 = vld [vmem:[%s228 + $0x88] sm:$0xf]
        %v264 = vld [vmem:[%s228 + $0x8c] sm:$0x1]
        %v265 = vld [vmem:[%s228 + $0x90] sm:$0xf]
        %v266 = vld [vmem:[%s228 + $0x94] sm:$0xf]
        %v267 = vld [vmem:[%s228 + $0x98] sm:$0x1]
        %v268 = vld [vmem:[%s228 + $0x9c] sm:$0xf]
        %v269 = vld [vmem:[%s228 + $0xa0] sm:$0xf]
        %v270 = vld [vmem:[%s228 + $0xa4] sm:$0x1]
        %v271 = vld [vmem:[%s228 + $0xa8] sm:$0xf]
        %v272 = vld [vmem:[%s228 + $0xac] sm:$0xf]
        %v273 = vld [vmem:[%s228 + $0xb0] sm:$0x1]
        %v274 = vld [vmem:[%s228 + $0xb4] sm:$0xf]
        %v275 = vld [vmem:[%s228 + $0xb8] sm:$0xf]
        %v276 = vld [vmem:[%s228 + $0xbc] sm:$0x1]
        %v277 = vld [vmem:[%s228 + $0xc0] sm:$0xf]
        %v278 = vld [vmem:[%s228 + $0xc4] sm:$0xf]
        %v279 = vld [vmem:[%s228 + $0xc8] sm:$0x1]
        %v280 = vld [vmem:[%s228 + $0xcc] sm:$0xf]
        %v281 = vld [vmem:[%s228 + $0xd0] sm:$0xf]
        %v282 = vld [vmem:[%s228 + $0xd4] sm:$0x1]
        %v283 = vld [vmem:[%s219] sm:$0xf]
        %vm284 = vsmask.f32 3328
        %vm285 = vsmask.f32 7440
        %vm286 = vmor %vm284, %vm285
        %v288 = vshrl.u32 %v229, 16
        %v290 = vrot.slane %v288, 4
        %v291 = vshll.u32 %v229, 16
        %v293 = vrot.slane %v291, 5
        %v294 = vor.u32 %v290, %v293
        %v295 = vrot.slane %v294, 4
        %v297 = vshll.u32 %v230, 16
        %v299 = vrot.slane %v297, 5
        %v300 = vsel %vm286, %v295, %v299
        %v301 = vshrl.u32 %v230, 16
        %v303 = vrot.slane %v301, 4
        %v304 = vor.u32 %v303, %v299
        %v305 = vrot.slane %v304, 4
        %v307 = vshll.u32 %v231, 16
        %v309 = vrot.slane %v307, 5
        %v310 = vsel %vm286, %v305, %v309
        %v312 = vshrl.u32 %v232, 16
        %v314 = vrot.slane %v312, 4
        %v315 = vshll.u32 %v232, 16
        %v317 = vrot.slane %v315, 5
        %v318 = vor.u32 %v314, %v317
        %v319 = vrot.slane %v318, 4
        %v321 = vshll.u32 %v233, 16
        %v323 = vrot.slane %v321, 5
        %v324 = vsel %vm286, %v319, %v323
        %v325 = vshrl.u32 %v233, 16
        %v327 = vrot.slane %v325, 4
        %v328 = vor.u32 %v327, %v323
        %v329 = vrot.slane %v328, 4
        %v331 = vshll.u32 %v234, 16
        %v333 = vrot.slane %v331, 5
        %v334 = vsel %vm286, %v329, %v333
        %v336 = vshrl.u32 %v235, 16
        %v338 = vrot.slane %v336, 4
        %v339 = vshll.u32 %v235, 16
        %v341 = vrot.slane %v339, 5
        %v342 = vor.u32 %v338, %v341
        %v343 = vrot.slane %v342, 4
        %v345 = vshll.u32 %v236, 16
        %v347 = vrot.slane %v345, 5
        %v348 = vsel %vm286, %v343, %v347
        %v349 = vshrl.u32 %v236, 16
        %v351 = vrot.slane %v349, 4
        %v352 = vor.u32 %v351, %v347
        %v353 = vrot.slane %v352, 4
        %v355 = vshll.u32 %v237, 16
        %v357 = vrot.slane %v355, 5
        %v358 = vsel %vm286, %v353, %v357
        %v360 = vshrl.u32 %v238, 16
        %v362 = vrot.slane %v360, 4
        %v363 = vshll.u32 %v238, 16
        %v365 = vrot.slane %v363, 5
        %v366 = vor.u32 %v362, %v365
        %v367 = vrot.slane %v366, 4
        %v369 = vshll.u32 %v239, 16
        %v371 = vrot.slane %v369, 5
        %v372 = vsel %vm286, %v367, %v371
        %v373 = vshrl.u32 %v239, 16
        %v375 = vrot.slane %v373, 4
        %v376 = vor.u32 %v375, %v371
        %v377 = vrot.slane %v376, 4
        %v379 = vshll.u32 %v240, 16
        %v381 = vrot.slane %v379, 5
        %v382 = vsel %vm286, %v377, %v381
        %v384 = vshrl.u32 %v241, 16
        %v386 = vrot.slane %v384, 4
        %v387 = vshll.u32 %v241, 16
        %v389 = vrot.slane %v387, 5
        %v390 = vor.u32 %v386, %v389
        %v391 = vrot.slane %v390, 4
        %v393 = vshll.u32 %v242, 16
        %v395 = vrot.slane %v393, 5
        %v396 = vsel %vm286, %v391, %v395
        %v397 = vshrl.u32 %v242, 16
        %v399 = vrot.slane %v397, 4
        %v400 = vor.u32 %v399, %v395
        %v401 = vrot.slane %v400, 4
        %v403 = vshll.u32 %v243, 16
        %v405 = vrot.slane %v403, 5
        %v406 = vsel %vm286, %v401, %v405
        %v408 = vshrl.u32 %v244, 16
        %v410 = vrot.slane %v408, 4
        %v411 = vshll.u32 %v244, 16
        %v413 = vrot.slane %v411, 5
        %v414 = vor.u32 %v410, %v413
        %v415 = vrot.slane %v414, 4
        %v417 = vshll.u32 %v245, 16
        %v419 = vrot.slane %v417, 5
        %v420 = vsel %vm286, %v415, %v419
        %v421 = vshrl.u32 %v245, 16
        %v423 = vrot.slane %v421, 4
        %v424 = vor.u32 %v423, %v419
        %v425 = vrot.slane %v424, 4
        %v427 = vshll.u32 %v246, 16
        %v429 = vrot.slane %v427, 5
        %v430 = vsel %vm286, %v425, %v429
        %v432 = vshrl.u32 %v247, 16
        %v434 = vrot.slane %v432, 4
        %v435 = vshll.u32 %v247, 16
        %v437 = vrot.slane %v435, 5
        %v438 = vor.u32 %v434, %v437
        %v439 = vrot.slane %v438, 4
        %v441 = vshll.u32 %v248, 16
        %v443 = vrot.slane %v441, 5
        %v444 = vsel %vm286, %v439, %v443
        %v445 = vshrl.u32 %v248, 16
        %v447 = vrot.slane %v445, 4
        %v448 = vor.u32 %v447, %v443
        %v449 = vrot.slane %v448, 4
        %v451 = vshll.u32 %v249, 16
        %v453 = vrot.slane %v451, 5
        %v454 = vsel %vm286, %v449, %v453
        %v456 = vshrl.u32 %v250, 16
        %v458 = vrot.slane %v456, 4
        %v459 = vshll.u32 %v250, 16
        %v461 = vrot.slane %v459, 5
        %v462 = vor.u32 %v458, %v461
        %v463 = vrot.slane %v462, 4
        %v465 = vshll.u32 %v251, 16
        %v467 = vrot.slane %v465, 5
        %v468 = vsel %vm286, %v463, %v467
        %v469 = vshrl.u32 %v251, 16
        %v471 = vrot.slane %v469, 4
        %v472 = vor.u32 %v471, %v467
        %v473 = vrot.slane %v472, 4
        %v475 = vshll.u32 %v252, 16
        %v477 = vrot.slane %v475, 5
        %v478 = vsel %vm286, %v473, %v477
        %v480 = vshrl.u32 %v253, 16
        %v482 = vrot.slane %v480, 4
        %v483 = vshll.u32 %v253, 16
        %v485 = vrot.slane %v483, 5
        %v486 = vor.u32 %v482, %v485
        %v487 = vrot.slane %v486, 4
        %v489 = vshll.u32 %v254, 16
        %v491 = vrot.slane %v489, 5
        %v492 = vsel %vm286, %v487, %v491
        %v493 = vshrl.u32 %v254, 16
        %v495 = vrot.slane %v493, 4
        %v496 = vor.u32 %v495, %v491
        %v497 = vrot.slane %v496, 4
        %v499 = vshll.u32 %v255, 16
        %v501 = vrot.slane %v499, 5
        %v502 = vsel %vm286, %v497, %v501
        %v504 = vshrl.u32 %v256, 16
        %v506 = vrot.slane %v504, 4
        %v507 = vshll.u32 %v256, 16
        %v509 = vrot.slane %v507, 5
        %v510 = vor.u32 %v506, %v509
        %v511 = vrot.slane %v510, 4
        %v513 = vshll.u32 %v257, 16
        %v515 = vrot.slane %v513, 5
        %v516 = vsel %vm286, %v511, %v515
        %v517 = vshrl.u32 %v257, 16
        %v519 = vrot.slane %v517, 4
        %v520 = vor.u32 %v519, %v515
        %v521 = vrot.slane %v520, 4
        %v523 = vshll.u32 %v258, 16
        %v525 = vrot.slane %v523, 5
        %v526 = vsel %vm286, %v521, %v525
        %v528 = vshrl.u32 %v259, 16
        %v530 = vrot.slane %v528, 4
        %v531 = vshll.u32 %v259, 16
        %v533 = vrot.slane %v531, 5
        %v534 = vor.u32 %v530, %v533
        %v535 = vrot.slane %v534, 4
        %v537 = vshll.u32 %v260, 16
        %v539 = vrot.slane %v537, 5
        %v540 = vsel %vm286, %v535, %v539
        %v541 = vshrl.u32 %v260, 16
        %v543 = vrot.slane %v541, 4
        %v544 = vor.u32 %v543, %v539
        %v545 = vrot.slane %v544, 4
        %v547 = vshll.u32 %v261, 16
        %v549 = vrot.slane %v547, 5
        %v550 = vsel %vm286, %v545, %v549
        %v552 = vshrl.u32 %v262, 16
        %v554 = vrot.slane %v552, 4
        %v555 = vshll.u32 %v262, 16
        %v557 = vrot.slane %v555, 5
        %v558 = vor.u32 %v554, %v557
        %v559 = vrot.slane %v558, 4
        %v561 = vshll.u32 %v263, 16
        %v563 = vrot.slane %v561, 5
        %v564 = vsel %vm286, %v559, %v563
        %v565 = vshrl.u32 %v263, 16
        %v567 = vrot.slane %v565, 4
        %v568 = vor.u32 %v567, %v563
        %v569 = vrot.slane %v568, 4
        %v571 = vshll.u32 %v264, 16
        %v573 = vrot.slane %v571, 5
        %v574 = vsel %vm286, %v569, %v573
        %v576 = vshrl.u32 %v265, 16
        %v578 = vrot.slane %v576, 4
        %v579 = vshll.u32 %v265, 16
        %v581 = vrot.slane %v579, 5
        %v582 = vor.u32 %v578, %v581
        %v583 = vrot.slane %v582, 4
        %v585 = vshll.u32 %v266, 16
        %v587 = vrot.slane %v585, 5
        %v588 = vsel %vm286, %v583, %v587
        %v589 = vshrl.u32 %v266, 16
        %v591 = vrot.slane %v589, 4
        %v592 = vor.u32 %v591, %v587
        %v593 = vrot.slane %v592, 4
        %v595 = vshll.u32 %v267, 16
        %v597 = vrot.slane %v595, 5
        %v598 = vsel %vm286, %v593, %v597
        %v600 = vshrl.u32 %v268, 16
        %v602 = vrot.slane %v600, 4
        %v603 = vshll.u32 %v268, 16
        %v605 = vrot.slane %v603, 5
        %v606 = vor.u32 %v602, %v605
        %v607 = vrot.slane %v606, 4
        %v609 = vshll.u32 %v269, 16
        %v611 = vrot.slane %v609, 5
        %v612 = vsel %vm286, %v607, %v611
        %v613 = vshrl.u32 %v269, 16
        %v615 = vrot.slane %v613, 4
        %v616 = vor.u32 %v615, %v611
        %v617 = vrot.slane %v616, 4
        %v619 = vshll.u32 %v270, 16
        %v621 = vrot.slane %v619, 5
        %v622 = vsel %vm286, %v617, %v621
        %v624 = vshrl.u32 %v271, 16
        %v626 = vrot.slane %v624, 4
        %v627 = vshll.u32 %v271, 16
        %v629 = vrot.slane %v627, 5
        %v630 = vor.u32 %v626, %v629
        %v631 = vrot.slane %v630, 4
        %v633 = vshll.u32 %v272, 16
        %v635 = vrot.slane %v633, 5
        %v636 = vsel %vm286, %v631, %v635
        %v637 = vshrl.u32 %v272, 16
        %v639 = vrot.slane %v637, 4
        %v640 = vor.u32 %v639, %v635
        %v641 = vrot.slane %v640, 4
        %v643 = vshll.u32 %v273, 16
        %v645 = vrot.slane %v643, 5
        %v646 = vsel %vm286, %v641, %v645
        %v648 = vshrl.u32 %v274, 16
        %v650 = vrot.slane %v648, 4
        %v651 = vshll.u32 %v274, 16
        %v653 = vrot.slane %v651, 5
        %v654 = vor.u32 %v650, %v653
        %v655 = vrot.slane %v654, 4
        %v657 = vshll.u32 %v275, 16
        %v659 = vrot.slane %v657, 5
        %v660 = vsel %vm286, %v655, %v659
        %v661 = vshrl.u32 %v275, 16
        %v663 = vrot.slane %v661, 4
        %v664 = vor.u32 %v663, %v659
        %v665 = vrot.slane %v664, 4
        %v667 = vshll.u32 %v276, 16
        %v669 = vrot.slane %v667, 5
        %v670 = vsel %vm286, %v665, %v669
        %s671 = scalar_lea.vmem %s219, 4
        %v672 = vld [vmem:[%s671] sm:$0xf]
        %v673 = vunpack.c.l.b16 %v300
        %v674 = vunpack.c.l.b16 %v310
        %v675 = vunpack.c.l.b16 %v324
        %v676 = vunpack.c.l.b16 %v334
        %v677 = vunpack.c.l.b16 %v348
        %v678 = vunpack.c.l.b16 %v358
        %v679 = vunpack.c.l.b16 %v372
        %v680 = vunpack.c.l.b16 %v382
        %v681 = vunpack.c.l.b16 %v396
        %v682 = vunpack.c.l.b16 %v406
        %v683 = vunpack.c.l.b16 %v420
        %v684 = vunpack.c.l.b16 %v430
        %v685 = vunpack.c.l.b16 %v444
        %v686 = vunpack.c.l.b16 %v454
        %v687 = vunpack.c.l.b16 %v468
        %v688 = vunpack.c.l.b16 %v478
        %v689 = vunpack.c.l.b16 %v492
        %v690 = vunpack.c.l.b16 %v502
        %v691 = vunpack.c.l.b16 %v516
        %v692 = vunpack.c.l.b16 %v526
        %v693 = vunpack.c.l.b16 %v540
        %v694 = vunpack.c.l.b16 %v550
        %v695 = vunpack.c.l.b16 %v564
        %v696 = vunpack.c.l.b16 %v574
        %v697 = vunpack.c.l.b16 %v588
        %v698 = vunpack.c.l.b16 %v598
        %v699 = vunpack.c.l.b16 %v612
        %v700 = vunpack.c.l.b16 %v622
        %v701 = vunpack.c.l.b16 %v636
        %v702 = vunpack.c.l.b16 %v646
        %v703 = vunpack.c.l.b16 %v660
        %v704 = vunpack.c.l.b16 %v670
        %v705 = vpack.c.b16 %v674, %v673
        %v706 = vpack.c.b16 %v676, %v675
        %v707 = vpack.c.b16 %v678, %v677
        %v708 = vpack.c.b16 %v680, %v679
        %v709 = vpack.c.b16 %v682, %v681
        %v710 = vpack.c.b16 %v684, %v683
        %v711 = vpack.c.b16 %v686, %v685
        %v712 = vpack.c.b16 %v688, %v687
        %v713 = vpack.c.b16 %v690, %v689
        %v714 = vpack.c.b16 %v692, %v691
        %v715 = vpack.c.b16 %v694, %v693
        %v716 = vpack.c.b16 %v696, %v695
        %v717 = vpack.c.b16 %v698, %v697
        %v718 = vpack.c.b16 %v700, %v699
        %v719 = vpack.c.b16 %v702, %v701
        %v720 = vpack.c.b16 %v704, %v703
        %vm721 = vcmask 64512
        %v723 = vsel %vm721, %v705, 0
        %v726 = vsel %vm721, %v706, 0
        %v729 = vsel %vm721, %v707, 0
        %v732 = vsel %vm721, %v708, 0
        %v735 = vsel %vm721, %v709, 0
        %v738 = vsel %vm721, %v710, 0
        %v741 = vsel %vm721, %v711, 0
        %v744 = vsel %vm721, %v712, 0
        %v747 = vsel %vm721, %v713, 0
        %v750 = vsel %vm721, %v714, 0
        %v753 = vsel %vm721, %v715, 0
        %v756 = vsel %vm721, %v716, 0
        %v759 = vsel %vm721, %v717, 0
        %v762 = vsel %vm721, %v718, 0
        %v765 = vsel %vm721, %v719, 0
        %v768 = vsel %vm721, %v720, 0
        %vm770 = vcmask 1043456
        %v772 = vsel %vm770, %v672, 0
        %774 = vmatprep.subr.bf16.mxu0 0
        %775 = vmatpush1.bf16.msra.mxu0 %v772
        %776 = vmatprep.subr.bf16.mxu0 0
        %777 = vmatpush1.bf16.msra.mxu0 0
        %778 = vmatprep.subr.bf16.mxu0 0
        %779 = vmatpush1.bf16.msra.mxu0 0
        %780 = vmatprep.subr.bf16.mxu0 0
        %781 = vmatpush1.bf16.msra.mxu0 0
        %782 = vmatprep.subr.bf16.mxu0 0
        %783 = vmatpush1.bf16.msra.mxu0 0
        %784 = vmatprep.subr.bf16.mxu0 0
        %785 = vmatpush1.bf16.msra.mxu0 0
        %786 = vmatprep.subr.bf16.mxu0 0
        %787 = vmatpush1.bf16.msra.mxu0 0
        %788 = vmatprep.subr.bf16.mxu0 0
        %789 = vmatpush1.bf16.msra.mxu0 0
        %790 = vmatprep.subr.bf16.mxu0 0
        %791 = vmatpush1.bf16.msra.mxu0 0
        %792 = vmatprep.subr.bf16.mxu0 0
        %793 = vmatpush1.bf16.msra.mxu0 0
        %794 = vmatprep.subr.bf16.mxu0 0
        %795 = vmatpush1.bf16.msra.mxu0 0
        %796 = vmatprep.subr.bf16.mxu0 0
        %797 = vmatpush1.bf16.msra.mxu0 0
        %798 = vmatprep.subr.bf16.mxu0 0
        %799 = vmatpush1.bf16.msra.mxu0 0
        %800 = vmatprep.subr.bf16.mxu0 0
        %801 = vmatpush1.bf16.msra.mxu0 0
        %802 = vmatprep.subr.bf16.mxu0 0
        %803 = vmatpush1.bf16.msra.mxu0 0
        %804 = vmatprep.subr.bf16.mxu0 0
        %805 = vmatpush1.bf16.msra.mxu0 0
        %806 = vmatprep.mubr.bf16.mxu0 0
        %807 = vmatmul.mubr.bf16.gmra.mrb[0].mxu0 %v723
        %v808 = vpop.f32.mrb[0].mxu0
        %v809 = vadd.f32 0.0, %v808
        %v810 = vpop.f32.mrb[0].mxu0
        %v811 = vpop.f32.mrb[0].mxu0
        %v812 = vadd.f32 0.0, %v811
        %v813 = vpop.f32.mrb[0].mxu0
        %814 = vmatprep.mubr.bf16.mxu0 0
        %815 = vmatmul.mubr.bf16.gmra.mrb[0].mxu0 %v726
        %v816 = vpop.f32.mrb[0].mxu0
        %v817 = vadd.f32 0.0, %v816
        %v818 = vpop.f32.mrb[0].mxu0
        %v819 = vpop.f32.mrb[0].mxu0
        %v820 = vadd.f32 0.0, %v819
        %v821 = vpop.f32.mrb[0].mxu0
        %822 = vmatprep.mubr.bf16.mxu0 0
        %823 = vmatmul.mubr.bf16.gmra.mrb[0].mxu0 %v729
        %v824 = vpop.f32.mrb[0].mxu0
        %v825 = vadd.f32 0.0, %v824
        %v826 = vpop.f32.mrb[0].mxu0
        %v827 = vpop.f32.mrb[0].mxu0
        %v828 = vadd.f32 0.0, %v827
        %v829 = vpop.f32.mrb[0].mxu0
        %830 = vmatprep.mubr.bf16.mxu0 0
        %831 = vmatmul.mubr.bf16.gmra.mrb[0].mxu0 %v732
        %v832 = vpop.f32.mrb[0].mxu0
        %v833 = vadd.f32 0.0, %v832
        %v834 = vpop.f32.mrb[0].mxu0
        %v835 = vpop.f32.mrb[0].mxu0
        %v836 = vadd.f32 0.0, %v835
        %v837 = vpop.f32.mrb[0].mxu0
        %838 = vmatprep.mubr.bf16.mxu0 0
        %839 = vmatmul.mubr.bf16.gmra.mrb[0].mxu0 %v735
        %v840 = vpop.f32.mrb[0].mxu0
        %v841 = vadd.f32 0.0, %v840
        %v842 = vpop.f32.mrb[0].mxu0
        %v843 = vpop.f32.mrb[0].mxu0
        %v844 = vadd.f32 0.0, %v843
        %v845 = vpop.f32.mrb[0].mxu0
        %846 = vmatprep.mubr.bf16.mxu0 0
        %847 = vmatmul.mubr.bf16.gmra.mrb[0].mxu0 %v738
        %v848 = vpop.f32.mrb[0].mxu0
        %v849 = vadd.f32 0.0, %v848
        %v850 = vpop.f32.mrb[0].mxu0
        %v851 = vpop.f32.mrb[0].mxu0
        %v852 = vadd.f32 0.0, %v851
        %v853 = vpop.f32.mrb[0].mxu0
        %854 = vmatprep.mubr.bf16.mxu0 0
        %855 = vmatmul.mubr.bf16.gmra.mrb[0].mxu0 %v741
        %v856 = vpop.f32.mrb[0].mxu0
        %v857 = vadd.f32 0.0, %v856
        %v858 = vpop.f32.mrb[0].mxu0
        %v859 = vpop.f32.mrb[0].mxu0
        %v860 = vadd.f32 0.0, %v859
        %v861 = vpop.f32.mrb[0].mxu0
        %862 = vmatprep.mubr.bf16.mxu0 0
        %863 = vmatmul.mubr.bf16.gmra.mrb[0].mxu0 %v744
        %v864 = vpop.f32.mrb[0].mxu0
        %v865 = vadd.f32 0.0, %v864
        %v866 = vpop.f32.mrb[0].mxu0
        %v867 = vpop.f32.mrb[0].mxu0
        %v868 = vadd.f32 0.0, %v867
        %v869 = vpop.f32.mrb[0].mxu0
        %870 = vmatprep.mubr.bf16.mxu0 0
        %871 = vmatmul.mubr.bf16.gmra.mrb[0].mxu0 %v747
        %v872 = vpop.f32.mrb[0].mxu0
        %v873 = vadd.f32 0.0, %v872
        %v874 = vpop.f32.mrb[0].mxu0
        %v875 = vpop.f32.mrb[0].mxu0
        %v876 = vadd.f32 0.0, %v875
        %v877 = vpop.f32.mrb[0].mxu0
        %878 = vmatprep.mubr.bf16.mxu0 0
        %879 = vmatmul.mubr.bf16.gmra.mrb[0].mxu0 %v750
        %v880 = vpop.f32.mrb[0].mxu0
        %v881 = vadd.f32 0.0, %v880
        %v882 = vpop.f32.mrb[0].mxu0
        %v883 = vpop.f32.mrb[0].mxu0
        %v884 = vadd.f32 0.0, %v883
        %v885 = vpop.f32.mrb[0].mxu0
        %886 = vmatprep.mubr.bf16.mxu0 0
        %887 = vmatmul.mubr.bf16.gmra.mrb[0].mxu0 %v753
        %v888 = vpop.f32.mrb[0].mxu0
        %v889 = vadd.f32 0.0, %v888
        %v890 = vpop.f32.mrb[0].mxu0
        %v891 = vpop.f32.mrb[0].mxu0
        %v892 = vadd.f32 0.0, %v891
        %v893 = vpop.f32.mrb[0].mxu0
        %894 = vmatprep.mubr.bf16.mxu0 0
        %895 = vmatmul.mubr.bf16.gmra.mrb[0].mxu0 %v756
        %v896 = vpop.f32.mrb[0].mxu0
        %v897 = vadd.f32 0.0, %v896
        %v898 = vpop.f32.mrb[0].mxu0
        %v899 = vpop.f32.mrb[0].mxu0
        %v900 = vadd.f32 0.0, %v899
        %v901 = vpop.f32.mrb[0].mxu0
        %902 = vmatprep.mubr.bf16.mxu0 0
        %903 = vmatmul.mubr.bf16.gmra.mrb[0].mxu0 %v759
        %v904 = vpop.f32.mrb[0].mxu0
        %v905 = vadd.f32 0.0, %v904
        %v906 = vpop.f32.mrb[0].mxu0
        %v907 = vpop.f32.mrb[0].mxu0
        %v908 = vadd.f32 0.0, %v907
        %v909 = vpop.f32.mrb[0].mxu0
        %910 = vmatprep.mubr.bf16.mxu0 0
        %911 = vmatmul.mubr.bf16.gmra.mrb[0].mxu0 %v762
        %v912 = vpop.f32.mrb[0].mxu0
        %v913 = vadd.f32 0.0, %v912
        %v914 = vpop.f32.mrb[0].mxu0
        %v915 = vpop.f32.mrb[0].mxu0
        %v916 = vadd.f32 0.0, %v915
        %v917 = vpop.f32.mrb[0].mxu0
        %918 = vmatprep.mubr.bf16.mxu0 0
        %919 = vmatmul.mubr.bf16.gmra.mrb[0].mxu0 %v765
        %v920 = vpop.f32.mrb[0].mxu0
        %v921 = vadd.f32 0.0, %v920
        %v922 = vpop.f32.mrb[0].mxu0
        %v923 = vpop.f32.mrb[0].mxu0
        %v924 = vadd.f32 0.0, %v923
        %v925 = vpop.f32.mrb[0].mxu0
        %926 = vmatprep.mubr.bf16.mxu0 0
        %927 = vmatmul.mubr.bf16.gmra.mrb[0].mxu0 %v768
        %v928 = vpop.f32.mrb[0].mxu0
        %v929 = vadd.f32 0.0, %v928
        %v930 = vpop.f32.mrb[0].mxu0
        %v931 = vpop.f32.mrb[0].mxu0
        %v932 = vadd.f32 0.0, %v931
        %v933 = vpop.f32.mrb[0].mxu0
        %934 = vdwg.mxu0
        %v967 = vunpack.c.l.b16 %v229
        %v968 = vunpack.c.l.b16 %v230
        %v969 = vunpack.c.l.b16 %v232
        %v970 = vunpack.c.l.b16 %v233
        %v971 = vunpack.c.l.b16 %v235
        %v972 = vunpack.c.l.b16 %v236
        %v973 = vunpack.c.l.b16 %v238
        %v974 = vunpack.c.l.b16 %v239
        %v975 = vunpack.c.l.b16 %v241
        %v976 = vunpack.c.l.b16 %v242
        %v977 = vunpack.c.l.b16 %v244
        %v978 = vunpack.c.l.b16 %v245
        %v979 = vunpack.c.l.b16 %v247
        %v980 = vunpack.c.l.b16 %v248
        %v981 = vunpack.c.l.b16 %v250
        %v982 = vunpack.c.l.b16 %v251
        %v983 = vunpack.c.l.b16 %v253
        %v984 = vunpack.c.l.b16 %v254
        %v985 = vunpack.c.l.b16 %v256
        %v986 = vunpack.c.l.b16 %v257
        %v987 = vunpack.c.l.b16 %v259
        %v988 = vunpack.c.l.b16 %v260
        %v989 = vunpack.c.l.b16 %v262
        %v990 = vunpack.c.l.b16 %v263
        %v991 = vunpack.c.l.b16 %v265
        %v992 = vunpack.c.l.b16 %v266
        %v993 = vunpack.c.l.b16 %v268
        %v994 = vunpack.c.l.b16 %v269
        %v995 = vunpack.c.l.b16 %v271
        %v996 = vunpack.c.l.b16 %v272
        %v997 = vunpack.c.l.b16 %v274
        %v998 = vunpack.c.l.b16 %v275
        %v999 = vpack.c.b16 %v968, %v967
        %v1000 = vpack.c.b16 %v970, %v969
        %v1001 = vpack.c.b16 %v972, %v971
        %v1002 = vpack.c.b16 %v974, %v973
        %v1003 = vpack.c.b16 %v976, %v975
        %v1004 = vpack.c.b16 %v978, %v977
        %v1005 = vpack.c.b16 %v980, %v979
        %v1006 = vpack.c.b16 %v982, %v981
        %v1007 = vpack.c.b16 %v984, %v983
        %v1008 = vpack.c.b16 %v986, %v985
        %v1009 = vpack.c.b16 %v988, %v987
        %v1010 = vpack.c.b16 %v990, %v989
        %v1011 = vpack.c.b16 %v992, %v991
        %v1012 = vpack.c.b16 %v994, %v993
        %v1013 = vpack.c.b16 %v996, %v995
        %v1014 = vpack.c.b16 %v998, %v997
        %v1016 = vsel %vm721, %v999, 0
        %v1019 = vsel %vm721, %v1000, 0
        %v1022 = vsel %vm721, %v1001, 0
        %v1025 = vsel %vm721, %v1002, 0
        %v1028 = vsel %vm721, %v1003, 0
        %v1031 = vsel %vm721, %v1004, 0
        %v1034 = vsel %vm721, %v1005, 0
        %v1037 = vsel %vm721, %v1006, 0
        %v1040 = vsel %vm721, %v1007, 0
        %v1043 = vsel %vm721, %v1008, 0
        %v1046 = vsel %vm721, %v1009, 0
        %v1049 = vsel %vm721, %v1010, 0
        %v1052 = vsel %vm721, %v1011, 0
        %v1055 = vsel %vm721, %v1012, 0
        %v1058 = vsel %vm721, %v1013, 0
        %v1061 = vsel %vm721, %v1014, 0
        %v1064 = vsel %vm770, %v283, 0
        %1066 = vmatprep.subr.bf16.mxu0 0
        %1067 = vmatpush1.bf16.msra.mxu0 %v1064
        %1068 = vmatprep.subr.bf16.mxu0 0
        %1069 = vmatpush1.bf16.msra.mxu0 0
        %1070 = vmatprep.subr.bf16.mxu0 0
        %1071 = vmatpush1.bf16.msra.mxu0 0
        %1072 = vmatprep.subr.bf16.mxu0 0
        %1073 = vmatpush1.bf16.msra.mxu0 0
        %1074 = vmatprep.subr.bf16.mxu0 0
        %1075 = vmatpush1.bf16.msra.mxu0 0
        %1076 = vmatprep.subr.bf16.mxu0 0
        %1077 = vmatpush1.bf16.msra.mxu0 0
        %1078 = vmatprep.subr.bf16.mxu0 0
        %1079 = vmatpush1.bf16.msra.mxu0 0
        %1080 = vmatprep.subr.bf16.mxu0 0
        %1081 = vmatpush1.bf16.msra.mxu0 0
        %1082 = vmatprep.subr.bf16.mxu0 0
        %1083 = vmatpush1.bf16.msra.mxu0 0
        %1084 = vmatprep.subr.bf16.mxu0 0
        %1085 = vmatpush1.bf16.msra.mxu0 0
        %1086 = vmatprep.subr.bf16.mxu0 0
        %1087 = vmatpush1.bf16.msra.mxu0 0
        %1088 = vmatprep.subr.bf16.mxu0 0
        %1089 = vmatpush1.bf16.msra.mxu0 0
        %1090 = vmatprep.subr.bf16.mxu0 0
        %1091 = vmatpush1.bf16.msra.mxu0 0
        %1092 = vmatprep.subr.bf16.mxu0 0
        %1093 = vmatpush1.bf16.msra.mxu0 0
        %1094 = vmatprep.subr.bf16.mxu0 0
        %1095 = vmatpush1.bf16.msra.mxu0 0
        %1096 = vmatprep.subr.bf16.mxu0 0
        %1097 = vmatpush1.bf16.msra.mxu0 0
        %1098 = vmatprep.mubr.bf16.mxu0 0
        %1099 = vmatmul.mubr.bf16.gmra.mrb[0].mxu0 %v1016
        %v1100 = vpop.f32.mrb[0].mxu0
        %v1101 = vadd.f32 %v809, %v1100
        %v1102 = vpop.f32.mrb[0].mxu0
        %v1103 = vpop.f32.mrb[0].mxu0
        %v1104 = vadd.f32 %v812, %v1103
        %v1105 = vpop.f32.mrb[0].mxu0
        %1106 = vmatprep.mubr.bf16.mxu0 0
        %1107 = vmatmul.mubr.bf16.gmra.mrb[0].mxu0 %v1019
        %v1108 = vpop.f32.mrb[0].mxu0
        %v1109 = vadd.f32 %v817, %v1108
        %v1110 = vpop.f32.mrb[0].mxu0
        %v1111 = vpop.f32.mrb[0].mxu0
        %v1112 = vadd.f32 %v820, %v1111
        %v1113 = vpop.f32.mrb[0].mxu0
        %1114 = vmatprep.mubr.bf16.mxu0 0
        %1115 = vmatmul.mubr.bf16.gmra.mrb[0].mxu0 %v1022
        %v1116 = vpop.f32.mrb[0].mxu0
        %v1117 = vadd.f32 %v825, %v1116
        %v1118 = vpop.f32.mrb[0].mxu0
        %v1119 = vpop.f32.mrb[0].mxu0
        %v1120 = vadd.f32 %v828, %v1119
        %v1121 = vpop.f32.mrb[0].mxu0
        %1122 = vmatprep.mubr.bf16.mxu0 0
        %1123 = vmatmul.mubr.bf16.gmra.mrb[0].mxu0 %v1025
        %v1124 = vpop.f32.mrb[0].mxu0
        %v1125 = vadd.f32 %v833, %v1124
        %v1126 = vpop.f32.mrb[0].mxu0
        %v1127 = vpop.f32.mrb[0].mxu0
        %v1128 = vadd.f32 %v836, %v1127
        %v1129 = vpop.f32.mrb[0].mxu0
        %1130 = vmatprep.mubr.bf16.mxu0 0
        %1131 = vmatmul.mubr.bf16.gmra.mrb[0].mxu0 %v1028
        %v1132 = vpop.f32.mrb[0].mxu0
        %v1133 = vadd.f32 %v841, %v1132
        %v1134 = vpop.f32.mrb[0].mxu0
        %v1135 = vpop.f32.mrb[0].mxu0
        %v1136 = vadd.f32 %v844, %v1135
        %v1137 = vpop.f32.mrb[0].mxu0
        %1138 = vmatprep.mubr.bf16.mxu0 0
        %1139 = vmatmul.mubr.bf16.gmra.mrb[0].mxu0 %v1031
        %v1140 = vpop.f32.mrb[0].mxu0
        %v1141 = vadd.f32 %v849, %v1140
        %v1142 = vpop.f32.mrb[0].mxu0
        %v1143 = vpop.f32.mrb[0].mxu0
        %v1144 = vadd.f32 %v852, %v1143
        %v1145 = vpop.f32.mrb[0].mxu0
        %1146 = vmatprep.mubr.bf16.mxu0 0
        %1147 = vmatmul.mubr.bf16.gmra.mrb[0].mxu0 %v1034
        %v1148 = vpop.f32.mrb[0].mxu0
        %v1149 = vadd.f32 %v857, %v1148
        %v1150 = vpop.f32.mrb[0].mxu0
        %v1151 = vpop.f32.mrb[0].mxu0
        %v1152 = vadd.f32 %v860, %v1151
        %v1153 = vpop.f32.mrb[0].mxu0
        %1154 = vmatprep.mubr.bf16.mxu0 0
        %1155 = vmatmul.mubr.bf16.gmra.mrb[0].mxu0 %v1037
        %v1156 = vpop.f32.mrb[0].mxu0
        %v1157 = vadd.f32 %v865, %v1156
        %v1158 = vpop.f32.mrb[0].mxu0
        %v1159 = vpop.f32.mrb[0].mxu0
        %v1160 = vadd.f32 %v868, %v1159
        %v1161 = vpop.f32.mrb[0].mxu0
        %1162 = vmatprep.mubr.bf16.mxu0 0
        %1163 = vmatmul.mubr.bf16.gmra.mrb[0].mxu0 %v1040
        %v1164 = vpop.f32.mrb[0].mxu0
        %v1165 = vadd.f32 %v873, %v1164
        %v1166 = vpop.f32.mrb[0].mxu0
        %v1167 = vpop.f32.mrb[0].mxu0
        %v1168 = vadd.f32 %v876, %v1167
        %v1169 = vpop.f32.mrb[0].mxu0
        %1170 = vmatprep.mubr.bf16.mxu0 0
        %1171 = vmatmul.mubr.bf16.gmra.mrb[0].mxu0 %v1043
        %v1172 = vpop.f32.mrb[0].mxu0
        %v1173 = vadd.f32 %v881, %v1172
        %v1174 = vpop.f32.mrb[0].mxu0
        %v1175 = vpop.f32.mrb[0].mxu0
        %v1176 = vadd.f32 %v884, %v1175
        %v1177 = vpop.f32.mrb[0].mxu0
        %1178 = vmatprep.mubr.bf16.mxu0 0
        %1179 = vmatmul.mubr.bf16.gmra.mrb[0].mxu0 %v1046
        %v1180 = vpop.f32.mrb[0].mxu0
        %v1181 = vadd.f32 %v889, %v1180
        %v1182 = vpop.f32.mrb[0].mxu0
        %v1183 = vpop.f32.mrb[0].mxu0
        %v1184 = vadd.f32 %v892, %v1183
        %v1185 = vpop.f32.mrb[0].mxu0
        %1186 = vmatprep.mubr.bf16.mxu0 0
        %1187 = vmatmul.mubr.bf16.gmra.mrb[0].mxu0 %v1049
        %v1188 = vpop.f32.mrb[0].mxu0
        %v1189 = vadd.f32 %v897, %v1188
        %v1190 = vpop.f32.mrb[0].mxu0
        %v1191 = vpop.f32.mrb[0].mxu0
        %v1192 = vadd.f32 %v900, %v1191
        %v1193 = vpop.f32.mrb[0].mxu0
        %1194 = vmatprep.mubr.bf16.mxu0 0
        %1195 = vmatmul.mubr.bf16.gmra.mrb[0].mxu0 %v1052
        %v1196 = vpop.f32.mrb[0].mxu0
        %v1197 = vadd.f32 %v905, %v1196
        %v1198 = vpop.f32.mrb[0].mxu0
        %v1199 = vpop.f32.mrb[0].mxu0
        %v1200 = vadd.f32 %v908, %v1199
        %v1201 = vpop.f32.mrb[0].mxu0
        %1202 = vmatprep.mubr.bf16.mxu0 0
        %1203 = vmatmul.mubr.bf16.gmra.mrb[0].mxu0 %v1055
        %v1204 = vpop.f32.mrb[0].mxu0
        %v1205 = vadd.f32 %v913, %v1204
        %v1206 = vpop.f32.mrb[0].mxu0
        %v1207 = vpop.f32.mrb[0].mxu0
        %v1208 = vadd.f32 %v916, %v1207
        %v1209 = vpop.f32.mrb[0].mxu0
        %1210 = vmatprep.mubr.bf16.mxu0 0
        %1211 = vmatmul.mubr.bf16.gmra.mrb[0].mxu0 %v1058
        %v1212 = vpop.f32.mrb[0].mxu0
        %v1213 = vadd.f32 %v921, %v1212
        %v1214 = vpop.f32.mrb[0].mxu0
        %v1215 = vpop.f32.mrb[0].mxu0
        %v1216 = vadd.f32 %v924, %v1215
        %v1217 = vpop.f32.mrb[0].mxu0
        %1218 = vmatprep.mubr.bf16.mxu0 0
        %1219 = vmatmul.mubr.bf16.gmra.mrb[0].mxu0 %v1061
        %v1220 = vpop.f32.mrb[0].mxu0
        %v1221 = vadd.f32 %v929, %v1220
        %v1222 = vpop.f32.mrb[0].mxu0
        %v1223 = vpop.f32.mrb[0].mxu0
        %v1224 = vadd.f32 %v932, %v1223
        %v1225 = vpop.f32.mrb[0].mxu0
        %1226 = vdwg.mxu0
        %vm1243 = vcmask 1042432
        %vm1244 = vcmask 1046532
        %vm1245 = vmor %vm1243, %vm1244
        %v1246 = vrot.slane %v229, 5
        %v1247 = vrot.slane %v1246, 4
        %v1248 = vrot.slane %v230, 5
        %v1249 = vsel %vm1245, %v1247, %v1248
        %v1250 = vrot.slane %v1248, 4
        %v1251 = vrot.slane %v231, 5
        %v1252 = vsel %vm1245, %v1250, %v1251
        %v1253 = vrot.slane %v232, 5
        %v1254 = vrot.slane %v1253, 4
        %v1255 = vrot.slane %v233, 5
        %v1256 = vsel %vm1245, %v1254, %v1255
        %v1257 = vrot.slane %v1255, 4
        %v1258 = vrot.slane %v234, 5
        %v1259 = vsel %vm1245, %v1257, %v1258
        %v1260 = vrot.slane %v235, 5
        %v1261 = vrot.slane %v1260, 4
        %v1262 = vrot.slane %v236, 5
        %v1263 = vsel %vm1245, %v1261, %v1262
        %v1264 = vrot.slane %v1262, 4
        %v1265 = vrot.slane %v237, 5
        %v1266 = vsel %vm1245, %v1264, %v1265
        %v1267 = vrot.slane %v238, 5
        %v1268 = vrot.slane %v1267, 4
        %v1269 = vrot.slane %v239, 5
        %v1270 = vsel %vm1245, %v1268, %v1269
        %v1271 = vrot.slane %v1269, 4
        %v1272 = vrot.slane %v240, 5
        %v1273 = vsel %vm1245, %v1271, %v1272
        %v1274 = vrot.slane %v241, 5
        %v1275 = vrot.slane %v1274, 4
        %v1276 = vrot.slane %v242, 5
        %v1277 = vsel %vm1245, %v1275, %v1276
        %v1278 = vrot.slane %v1276, 4
        %v1279 = vrot.slane %v243, 5
        %v1280 = vsel %vm1245, %v1278, %v1279
        %v1281 = vrot.slane %v244, 5
        %v1282 = vrot.slane %v1281, 4
        %v1283 = vrot.slane %v245, 5
        %v1284 = vsel %vm1245, %v1282, %v1283
        %v1285 = vrot.slane %v1283, 4
        %v1286 = vrot.slane %v246, 5
        %v1287 = vsel %vm1245, %v1285, %v1286
        %v1288 = vrot.slane %v247, 5
        %v1289 = vrot.slane %v1288, 4
        %v1290 = vrot.slane %v248, 5
        %v1291 = vsel %vm1245, %v1289, %v1290
        %v1292 = vrot.slane %v1290, 4
        %v1293 = vrot.slane %v249, 5
        %v1294 = vsel %vm1245, %v1292, %v1293
        %v1295 = vrot.slane %v250, 5
        %v1296 = vrot.slane %v1295, 4
        %v1297 = vrot.slane %v251, 5
        %v1298 = vsel %vm1245, %v1296, %v1297
        %v1299 = vrot.slane %v1297, 4
        %v1300 = vrot.slane %v252, 5
        %v1301 = vsel %vm1245, %v1299, %v1300
        %v1302 = vrot.slane %v253, 5
        %v1303 = vrot.slane %v1302, 4
        %v1304 = vrot.slane %v254, 5
        %v1305 = vsel %vm1245, %v1303, %v1304
        %v1306 = vrot.slane %v1304, 4
        %v1307 = vrot.slane %v255, 5
        %v1308 = vsel %vm1245, %v1306, %v1307
        %v1309 = vrot.slane %v256, 5
        %v1310 = vrot.slane %v1309, 4
        %v1311 = vrot.slane %v257, 5
        %v1312 = vsel %vm1245, %v1310, %v1311
        %v1313 = vrot.slane %v1311, 4
        %v1314 = vrot.slane %v258, 5
        %v1315 = vsel %vm1245, %v1313, %v1314
        %v1316 = vrot.slane %v259, 5
        %v1317 = vrot.slane %v1316, 4
        %v1318 = vrot.slane %v260, 5
        %v1319 = vsel %vm1245, %v1317, %v1318
        %v1320 = vrot.slane %v1318, 4
        %v1321 = vrot.slane %v261, 5
        %v1322 = vsel %vm1245, %v1320, %v1321
        %v1323 = vrot.slane %v262, 5
        %v1324 = vrot.slane %v1323, 4
        %v1325 = vrot.slane %v263, 5
        %v1326 = vsel %vm1245, %v1324, %v1325
        %v1327 = vrot.slane %v1325, 4
        %v1328 = vrot.slane %v264, 5
        %v1329 = vsel %vm1245, %v1327, %v1328
        %v1330 = vrot.slane %v265, 5
        %v1331 = vrot.slane %v1330, 4
        %v1332 = vrot.slane %v266, 5
        %v1333 = vsel %vm1245, %v1331, %v1332
        %v1334 = vrot.slane %v1332, 4
        %v1335 = vrot.slane %v267, 5
        %v1336 = vsel %vm1245, %v1334, %v1335
        %v1337 = vrot.slane %v268, 5
        %v1338 = vrot.slane %v1337, 4
        %v1339 = vrot.slane %v269, 5
        %v1340 = vsel %vm1245, %v1338, %v1339
        %v1341 = vrot.slane %v1339, 4
        %v1342 = vrot.slane %v270, 5
        %v1343 = vsel %vm1245, %v1341, %v1342
        %v1344 = vrot.slane %v271, 5
        %v1345 = vrot.slane %v1344, 4
        %v1346 = vrot.slane %v272, 5
        %v1347 = vsel %vm1245, %v1345, %v1346
        %v1348 = vrot.slane %v1346, 4
        %v1349 = vrot.slane %v273, 5
        %v1350 = vsel %vm1245, %v1348, %v1349
        %v1351 = vrot.slane %v274, 5
        %v1352 = vrot.slane %v1351, 4
        %v1353 = vrot.slane %v275, 5
        %v1354 = vsel %vm1245, %v1352, %v1353
        %v1355 = vrot.slane %v1353, 4
        %v1356 = vrot.slane %v276, 5
        %v1357 = vsel %vm1245, %v1355, %v1356
        %s1358 = scalar_lea.vmem %s219, 8
        %v1359 = vld [vmem:[%s1358] sm:$0xf]
        %v1360 = vunpack.c.l.b16 %v1249
        %v1361 = vunpack.c.l.b16 %v1252
        %v1362 = vunpack.c.l.b16 %v1256
        %v1363 = vunpack.c.l.b16 %v1259
        %v1364 = vunpack.c.l.b16 %v1263
        %v1365 = vunpack.c.l.b16 %v1266
        %v1366 = vunpack.c.l.b16 %v1270
        %v1367 = vunpack.c.l.b16 %v1273
        %v1368 = vunpack.c.l.b16 %v1277
        %v1369 = vunpack.c.l.b16 %v1280
        %v1370 = vunpack.c.l.b16 %v1284
        %v1371 = vunpack.c.l.b16 %v1287
        %v1372 = vunpack.c.l.b16 %v1291
        %v1373 = vunpack.c.l.b16 %v1294
        %v1374 = vunpack.c.l.b16 %v1298
        %v1375 = vunpack.c.l.b16 %v1301
        %v1376 = vunpack.c.l.b16 %v1305
        %v1377 = vunpack.c.l.b16 %v1308
        %v1378 = vunpack.c.l.b16 %v1312
        %v1379 = vunpack.c.l.b16 %v1315
        %v1380 = vunpack.c.l.b16 %v1319
        %v1381 = vunpack.c.l.b16 %v1322
        %v1382 = vunpack.c.l.b16 %v1326
        %v1383 = vunpack.c.l.b16 %v1329
        %v1384 = vunpack.c.l.b16 %v1333
        %v1385 = vunpack.c.l.b16 %v1336
        %v1386 = vunpack.c.l.b16 %v1340
        %v1387 = vunpack.c.l.b16 %v1343
        %v1388 = vunpack.c.l.b16 %v1347
        %v1389 = vunpack.c.l.b16 %v1350
        %v1390 = vunpack.c.l.b16 %v1354
        %v1391 = vunpack.c.l.b16 %v1357
        %v1392 = vpack.c.b16 %v1361, %v1360
        %v1393 = vpack.c.b16 %v1363, %v1362
        %v1394 = vpack.c.b16 %v1365, %v1364
        %v1395 = vpack.c.b16 %v1367, %v1366
        %v1396 = vpack.c.b16 %v1369, %v1368
        %v1397 = vpack.c.b16 %v1371, %v1370
        %v1398 = vpack.c.b16 %v1373, %v1372
        %v1399 = vpack.c.b16 %v1375, %v1374
        %v1400 = vpack.c.b16 %v1377, %v1376
        %v1401 = vpack.c.b16 %v1379, %v1378
        %v1402 = vpack.c.b16 %v1381, %v1380
        %v1403 = vpack.c.b16 %v1383, %v1382
        %v1404 = vpack.c.b16 %v1385, %v1384
        %v1405 = vpack.c.b16 %v1387, %v1386
        %v1406 = vpack.c.b16 %v1389, %v1388
        %v1407 = vpack.c.b16 %v1391, %v1390
        %v1409 = vsel %vm721, %v1392, 0
        %v1412 = vsel %vm721, %v1393, 0
        %v1415 = vsel %vm721, %v1394, 0
        %v1418 = vsel %vm721, %v1395, 0
        %v1421 = vsel %vm721, %v1396, 0
        %v1424 = vsel %vm721, %v1397, 0
        %v1427 = vsel %vm721, %v1398, 0
        %v1430 = vsel %vm721, %v1399, 0
        %v1433 = vsel %vm721, %v1400, 0
        %v1436 = vsel %vm721, %v1401, 0
        %v1439 = vsel %vm721, %v1402, 0
        %v1442 = vsel %vm721, %v1403, 0
        %v1445 = vsel %vm721, %v1404, 0
        %v1448 = vsel %vm721, %v1405, 0
        %v1451 = vsel %vm721, %v1406, 0
        %v1454 = vsel %vm721, %v1407, 0
        %v1457 = vsel %vm770, %v1359, 0
        %1459 = vmatprep.subr.bf16.mxu0 0
        %1460 = vmatpush1.bf16.msra.mxu0 %v1457
        %1461 = vmatprep.subr.bf16.mxu0 0
        %1462 = vmatpush1.bf16.msra.mxu0 0
        %1463 = vmatprep.subr.bf16.mxu0 0
        %1464 = vmatpush1.bf16.msra.mxu0 0
        %1465 = vmatprep.subr.bf16.mxu0 0
        %1466 = vmatpush1.bf16.msra.mxu0 0
        %1467 = vmatprep.subr.bf16.mxu0 0
        %1468 = vmatpush1.bf16.msra.mxu0 0
        %1469 = vmatprep.subr.bf16.mxu0 0
        %1470 = vmatpush1.bf16.msra.mxu0 0
        %1471 = vmatprep.subr.bf16.mxu0 0
        %1472 = vmatpush1.bf16.msra.mxu0 0
        %1473 = vmatprep.subr.bf16.mxu0 0
        %1474 = vmatpush1.bf16.msra.mxu0 0
        %1475 = vmatprep.subr.bf16.mxu0 0
        %1476 = vmatpush1.bf16.msra.mxu0 0
        %1477 = vmatprep.subr.bf16.mxu0 0
        %1478 = vmatpush1.bf16.msra.mxu0 0
        %1479 = vmatprep.subr.bf16.mxu0 0
        %1480 = vmatpush1.bf16.msra.mxu0 0
        %1481 = vmatprep.subr.bf16.mxu0 0
        %1482 = vmatpush1.bf16.msra.mxu0 0
        %1483 = vmatprep.subr.bf16.mxu0 0
        %1484 = vmatpush1.bf16.msra.mxu0 0
        %1485 = vmatprep.subr.bf16.mxu0 0
        %1486 = vmatpush1.bf16.msra.mxu0 0
        %1487 = vmatprep.subr.bf16.mxu0 0
        %1488 = vmatpush1.bf16.msra.mxu0 0
        %1489 = vmatprep.subr.bf16.mxu0 0
        %1490 = vmatpush1.bf16.msra.mxu0 0
        %1491 = vmatprep.mubr.bf16.mxu0 0
        %1492 = vmatmul.mubr.bf16.gmra.mrb[0].mxu0 %v1409
        %v1493 = vpop.f32.mrb[0].mxu0
        %v1494 = vadd.f32 0.0, %v1493
        %v1495 = vpop.f32.mrb[0].mxu0
        %v1496 = vpop.f32.mrb[0].mxu0
        %v1497 = vadd.f32 0.0, %v1496
        %v1498 = vpop.f32.mrb[0].mxu0
        %1499 = vmatprep.mubr.bf16.mxu0 0
        %1500 = vmatmul.mubr.bf16.gmra.mrb[0].mxu0 %v1412
        %v1501 = vpop.f32.mrb[0].mxu0
        %v1502 = vadd.f32 0.0, %v1501
        %v1503 = vpop.f32.mrb[0].mxu0
        %v1504 = vpop.f32.mrb[0].mxu0
        %v1505 = vadd.f32 0.0, %v1504
        %v1506 = vpop.f32.mrb[0].mxu0
        %1507 = vmatprep.mubr.bf16.mxu0 0
        %1508 = vmatmul.mubr.bf16.gmra.mrb[0].mxu0 %v1415
        %v1509 = vpop.f32.mrb[0].mxu0
        %v1510 = vadd.f32 0.0, %v1509
        %v1511 = vpop.f32.mrb[0].mxu0
        %v1512 = vpop.f32.mrb[0].mxu0
        %v1513 = vadd.f32 0.0, %v1512
        %v1514 = vpop.f32.mrb[0].mxu0
        %1515 = vmatprep.mubr.bf16.mxu0 0
        %1516 = vmatmul.mubr.bf16.gmra.mrb[0].mxu0 %v1418
        %v1517 = vpop.f32.mrb[0].mxu0
        %v1518 = vadd.f32 0.0, %v1517
        %v1519 = vpop.f32.mrb[0].mxu0
        %v1520 = vpop.f32.mrb[0].mxu0
        %v1521 = vadd.f32 0.0, %v1520
        %v1522 = vpop.f32.mrb[0].mxu0
        %1523 = vmatprep.mubr.bf16.mxu0 0
        %1524 = vmatmul.mubr.bf16.gmra.mrb[0].mxu0 %v1421
        %v1525 = vpop.f32.mrb[0].mxu0
        %v1526 = vadd.f32 0.0, %v1525
        %v1527 = vpop.f32.mrb[0].mxu0
        %v1528 = vpop.f32.mrb[0].mxu0
        %v1529 = vadd.f32 0.0, %v1528
        %v1530 = vpop.f32.mrb[0].mxu0
        %1531 = vmatprep.mubr.bf16.mxu0 0
        %1532 = vmatmul.mubr.bf16.gmra.mrb[0].mxu0 %v1424
        %v1533 = vpop.f32.mrb[0].mxu0
        %v1534 = vadd.f32 0.0, %v1533
        %v1535 = vpop.f32.mrb[0].mxu0
        %v1536 = vpop.f32.mrb[0].mxu0
        %v1537 = vadd.f32 0.0, %v1536
        %v1538 = vpop.f32.mrb[0].mxu0
        %1539 = vmatprep.mubr.bf16.mxu0 0
        %1540 = vmatmul.mubr.bf16.gmra.mrb[0].mxu0 %v1427
        %v1541 = vpop.f32.mrb[0].mxu0
        %v1542 = vadd.f32 0.0, %v1541
        %v1543 = vpop.f32.mrb[0].mxu0
        %v1544 = vpop.f32.mrb[0].mxu0
        %v1545 = vadd.f32 0.0, %v1544
        %v1546 = vpop.f32.mrb[0].mxu0
        %1547 = vmatprep.mubr.bf16.mxu0 0
        %1548 = vmatmul.mubr.bf16.gmra.mrb[0].mxu0 %v1430
        %v1549 = vpop.f32.mrb[0].mxu0
        %v1550 = vadd.f32 0.0, %v1549
        %v1551 = vpop.f32.mrb[0].mxu0
        %v1552 = vpop.f32.mrb[0].mxu0
        %v1553 = vadd.f32 0.0, %v1552
        %v1554 = vpop.f32.mrb[0].mxu0
        %1555 = vmatprep.mubr.bf16.mxu0 0
        %1556 = vmatmul.mubr.bf16.gmra.mrb[0].mxu0 %v1433
        %v1557 = vpop.f32.mrb[0].mxu0
        %v1558 = vadd.f32 0.0, %v1557
        %v1559 = vpop.f32.mrb[0].mxu0
        %v1560 = vpop.f32.mrb[0].mxu0
        %v1561 = vadd.f32 0.0, %v1560
        %v1562 = vpop.f32.mrb[0].mxu0
        %1563 = vmatprep.mubr.bf16.mxu0 0
        %1564 = vmatmul.mubr.bf16.gmra.mrb[0].mxu0 %v1436
        %v1565 = vpop.f32.mrb[0].mxu0
        %v1566 = vadd.f32 0.0, %v1565
        %v1567 = vpop.f32.mrb[0].mxu0
        %v1568 = vpop.f32.mrb[0].mxu0
        %v1569 = vadd.f32 0.0, %v1568
        %v1570 = vpop.f32.mrb[0].mxu0
        %1571 = vmatprep.mubr.bf16.mxu0 0
        %1572 = vmatmul.mubr.bf16.gmra.mrb[0].mxu0 %v1439
        %v1573 = vpop.f32.mrb[0].mxu0
        %v1574 = vadd.f32 0.0, %v1573
        %v1575 = vpop.f32.mrb[0].mxu0
        %v1576 = vpop.f32.mrb[0].mxu0
        %v1577 = vadd.f32 0.0, %v1576
        %v1578 = vpop.f32.mrb[0].mxu0
        %1579 = vmatprep.mubr.bf16.mxu0 0
        %1580 = vmatmul.mubr.bf16.gmra.mrb[0].mxu0 %v1442
        %v1581 = vpop.f32.mrb[0].mxu0
        %v1582 = vadd.f32 0.0, %v1581
        %v1583 = vpop.f32.mrb[0].mxu0
        %v1584 = vpop.f32.mrb[0].mxu0
        %v1585 = vadd.f32 0.0, %v1584
        %v1586 = vpop.f32.mrb[0].mxu0
        %1587 = vmatprep.mubr.bf16.mxu0 0
        %1588 = vmatmul.mubr.bf16.gmra.mrb[0].mxu0 %v1445
        %v1589 = vpop.f32.mrb[0].mxu0
        %v1590 = vadd.f32 0.0, %v1589
        %v1591 = vpop.f32.mrb[0].mxu0
        %v1592 = vpop.f32.mrb[0].mxu0
        %v1593 = vadd.f32 0.0, %v1592
        %v1594 = vpop.f32.mrb[0].mxu0
        %1595 = vmatprep.mubr.bf16.mxu0 0
        %1596 = vmatmul.mubr.bf16.gmra.mrb[0].mxu0 %v1448
        %v1597 = vpop.f32.mrb[0].mxu0
        %v1598 = vadd.f32 0.0, %v1597
        %v1599 = vpop.f32.mrb[0].mxu0
        %v1600 = vpop.f32.mrb[0].mxu0
        %v1601 = vadd.f32 0.0, %v1600
        %v1602 = vpop.f32.mrb[0].mxu0
        %1603 = vmatprep.mubr.bf16.mxu0 0
        %1604 = vmatmul.mubr.bf16.gmra.mrb[0].mxu0 %v1451
        %v1605 = vpop.f32.mrb[0].mxu0
        %v1606 = vadd.f32 0.0, %v1605
        %v1607 = vpop.f32.mrb[0].mxu0
        %v1608 = vpop.f32.mrb[0].mxu0
        %v1609 = vadd.f32 0.0, %v1608
        %v1610 = vpop.f32.mrb[0].mxu0
        %1611 = vmatprep.mubr.bf16.mxu0 0
        %1612 = vmatmul.mubr.bf16.gmra.mrb[0].mxu0 %v1454
        %v1613 = vpop.f32.mrb[0].mxu0
        %v1614 = vadd.f32 0.0, %v1613
        %v1615 = vpop.f32.mrb[0].mxu0
        %v1616 = vpop.f32.mrb[0].mxu0
        %v1617 = vadd.f32 0.0, %v1616
        %v1618 = vpop.f32.mrb[0].mxu0
        %1619 = vdwg.mxu0
        %v1620 = vadd.f32 %v1101, %v1494
        %v1621 = vadd.f32 %v1104, %v1497
        %v1622 = vadd.f32 %v1109, %v1502
        %v1623 = vadd.f32 %v1112, %v1505
        %v1624 = vadd.f32 %v1117, %v1510
        %v1625 = vadd.f32 %v1120, %v1513
        %v1626 = vadd.f32 %v1125, %v1518
        %v1627 = vadd.f32 %v1128, %v1521
        %v1628 = vadd.f32 %v1133, %v1526
        %v1629 = vadd.f32 %v1136, %v1529
        %v1630 = vadd.f32 %v1141, %v1534
        %v1631 = vadd.f32 %v1144, %v1537
        %v1632 = vadd.f32 %v1149, %v1542
        %v1633 = vadd.f32 %v1152, %v1545
        %v1634 = vadd.f32 %v1157, %v1550
        %v1635 = vadd.f32 %v1160, %v1553
        %v1636 = vadd.f32 %v1165, %v1558
        %v1637 = vadd.f32 %v1168, %v1561
        %v1638 = vadd.f32 %v1173, %v1566
        %v1639 = vadd.f32 %v1176, %v1569
        %v1640 = vadd.f32 %v1181, %v1574
        %v1641 = vadd.f32 %v1184, %v1577
        %v1642 = vadd.f32 %v1189, %v1582
        %v1643 = vadd.f32 %v1192, %v1585
        %v1644 = vadd.f32 %v1197, %v1590
        %v1645 = vadd.f32 %v1200, %v1593
        %v1646 = vadd.f32 %v1205, %v1598
        %v1647 = vadd.f32 %v1208, %v1601
        %v1648 = vadd.f32 %v1213, %v1606
        %v1649 = vadd.f32 %v1216, %v1609
        %v1650 = vadd.f32 %v1221, %v1614
        %v1651 = vadd.f32 %v1224, %v1617
        %s1652 = scalar_lea.vmem %s219, 12
        %v1653 = vld [vmem:[%s1652] sm:$0xf]
        %v1656 = vunpack.c.l.b16 %v277
        %v1657 = vunpack.c.l.b16 %v278
        %v1658 = vpack.c.b16 %v1657, %v1656
        %v1660 = vsel %vm721, %v1658, 0
        %v1663 = vsel %vm770, %v1653, 0
        %1665 = vmatprep.subr.bf16.mxu0 0
        %1666 = vmatpush1.bf16.msra.mxu0 %v1663
        %1667 = vmatprep.subr.bf16.mxu0 0
        %1668 = vmatpush1.bf16.msra.mxu0 0
        %1669 = vmatprep.subr.bf16.mxu0 0
        %1670 = vmatpush1.bf16.msra.mxu0 0
        %1671 = vmatprep.subr.bf16.mxu0 0
        %1672 = vmatpush1.bf16.msra.mxu0 0
        %1673 = vmatprep.subr.bf16.mxu0 0
        %1674 = vmatpush1.bf16.msra.mxu0 0
        %1675 = vmatprep.subr.bf16.mxu0 0
        %1676 = vmatpush1.bf16.msra.mxu0 0
        %1677 = vmatprep.subr.bf16.mxu0 0
        %1678 = vmatpush1.bf16.msra.mxu0 0
        %1679 = vmatprep.subr.bf16.mxu0 0
        %1680 = vmatpush1.bf16.msra.mxu0 0
        %1681 = vmatprep.subr.bf16.mxu0 0
        %1682 = vmatpush1.bf16.msra.mxu0 0
        %1683 = vmatprep.subr.bf16.mxu0 0
        %1684 = vmatpush1.bf16.msra.mxu0 0
        %1685 = vmatprep.subr.bf16.mxu0 0
        %1686 = vmatpush1.bf16.msra.mxu0 0
        %1687 = vmatprep.subr.bf16.mxu0 0
        %1688 = vmatpush1.bf16.msra.mxu0 0
        %1689 = vmatprep.subr.bf16.mxu0 0
        %1690 = vmatpush1.bf16.msra.mxu0 0
        %1691 = vmatprep.subr.bf16.mxu0 0
        %1692 = vmatpush1.bf16.msra.mxu0 0
        %1693 = vmatprep.subr.bf16.mxu0 0
        %1694 = vmatpush1.bf16.msra.mxu0 0
        %1695 = vmatprep.subr.bf16.mxu0 0
        %1696 = vmatpush1.bf16.msra.mxu0 0
        %1697 = vmatprep.mubr.bf16.mxu0 0
        %1698 = vmatmul.mubr.bf16.gmra.mrb[0].mxu0 %v1019
        %v1699 = vpop.f32.mrb[0].mxu0
        %v1700 = vadd.f32 0.0, %v1699
        %v1701 = vpop.f32.mrb[0].mxu0
        %v1702 = vpop.f32.mrb[0].mxu0
        %v1703 = vadd.f32 0.0, %v1702
        %v1704 = vpop.f32.mrb[0].mxu0
        %1705 = vmatprep.mubr.bf16.mxu0 0
        %1706 = vmatmul.mubr.bf16.gmra.mrb[0].mxu0 %v1022
        %v1707 = vpop.f32.mrb[0].mxu0
        %v1708 = vadd.f32 0.0, %v1707
        %v1709 = vpop.f32.mrb[0].mxu0
        %v1710 = vpop.f32.mrb[0].mxu0
        %v1711 = vadd.f32 0.0, %v1710
        %v1712 = vpop.f32.mrb[0].mxu0
        %1713 = vmatprep.mubr.bf16.mxu0 0
        %1714 = vmatmul.mubr.bf16.gmra.mrb[0].mxu0 %v1025
        %v1715 = vpop.f32.mrb[0].mxu0
        %v1716 = vadd.f32 0.0, %v1715
        %v1717 = vpop.f32.mrb[0].mxu0
        %v1718 = vpop.f32.mrb[0].mxu0
        %v1719 = vadd.f32 0.0, %v1718
        %v1720 = vpop.f32.mrb[0].mxu0
        %1721 = vmatprep.mubr.bf16.mxu0 0
        %1722 = vmatmul.mubr.bf16.gmra.mrb[0].mxu0 %v1028
        %v1723 = vpop.f32.mrb[0].mxu0
        %v1724 = vadd.f32 0.0, %v1723
        %v1725 = vpop.f32.mrb[0].mxu0
        %v1726 = vpop.f32.mrb[0].mxu0
        %v1727 = vadd.f32 0.0, %v1726
        %v1728 = vpop.f32.mrb[0].mxu0
        %1729 = vmatprep.mubr.bf16.mxu0 0
        %1730 = vmatmul.mubr.bf16.gmra.mrb[0].mxu0 %v1031
        %v1731 = vpop.f32.mrb[0].mxu0
        %v1732 = vadd.f32 0.0, %v1731
        %v1733 = vpop.f32.mrb[0].mxu0
        %v1734 = vpop.f32.mrb[0].mxu0
        %v1735 = vadd.f32 0.0, %v1734
        %v1736 = vpop.f32.mrb[0].mxu0
        %1737 = vmatprep.mubr.bf16.mxu0 0
        %1738 = vmatmul.mubr.bf16.gmra.mrb[0].mxu0 %v1034
        %v1739 = vpop.f32.mrb[0].mxu0
        %v1740 = vadd.f32 0.0, %v1739
        %v1741 = vpop.f32.mrb[0].mxu0
        %v1742 = vpop.f32.mrb[0].mxu0
        %v1743 = vadd.f32 0.0, %v1742
        %v1744 = vpop.f32.mrb[0].mxu0
        %1745 = vmatprep.mubr.bf16.mxu0 0
        %1746 = vmatmul.mubr.bf16.gmra.mrb[0].mxu0 %v1037
        %v1747 = vpop.f32.mrb[0].mxu0
        %v1748 = vadd.f32 0.0, %v1747
        %v1749 = vpop.f32.mrb[0].mxu0
        %v1750 = vpop.f32.mrb[0].mxu0
        %v1751 = vadd.f32 0.0, %v1750
        %v1752 = vpop.f32.mrb[0].mxu0
        %1753 = vmatprep.mubr.bf16.mxu0 0
        %1754 = vmatmul.mubr.bf16.gmra.mrb[0].mxu0 %v1040
        %v1755 = vpop.f32.mrb[0].mxu0
        %v1756 = vadd.f32 0.0, %v1755
        %v1757 = vpop.f32.mrb[0].mxu0
        %v1758 = vpop.f32.mrb[0].mxu0
        %v1759 = vadd.f32 0.0, %v1758
        %v1760 = vpop.f32.mrb[0].mxu0
        %1761 = vmatprep.mubr.bf16.mxu0 0
        %1762 = vmatmul.mubr.bf16.gmra.mrb[0].mxu0 %v1043
        %v1763 = vpop.f32.mrb[0].mxu0
        %v1764 = vadd.f32 0.0, %v1763
        %v1765 = vpop.f32.mrb[0].mxu0
        %v1766 = vpop.f32.mrb[0].mxu0
        %v1767 = vadd.f32 0.0, %v1766
        %v1768 = vpop.f32.mrb[0].mxu0
        %1769 = vmatprep.mubr.bf16.mxu0 0
        %1770 = vmatmul.mubr.bf16.gmra.mrb[0].mxu0 %v1046
        %v1771 = vpop.f32.mrb[0].mxu0
        %v1772 = vadd.f32 0.0, %v1771
        %v1773 = vpop.f32.mrb[0].mxu0
        %v1774 = vpop.f32.mrb[0].mxu0
        %v1775 = vadd.f32 0.0, %v1774
        %v1776 = vpop.f32.mrb[0].mxu0
        %1777 = vmatprep.mubr.bf16.mxu0 0
        %1778 = vmatmul.mubr.bf16.gmra.mrb[0].mxu0 %v1049
        %v1779 = vpop.f32.mrb[0].mxu0
        %v1780 = vadd.f32 0.0, %v1779
        %v1781 = vpop.f32.mrb[0].mxu0
        %v1782 = vpop.f32.mrb[0].mxu0
        %v1783 = vadd.f32 0.0, %v1782
        %v1784 = vpop.f32.mrb[0].mxu0
        %1785 = vmatprep.mubr.bf16.mxu0 0
        %1786 = vmatmul.mubr.bf16.gmra.mrb[0].mxu0 %v1052
        %v1787 = vpop.f32.mrb[0].mxu0
        %v1788 = vadd.f32 0.0, %v1787
        %v1789 = vpop.f32.mrb[0].mxu0
        %v1790 = vpop.f32.mrb[0].mxu0
        %v1791 = vadd.f32 0.0, %v1790
        %v1792 = vpop.f32.mrb[0].mxu0
        %1793 = vmatprep.mubr.bf16.mxu0 0
        %1794 = vmatmul.mubr.bf16.gmra.mrb[0].mxu0 %v1055
        %v1795 = vpop.f32.mrb[0].mxu0
        %v1796 = vadd.f32 0.0, %v1795
        %v1797 = vpop.f32.mrb[0].mxu0
        %v1798 = vpop.f32.mrb[0].mxu0
        %v1799 = vadd.f32 0.0, %v1798
        %v1800 = vpop.f32.mrb[0].mxu0
        %1801 = vmatprep.mubr.bf16.mxu0 0
        %1802 = vmatmul.mubr.bf16.gmra.mrb[0].mxu0 %v1058
        %v1803 = vpop.f32.mrb[0].mxu0
        %v1804 = vadd.f32 0.0, %v1803
        %v1805 = vpop.f32.mrb[0].mxu0
        %v1806 = vpop.f32.mrb[0].mxu0
        %v1807 = vadd.f32 0.0, %v1806
        %v1808 = vpop.f32.mrb[0].mxu0
        %1809 = vmatprep.mubr.bf16.mxu0 0
        %1810 = vmatmul.mubr.bf16.gmra.mrb[0].mxu0 %v1061
        %v1811 = vpop.f32.mrb[0].mxu0
        %v1812 = vadd.f32 0.0, %v1811
        %v1813 = vpop.f32.mrb[0].mxu0
        %v1814 = vpop.f32.mrb[0].mxu0
        %v1815 = vadd.f32 0.0, %v1814
        %v1816 = vpop.f32.mrb[0].mxu0
        %1817 = vmatprep.mubr.bf16.mxu0 0
        %1818 = vmatmul.mubr.bf16.gmra.mrb[0].mxu0 %v1660
        %v1819 = vpop.f32.mrb[0].mxu0
        %v1820 = vadd.f32 0.0, %v1819
        %v1821 = vpop.f32.mrb[0].mxu0
        %v1822 = vpop.f32.mrb[0].mxu0
        %v1823 = vadd.f32 0.0, %v1822
        %v1824 = vpop.f32.mrb[0].mxu0
        %1825 = vdwg.mxu0
        %v1826 = vadd.f32 %v1620, %v1700
        %v1827 = vadd.f32 %v1621, %v1703
        %v1828 = vadd.f32 %v1622, %v1708
        %v1829 = vadd.f32 %v1623, %v1711
        %v1830 = vadd.f32 %v1624, %v1716
        %v1831 = vadd.f32 %v1625, %v1719
        %v1832 = vadd.f32 %v1626, %v1724
        %v1833 = vadd.f32 %v1627, %v1727
        %v1834 = vadd.f32 %v1628, %v1732
        %v1835 = vadd.f32 %v1629, %v1735
        %v1836 = vadd.f32 %v1630, %v1740
        %v1837 = vadd.f32 %v1631, %v1743
        %v1838 = vadd.f32 %v1632, %v1748
        %v1839 = vadd.f32 %v1633, %v1751
        %v1840 = vadd.f32 %v1634, %v1756
        %v1841 = vadd.f32 %v1635, %v1759
        %v1842 = vadd.f32 %v1636, %v1764
        %v1843 = vadd.f32 %v1637, %v1767
        %v1844 = vadd.f32 %v1638, %v1772
        %v1845 = vadd.f32 %v1639, %v1775
        %v1846 = vadd.f32 %v1640, %v1780
        %v1847 = vadd.f32 %v1641, %v1783
        %v1848 = vadd.f32 %v1642, %v1788
        %v1849 = vadd.f32 %v1643, %v1791
        %v1850 = vadd.f32 %v1644, %v1796
        %v1851 = vadd.f32 %v1645, %v1799
        %v1852 = vadd.f32 %v1646, %v1804
        %v1853 = vadd.f32 %v1647, %v1807
        %v1854 = vadd.f32 %v1648, %v1812
        %v1855 = vadd.f32 %v1649, %v1815
        %v1856 = vadd.f32 %v1650, %v1820
        %v1857 = vadd.f32 %v1651, %v1823
        %v1859 = vshrl.u32 %v277, 16
        %v1861 = vrot.slane %v1859, 4
        %v1862 = vshll.u32 %v277, 16
        %v1864 = vrot.slane %v1862, 5
        %v1865 = vor.u32 %v1861, %v1864
        %v1866 = vrot.slane %v1865, 4
        %v1868 = vshll.u32 %v278, 16
        %v1870 = vrot.slane %v1868, 5
        %v1871 = vsel %vm286, %v1866, %v1870
        %v1872 = vshrl.u32 %v278, 16
        %v1874 = vrot.slane %v1872, 4
        %v1875 = vor.u32 %v1874, %v1870
        %v1876 = vrot.slane %v1875, 4
        %v1878 = vshll.u32 %v279, 16
        %v1880 = vrot.slane %v1878, 5
        %v1881 = vsel %vm286, %v1876, %v1880
        %s1882 = scalar_lea.vmem %s219, 16
        %v1883 = vld [vmem:[%s1882] sm:$0xf]
        %v1884 = vunpack.c.l.b16 %v1871
        %v1885 = vunpack.c.l.b16 %v1881
        %v1886 = vpack.c.b16 %v1885, %v1884
        %v1888 = vsel %vm721, %v1886, 0
        %v1891 = vsel %vm770, %v1883, 0
        %1893 = vmatprep.subr.bf16.mxu0 0
        %1894 = vmatpush1.bf16.msra.mxu0 %v1891
        %1895 = vmatprep.subr.bf16.mxu0 0
        %1896 = vmatpush1.bf16.msra.mxu0 0
        %1897 = vmatprep.subr.bf16.mxu0 0
        %1898 = vmatpush1.bf16.msra.mxu0 0
        %1899 = vmatprep.subr.bf16.mxu0 0
        %1900 = vmatpush1.bf16.msra.mxu0 0
        %1901 = vmatprep.subr.bf16.mxu0 0
        %1902 = vmatpush1.bf16.msra.mxu0 0
        %1903 = vmatprep.subr.bf16.mxu0 0
        %1904 = vmatpush1.bf16.msra.mxu0 0
        %1905 = vmatprep.subr.bf16.mxu0 0
        %1906 = vmatpush1.bf16.msra.mxu0 0
        %1907 = vmatprep.subr.bf16.mxu0 0
        %1908 = vmatpush1.bf16.msra.mxu0 0
        %1909 = vmatprep.subr.bf16.mxu0 0
        %1910 = vmatpush1.bf16.msra.mxu0 0
        %1911 = vmatprep.subr.bf16.mxu0 0
        %1912 = vmatpush1.bf16.msra.mxu0 0
        %1913 = vmatprep.subr.bf16.mxu0 0
        %1914 = vmatpush1.bf16.msra.mxu0 0
        %1915 = vmatprep.subr.bf16.mxu0 0
        %1916 = vmatpush1.bf16.msra.mxu0 0
        %1917 = vmatprep.subr.bf16.mxu0 0
        %1918 = vmatpush1.bf16.msra.mxu0 0
        %1919 = vmatprep.subr.bf16.mxu0 0
        %1920 = vmatpush1.bf16.msra.mxu0 0
        %1921 = vmatprep.subr.bf16.mxu0 0
        %1922 = vmatpush1.bf16.msra.mxu0 0
        %1923 = vmatprep.subr.bf16.mxu0 0
        %1924 = vmatpush1.bf16.msra.mxu0 0
        %1925 = vmatprep.mubr.bf16.mxu0 0
        %1926 = vmatmul.mubr.bf16.gmra.mrb[0].mxu0 %v726
        %v1927 = vpop.f32.mrb[0].mxu0
        %v1928 = vadd.f32 0.0, %v1927
        %v1929 = vpop.f32.mrb[0].mxu0
        %v1930 = vpop.f32.mrb[0].mxu0
        %v1931 = vadd.f32 0.0, %v1930
        %v1932 = vpop.f32.mrb[0].mxu0
        %1933 = vmatprep.mubr.bf16.mxu0 0
        %1934 = vmatmul.mubr.bf16.gmra.mrb[0].mxu0 %v729
        %v1935 = vpop.f32.mrb[0].mxu0
        %v1936 = vadd.f32 0.0, %v1935
        %v1937 = vpop.f32.mrb[0].mxu0
        %v1938 = vpop.f32.mrb[0].mxu0
        %v1939 = vadd.f32 0.0, %v1938
        %v1940 = vpop.f32.mrb[0].mxu0
        %1941 = vmatprep.mubr.bf16.mxu0 0
        %1942 = vmatmul.mubr.bf16.gmra.mrb[0].mxu0 %v732
        %v1943 = vpop.f32.mrb[0].mxu0
        %v1944 = vadd.f32 0.0, %v1943
        %v1945 = vpop.f32.mrb[0].mxu0
        %v1946 = vpop.f32.mrb[0].mxu0
        %v1947 = vadd.f32 0.0, %v1946
        %v1948 = vpop.f32.mrb[0].mxu0
        %1949 = vmatprep.mubr.bf16.mxu0 0
        %1950 = vmatmul.mubr.bf16.gmra.mrb[0].mxu0 %v735
        %v1951 = vpop.f32.mrb[0].mxu0
        %v1952 = vadd.f32 0.0, %v1951
        %v1953 = vpop.f32.mrb[0].mxu0
        %v1954 = vpop.f32.mrb[0].mxu0
        %v1955 = vadd.f32 0.0, %v1954
        %v1956 = vpop.f32.mrb[0].mxu0
        %1957 = vmatprep.mubr.bf16.mxu0 0
        %1958 = vmatmul.mubr.bf16.gmra.mrb[0].mxu0 %v738
        %v1959 = vpop.f32.mrb[0].mxu0
        %v1960 = vadd.f32 0.0, %v1959
        %v1961 = vpop.f32.mrb[0].mxu0
        %v1962 = vpop.f32.mrb[0].mxu0
        %v1963 = vadd.f32 0.0, %v1962
        %v1964 = vpop.f32.mrb[0].mxu0
        %1965 = vmatprep.mubr.bf16.mxu0 0
        %1966 = vmatmul.mubr.bf16.gmra.mrb[0].mxu0 %v741
        %v1967 = vpop.f32.mrb[0].mxu0
        %v1968 = vadd.f32 0.0, %v1967
        %v1969 = vpop.f32.mrb[0].mxu0
        %v1970 = vpop.f32.mrb[0].mxu0
        %v1971 = vadd.f32 0.0, %v1970
        %v1972 = vpop.f32.mrb[0].mxu0
        %1973 = vmatprep.mubr.bf16.mxu0 0
        %1974 = vmatmul.mubr.bf16.gmra.mrb[0].mxu0 %v744
        %v1975 = vpop.f32.mrb[0].mxu0
        %v1976 = vadd.f32 0.0, %v1975
        %v1977 = vpop.f32.mrb[0].mxu0
        %v1978 = vpop.f32.mrb[0].mxu0
        %v1979 = vadd.f32 0.0, %v1978
        %v1980 = vpop.f32.mrb[0].mxu0
        %1981 = vmatprep.mubr.bf16.mxu0 0
        %1982 = vmatmul.mubr.bf16.gmra.mrb[0].mxu0 %v747
        %v1983 = vpop.f32.mrb[0].mxu0
        %v1984 = vadd.f32 0.0, %v1983
        %v1985 = vpop.f32.mrb[0].mxu0
        %v1986 = vpop.f32.mrb[0].mxu0
        %v1987 = vadd.f32 0.0, %v1986
        %v1988 = vpop.f32.mrb[0].mxu0
        %1989 = vmatprep.mubr.bf16.mxu0 0
        %1990 = vmatmul.mubr.bf16.gmra.mrb[0].mxu0 %v750
        %v1991 = vpop.f32.mrb[0].mxu0
        %v1992 = vadd.f32 0.0, %v1991
        %v1993 = vpop.f32.mrb[0].mxu0
        %v1994 = vpop.f32.mrb[0].mxu0
        %v1995 = vadd.f32 0.0, %v1994
        %v1996 = vpop.f32.mrb[0].mxu0
        %1997 = vmatprep.mubr.bf16.mxu0 0
        %1998 = vmatmul.mubr.bf16.gmra.mrb[0].mxu0 %v753
        %v1999 = vpop.f32.mrb[0].mxu0
        %v2000 = vadd.f32 0.0, %v1999
        %v2001 = vpop.f32.mrb[0].mxu0
        %v2002 = vpop.f32.mrb[0].mxu0
        %v2003 = vadd.f32 0.0, %v2002
        %v2004 = vpop.f32.mrb[0].mxu0
        %2005 = vmatprep.mubr.bf16.mxu0 0
        %2006 = vmatmul.mubr.bf16.gmra.mrb[0].mxu0 %v756
        %v2007 = vpop.f32.mrb[0].mxu0
        %v2008 = vadd.f32 0.0, %v2007
        %v2009 = vpop.f32.mrb[0].mxu0
        %v2010 = vpop.f32.mrb[0].mxu0
        %v2011 = vadd.f32 0.0, %v2010
        %v2012 = vpop.f32.mrb[0].mxu0
        %2013 = vmatprep.mubr.bf16.mxu0 0
        %2014 = vmatmul.mubr.bf16.gmra.mrb[0].mxu0 %v759
        %v2015 = vpop.f32.mrb[0].mxu0
        %v2016 = vadd.f32 0.0, %v2015
        %v2017 = vpop.f32.mrb[0].mxu0
        %v2018 = vpop.f32.mrb[0].mxu0
        %v2019 = vadd.f32 0.0, %v2018
        %v2020 = vpop.f32.mrb[0].mxu0
        %2021 = vmatprep.mubr.bf16.mxu0 0
        %2022 = vmatmul.mubr.bf16.gmra.mrb[0].mxu0 %v762
        %v2023 = vpop.f32.mrb[0].mxu0
        %v2024 = vadd.f32 0.0, %v2023
        %v2025 = vpop.f32.mrb[0].mxu0
        %v2026 = vpop.f32.mrb[0].mxu0
        %v2027 = vadd.f32 0.0, %v2026
        %v2028 = vpop.f32.mrb[0].mxu0
        %2029 = vmatprep.mubr.bf16.mxu0 0
        %2030 = vmatmul.mubr.bf16.gmra.mrb[0].mxu0 %v765
        %v2031 = vpop.f32.mrb[0].mxu0
        %v2032 = vadd.f32 0.0, %v2031
        %v2033 = vpop.f32.mrb[0].mxu0
        %v2034 = vpop.f32.mrb[0].mxu0
        %v2035 = vadd.f32 0.0, %v2034
        %v2036 = vpop.f32.mrb[0].mxu0
        %2037 = vmatprep.mubr.bf16.mxu0 0
        %2038 = vmatmul.mubr.bf16.gmra.mrb[0].mxu0 %v768
        %v2039 = vpop.f32.mrb[0].mxu0
        %v2040 = vadd.f32 0.0, %v2039
        %v2041 = vpop.f32.mrb[0].mxu0
        %v2042 = vpop.f32.mrb[0].mxu0
        %v2043 = vadd.f32 0.0, %v2042
        %v2044 = vpop.f32.mrb[0].mxu0
        %2045 = vmatprep.mubr.bf16.mxu0 0
        %2046 = vmatmul.mubr.bf16.gmra.mrb[0].mxu0 %v1888
        %v2047 = vpop.f32.mrb[0].mxu0
        %v2048 = vadd.f32 0.0, %v2047
        %v2049 = vpop.f32.mrb[0].mxu0
        %v2050 = vpop.f32.mrb[0].mxu0
        %v2051 = vadd.f32 0.0, %v2050
        %v2052 = vpop.f32.mrb[0].mxu0
        %2053 = vdwg.mxu0
        %v2054 = vadd.f32 %v1826, %v1928
        %v2055 = vadd.f32 %v1827, %v1931
        %v2056 = vadd.f32 %v1828, %v1936
        %v2057 = vadd.f32 %v1829, %v1939
        %v2058 = vadd.f32 %v1830, %v1944
        %v2059 = vadd.f32 %v1831, %v1947
        %v2060 = vadd.f32 %v1832, %v1952
        %v2061 = vadd.f32 %v1833, %v1955
        %v2062 = vadd.f32 %v1834, %v1960
        %v2063 = vadd.f32 %v1835, %v1963
        %v2064 = vadd.f32 %v1836, %v1968
        %v2065 = vadd.f32 %v1837, %v1971
        %v2066 = vadd.f32 %v1838, %v1976
        %v2067 = vadd.f32 %v1839, %v1979
        %v2068 = vadd.f32 %v1840, %v1984
        %v2069 = vadd.f32 %v1841, %v1987
        %v2070 = vadd.f32 %v1842, %v1992
        %v2071 = vadd.f32 %v1843, %v1995
        %v2072 = vadd.f32 %v1844, %v2000
        %v2073 = vadd.f32 %v1845, %v2003
        %v2074 = vadd.f32 %v1846, %v2008
        %v2075 = vadd.f32 %v1847, %v2011
        %v2076 = vadd.f32 %v1848, %v2016
        %v2077 = vadd.f32 %v1849, %v2019
        %v2078 = vadd.f32 %v1850, %v2024
        %v2079 = vadd.f32 %v1851, %v2027
        %v2080 = vadd.f32 %v1852, %v2032
        %v2081 = vadd.f32 %v1853, %v2035
        %v2082 = vadd.f32 %v1854, %v2040
        %v2083 = vadd.f32 %v1855, %v2043
        %v2084 = vadd.f32 %v1856, %v2048
        %v2085 = vadd.f32 %v1857, %v2051
        %v2087 = vrot.slane %v277, 5
        %v2088 = vrot.slane %v2087, 4
        %v2089 = vrot.slane %v278, 5
        %v2090 = vsel %vm1245, %v2088, %v2089
        %v2091 = vrot.slane %v2089, 4
        %v2092 = vrot.slane %v279, 5
        %v2093 = vsel %vm1245, %v2091, %v2092
        %s2094 = scalar_lea.vmem %s219, 20
        %v2095 = vld [vmem:[%s2094] sm:$0xf]
        %v2096 = vunpack.c.l.b16 %v2090
        %v2097 = vunpack.c.l.b16 %v2093
        %v2098 = vpack.c.b16 %v2097, %v2096
        %v2100 = vsel %vm721, %v2098, 0
        %v2103 = vsel %vm770, %v2095, 0
        %2105 = vmatprep.subr.bf16.mxu0 0
        %2106 = vmatpush1.bf16.msra.mxu0 %v2103
        %2107 = vmatprep.subr.bf16.mxu0 0
        %2108 = vmatpush1.bf16.msra.mxu0 0
        %2109 = vmatprep.subr.bf16.mxu0 0
        %2110 = vmatpush1.bf16.msra.mxu0 0
        %2111 = vmatprep.subr.bf16.mxu0 0
        %2112 = vmatpush1.bf16.msra.mxu0 0
        %2113 = vmatprep.subr.bf16.mxu0 0
        %2114 = vmatpush1.bf16.msra.mxu0 0
        %2115 = vmatprep.subr.bf16.mxu0 0
        %2116 = vmatpush1.bf16.msra.mxu0 0
        %2117 = vmatprep.subr.bf16.mxu0 0
        %2118 = vmatpush1.bf16.msra.mxu0 0
        %2119 = vmatprep.subr.bf16.mxu0 0
        %2120 = vmatpush1.bf16.msra.mxu0 0
        %2121 = vmatprep.subr.bf16.mxu0 0
        %2122 = vmatpush1.bf16.msra.mxu0 0
        %2123 = vmatprep.subr.bf16.mxu0 0
        %2124 = vmatpush1.bf16.msra.mxu0 0
        %2125 = vmatprep.subr.bf16.mxu0 0
        %2126 = vmatpush1.bf16.msra.mxu0 0
        %2127 = vmatprep.subr.bf16.mxu0 0
        %2128 = vmatpush1.bf16.msra.mxu0 0
        %2129 = vmatprep.subr.bf16.mxu0 0
        %2130 = vmatpush1.bf16.msra.mxu0 0
        %2131 = vmatprep.subr.bf16.mxu0 0
        %2132 = vmatpush1.bf16.msra.mxu0 0
        %2133 = vmatprep.subr.bf16.mxu0 0
        %2134 = vmatpush1.bf16.msra.mxu0 0
        %2135 = vmatprep.subr.bf16.mxu0 0
        %2136 = vmatpush1.bf16.msra.mxu0 0
        %2137 = vmatprep.mubr.bf16.mxu0 0
        %2138 = vmatmul.mubr.bf16.gmra.mrb[0].mxu0 %v1412
        %v2139 = vpop.f32.mrb[0].mxu0
        %v2140 = vadd.f32 0.0, %v2139
        %v2141 = vpop.f32.mrb[0].mxu0
        %v2142 = vpop.f32.mrb[0].mxu0
        %v2143 = vadd.f32 0.0, %v2142
        %v2144 = vpop.f32.mrb[0].mxu0
        %2145 = vmatprep.mubr.bf16.mxu0 0
        %2146 = vmatmul.mubr.bf16.gmra.mrb[0].mxu0 %v1415
        %v2147 = vpop.f32.mrb[0].mxu0
        %v2148 = vadd.f32 0.0, %v2147
        %v2149 = vpop.f32.mrb[0].mxu0
        %v2150 = vpop.f32.mrb[0].mxu0
        %v2151 = vadd.f32 0.0, %v2150
        %v2152 = vpop.f32.mrb[0].mxu0
        %2153 = vmatprep.mubr.bf16.mxu0 0
        %2154 = vmatmul.mubr.bf16.gmra.mrb[0].mxu0 %v1418
        %v2155 = vpop.f32.mrb[0].mxu0
        %v2156 = vadd.f32 0.0, %v2155
        %v2157 = vpop.f32.mrb[0].mxu0
        %v2158 = vpop.f32.mrb[0].mxu0
        %v2159 = vadd.f32 0.0, %v2158
        %v2160 = vpop.f32.mrb[0].mxu0
        %2161 = vmatprep.mubr.bf16.mxu0 0
        %2162 = vmatmul.mubr.bf16.gmra.mrb[0].mxu0 %v1421
        %v2163 = vpop.f32.mrb[0].mxu0
        %v2164 = vadd.f32 0.0, %v2163
        %v2165 = vpop.f32.mrb[0].mxu0
        %v2166 = vpop.f32.mrb[0].mxu0
        %v2167 = vadd.f32 0.0, %v2166
        %v2168 = vpop.f32.mrb[0].mxu0
        %2169 = vmatprep.mubr.bf16.mxu0 0
        %2170 = vmatmul.mubr.bf16.gmra.mrb[0].mxu0 %v1424
        %v2171 = vpop.f32.mrb[0].mxu0
        %v2172 = vadd.f32 0.0, %v2171
        %v2173 = vpop.f32.mrb[0].mxu0
        %v2174 = vpop.f32.mrb[0].mxu0
        %v2175 = vadd.f32 0.0, %v2174
        %v2176 = vpop.f32.mrb[0].mxu0
        %2177 = vmatprep.mubr.bf16.mxu0 0
        %2178 = vmatmul.mubr.bf16.gmra.mrb[0].mxu0 %v1427
        %v2179 = vpop.f32.mrb[0].mxu0
        %v2180 = vadd.f32 0.0, %v2179
        %v2181 = vpop.f32.mrb[0].mxu0
        %v2182 = vpop.f32.mrb[0].mxu0
        %v2183 = vadd.f32 0.0, %v2182
        %v2184 = vpop.f32.mrb[0].mxu0
        %2185 = vmatprep.mubr.bf16.mxu0 0
        %2186 = vmatmul.mubr.bf16.gmra.mrb[0].mxu0 %v1430
        %v2187 = vpop.f32.mrb[0].mxu0
        %v2188 = vadd.f32 0.0, %v2187
        %v2189 = vpop.f32.mrb[0].mxu0
        %v2190 = vpop.f32.mrb[0].mxu0
        %v2191 = vadd.f32 0.0, %v2190
        %v2192 = vpop.f32.mrb[0].mxu0
        %2193 = vmatprep.mubr.bf16.mxu0 0
        %2194 = vmatmul.mubr.bf16.gmra.mrb[0].mxu0 %v1433
        %v2195 = vpop.f32.mrb[0].mxu0
        %v2196 = vadd.f32 0.0, %v2195
        %v2197 = vpop.f32.mrb[0].mxu0
        %v2198 = vpop.f32.mrb[0].mxu0
        %v2199 = vadd.f32 0.0, %v2198
        %v2200 = vpop.f32.mrb[0].mxu0
        %2201 = vmatprep.mubr.bf16.mxu0 0
        %2202 = vmatmul.mubr.bf16.gmra.mrb[0].mxu0 %v1436
        %v2203 = vpop.f32.mrb[0].mxu0
        %v2204 = vadd.f32 0.0, %v2203
        %v2205 = vpop.f32.mrb[0].mxu0
        %v2206 = vpop.f32.mrb[0].mxu0
        %v2207 = vadd.f32 0.0, %v2206
        %v2208 = vpop.f32.mrb[0].mxu0
        %2209 = vmatprep.mubr.bf16.mxu0 0
        %2210 = vmatmul.mubr.bf16.gmra.mrb[0].mxu0 %v1439
        %v2211 = vpop.f32.mrb[0].mxu0
        %v2212 = vadd.f32 0.0, %v2211
        %v2213 = vpop.f32.mrb[0].mxu0
        %v2214 = vpop.f32.mrb[0].mxu0
        %v2215 = vadd.f32 0.0, %v2214
        %v2216 = vpop.f32.mrb[0].mxu0
        %2217 = vmatprep.mubr.bf16.mxu0 0
        %2218 = vmatmul.mubr.bf16.gmra.mrb[0].mxu0 %v1442
        %v2219 = vpop.f32.mrb[0].mxu0
        %v2220 = vadd.f32 0.0, %v2219
        %v2221 = vpop.f32.mrb[0].mxu0
        %v2222 = vpop.f32.mrb[0].mxu0
        %v2223 = vadd.f32 0.0, %v2222
        %v2224 = vpop.f32.mrb[0].mxu0
        %2225 = vmatprep.mubr.bf16.mxu0 0
        %2226 = vmatmul.mubr.bf16.gmra.mrb[0].mxu0 %v1445
        %v2227 = vpop.f32.mrb[0].mxu0
        %v2228 = vadd.f32 0.0, %v2227
        %v2229 = vpop.f32.mrb[0].mxu0
        %v2230 = vpop.f32.mrb[0].mxu0
        %v2231 = vadd.f32 0.0, %v2230
        %v2232 = vpop.f32.mrb[0].mxu0
        %2233 = vmatprep.mubr.bf16.mxu0 0
        %2234 = vmatmul.mubr.bf16.gmra.mrb[0].mxu0 %v1448
        %v2235 = vpop.f32.mrb[0].mxu0
        %v2236 = vadd.f32 0.0, %v2235
        %v2237 = vpop.f32.mrb[0].mxu0
        %v2238 = vpop.f32.mrb[0].mxu0
        %v2239 = vadd.f32 0.0, %v2238
        %v2240 = vpop.f32.mrb[0].mxu0
        %2241 = vmatprep.mubr.bf16.mxu0 0
        %2242 = vmatmul.mubr.bf16.gmra.mrb[0].mxu0 %v1451
        %v2243 = vpop.f32.mrb[0].mxu0
        %v2244 = vadd.f32 0.0, %v2243
        %v2245 = vpop.f32.mrb[0].mxu0
        %v2246 = vpop.f32.mrb[0].mxu0
        %v2247 = vadd.f32 0.0, %v2246
        %v2248 = vpop.f32.mrb[0].mxu0
        %2249 = vmatprep.mubr.bf16.mxu0 0
        %2250 = vmatmul.mubr.bf16.gmra.mrb[0].mxu0 %v1454
        %v2251 = vpop.f32.mrb[0].mxu0
        %v2252 = vadd.f32 0.0, %v2251
        %v2253 = vpop.f32.mrb[0].mxu0
        %v2254 = vpop.f32.mrb[0].mxu0
        %v2255 = vadd.f32 0.0, %v2254
        %v2256 = vpop.f32.mrb[0].mxu0
        %2257 = vmatprep.mubr.bf16.mxu0 0
        %2258 = vmatmul.mubr.bf16.gmra.mrb[0].mxu0 %v2100
        %v2259 = vpop.f32.mrb[0].mxu0
        %v2260 = vadd.f32 0.0, %v2259
        %v2261 = vpop.f32.mrb[0].mxu0
        %v2262 = vpop.f32.mrb[0].mxu0
        %v2263 = vadd.f32 0.0, %v2262
        %v2264 = vpop.f32.mrb[0].mxu0
        %2265 = vdwg.mxu0
        %v2266 = vadd.f32 %v2054, %v2140
        %v2267 = vadd.f32 %v2055, %v2143
        %v2268 = vadd.f32 %v2056, %v2148
        %v2269 = vadd.f32 %v2057, %v2151
        %v2270 = vadd.f32 %v2058, %v2156
        %v2271 = vadd.f32 %v2059, %v2159
        %v2272 = vadd.f32 %v2060, %v2164
        %v2273 = vadd.f32 %v2061, %v2167
        %v2274 = vadd.f32 %v2062, %v2172
        %v2275 = vadd.f32 %v2063, %v2175
        %v2276 = vadd.f32 %v2064, %v2180
        %v2277 = vadd.f32 %v2065, %v2183
        %v2278 = vadd.f32 %v2066, %v2188
        %v2279 = vadd.f32 %v2067, %v2191
        %v2280 = vadd.f32 %v2068, %v2196
        %v2281 = vadd.f32 %v2069, %v2199
        %v2282 = vadd.f32 %v2070, %v2204
        %v2283 = vadd.f32 %v2071, %v2207
        %v2284 = vadd.f32 %v2072, %v2212
        %v2285 = vadd.f32 %v2073, %v2215
        %v2286 = vadd.f32 %v2074, %v2220
        %v2287 = vadd.f32 %v2075, %v2223
        %v2288 = vadd.f32 %v2076, %v2228
        %v2289 = vadd.f32 %v2077, %v2231
        %v2290 = vadd.f32 %v2078, %v2236
        %v2291 = vadd.f32 %v2079, %v2239
        %v2292 = vadd.f32 %v2080, %v2244
        %v2293 = vadd.f32 %v2081, %v2247
        %v2294 = vadd.f32 %v2082, %v2252
        %v2295 = vadd.f32 %v2083, %v2255
        %v2296 = vadd.f32 %v2084, %v2260
        %v2297 = vadd.f32 %v2085, %v2263
        %s2298 = scalar_lea.vmem %s219, 24
        %v2299 = vld [vmem:[%s2298] sm:$0xf]
        %v2302 = vunpack.c.l.b16 %v280
        %v2303 = vunpack.c.l.b16 %v281
        %v2304 = vpack.c.b16 %v2303, %v2302
        %v2306 = vsel %vm721, %v2304, 0
        %v2309 = vsel %vm770, %v2299, 0
        %2311 = vmatprep.subr.bf16.mxu0 0
        %2312 = vmatpush1.bf16.msra.mxu0 %v2309
        %2313 = vmatprep.subr.bf16.mxu0 0
        %2314 = vmatpush1.bf16.msra.mxu0 0
        %2315 = vmatprep.subr.bf16.mxu0 0
        %2316 = vmatpush1.bf16.msra.mxu0 0
        %2317 = vmatprep.subr.bf16.mxu0 0
        %2318 = vmatpush1.bf16.msra.mxu0 0
        %2319 = vmatprep.subr.bf16.mxu0 0
        %2320 = vmatpush1.bf16.msra.mxu0 0
        %2321 = vmatprep.subr.bf16.mxu0 0
        %2322 = vmatpush1.bf16.msra.mxu0 0
        %2323 = vmatprep.subr.bf16.mxu0 0
        %2324 = vmatpush1.bf16.msra.mxu0 0
        %2325 = vmatprep.subr.bf16.mxu0 0
        %2326 = vmatpush1.bf16.msra.mxu0 0
        %2327 = vmatprep.subr.bf16.mxu0 0
        %2328 = vmatpush1.bf16.msra.mxu0 0
        %2329 = vmatprep.subr.bf16.mxu0 0
        %2330 = vmatpush1.bf16.msra.mxu0 0
        %2331 = vmatprep.subr.bf16.mxu0 0
        %2332 = vmatpush1.bf16.msra.mxu0 0
        %2333 = vmatprep.subr.bf16.mxu0 0
        %2334 = vmatpush1.bf16.msra.mxu0 0
        %2335 = vmatprep.subr.bf16.mxu0 0
        %2336 = vmatpush1.bf16.msra.mxu0 0
        %2337 = vmatprep.subr.bf16.mxu0 0
        %2338 = vmatpush1.bf16.msra.mxu0 0
        %2339 = vmatprep.subr.bf16.mxu0 0
        %2340 = vmatpush1.bf16.msra.mxu0 0
        %2341 = vmatprep.subr.bf16.mxu0 0
        %2342 = vmatpush1.bf16.msra.mxu0 0
        %2343 = vmatprep.mubr.bf16.mxu0 0
        %2344 = vmatmul.mubr.bf16.gmra.mrb[0].mxu0 %v1022
        %v2345 = vpop.f32.mrb[0].mxu0
        %v2346 = vadd.f32 0.0, %v2345
        %v2347 = vpop.f32.mrb[0].mxu0
        %v2348 = vpop.f32.mrb[0].mxu0
        %v2349 = vadd.f32 0.0, %v2348
        %v2350 = vpop.f32.mrb[0].mxu0
        %2351 = vmatprep.mubr.bf16.mxu0 0
        %2352 = vmatmul.mubr.bf16.gmra.mrb[0].mxu0 %v1025
        %v2353 = vpop.f32.mrb[0].mxu0
        %v2354 = vadd.f32 0.0, %v2353
        %v2355 = vpop.f32.mrb[0].mxu0
        %v2356 = vpop.f32.mrb[0].mxu0
        %v2357 = vadd.f32 0.0, %v2356
        %v2358 = vpop.f32.mrb[0].mxu0
        %2359 = vmatprep.mubr.bf16.mxu0 0
        %2360 = vmatmul.mubr.bf16.gmra.mrb[0].mxu0 %v1028
        %v2361 = vpop.f32.mrb[0].mxu0
        %v2362 = vadd.f32 0.0, %v2361
        %v2363 = vpop.f32.mrb[0].mxu0
        %v2364 = vpop.f32.mrb[0].mxu0
        %v2365 = vadd.f32 0.0, %v2364
        %v2366 = vpop.f32.mrb[0].mxu0
        %2367 = vmatprep.mubr.bf16.mxu0 0
        %2368 = vmatmul.mubr.bf16.gmra.mrb[0].mxu0 %v1031
        %v2369 = vpop.f32.mrb[0].mxu0
        %v2370 = vadd.f32 0.0, %v2369
        %v2371 = vpop.f32.mrb[0].mxu0
        %v2372 = vpop.f32.mrb[0].mxu0
        %v2373 = vadd.f32 0.0, %v2372
        %v2374 = vpop.f32.mrb[0].mxu0
        %2375 = vmatprep.mubr.bf16.mxu0 0
        %2376 = vmatmul.mubr.bf16.gmra.mrb[0].mxu0 %v1034
        %v2377 = vpop.f32.mrb[0].mxu0
        %v2378 = vadd.f32 0.0, %v2377
        %v2379 = vpop.f32.mrb[0].mxu0
        %v2380 = vpop.f32.mrb[0].mxu0
        %v2381 = vadd.f32 0.0, %v2380
        %v2382 = vpop.f32.mrb[0].mxu0
        %2383 = vmatprep.mubr.bf16.mxu0 0
        %2384 = vmatmul.mubr.bf16.gmra.mrb[0].mxu0 %v1037
        %v2385 = vpop.f32.mrb[0].mxu0
        %v2386 = vadd.f32 0.0, %v2385
        %v2387 = vpop.f32.mrb[0].mxu0
        %v2388 = vpop.f32.mrb[0].mxu0
        %v2389 = vadd.f32 0.0, %v2388
        %v2390 = vpop.f32.mrb[0].mxu0
        %2391 = vmatprep.mubr.bf16.mxu0 0
        %2392 = vmatmul.mubr.bf16.gmra.mrb[0].mxu0 %v1040
        %v2393 = vpop.f32.mrb[0].mxu0
        %v2394 = vadd.f32 0.0, %v2393
        %v2395 = vpop.f32.mrb[0].mxu0
        %v2396 = vpop.f32.mrb[0].mxu0
        %v2397 = vadd.f32 0.0, %v2396
        %v2398 = vpop.f32.mrb[0].mxu0
        %2399 = vmatprep.mubr.bf16.mxu0 0
        %2400 = vmatmul.mubr.bf16.gmra.mrb[0].mxu0 %v1043
        %v2401 = vpop.f32.mrb[0].mxu0
        %v2402 = vadd.f32 0.0, %v2401
        %v2403 = vpop.f32.mrb[0].mxu0
        %v2404 = vpop.f32.mrb[0].mxu0
        %v2405 = vadd.f32 0.0, %v2404
        %v2406 = vpop.f32.mrb[0].mxu0
        %2407 = vmatprep.mubr.bf16.mxu0 0
        %2408 = vmatmul.mubr.bf16.gmra.mrb[0].mxu0 %v1046
        %v2409 = vpop.f32.mrb[0].mxu0
        %v2410 = vadd.f32 0.0, %v2409
        %v2411 = vpop.f32.mrb[0].mxu0
        %v2412 = vpop.f32.mrb[0].mxu0
        %v2413 = vadd.f32 0.0, %v2412
        %v2414 = vpop.f32.mrb[0].mxu0
        %2415 = vmatprep.mubr.bf16.mxu0 0
        %2416 = vmatmul.mubr.bf16.gmra.mrb[0].mxu0 %v1049
        %v2417 = vpop.f32.mrb[0].mxu0
        %v2418 = vadd.f32 0.0, %v2417
        %v2419 = vpop.f32.mrb[0].mxu0
        %v2420 = vpop.f32.mrb[0].mxu0
        %v2421 = vadd.f32 0.0, %v2420
        %v2422 = vpop.f32.mrb[0].mxu0
        %2423 = vmatprep.mubr.bf16.mxu0 0
        %2424 = vmatmul.mubr.bf16.gmra.mrb[0].mxu0 %v1052
        %v2425 = vpop.f32.mrb[0].mxu0
        %v2426 = vadd.f32 0.0, %v2425
        %v2427 = vpop.f32.mrb[0].mxu0
        %v2428 = vpop.f32.mrb[0].mxu0
        %v2429 = vadd.f32 0.0, %v2428
        %v2430 = vpop.f32.mrb[0].mxu0
        %2431 = vmatprep.mubr.bf16.mxu0 0
        %2432 = vmatmul.mubr.bf16.gmra.mrb[0].mxu0 %v1055
        %v2433 = vpop.f32.mrb[0].mxu0
        %v2434 = vadd.f32 0.0, %v2433
        %v2435 = vpop.f32.mrb[0].mxu0
        %v2436 = vpop.f32.mrb[0].mxu0
        %v2437 = vadd.f32 0.0, %v2436
        %v2438 = vpop.f32.mrb[0].mxu0
        %2439 = vmatprep.mubr.bf16.mxu0 0
        %2440 = vmatmul.mubr.bf16.gmra.mrb[0].mxu0 %v1058
        %v2441 = vpop.f32.mrb[0].mxu0
        %v2442 = vadd.f32 0.0, %v2441
        %v2443 = vpop.f32.mrb[0].mxu0
        %v2444 = vpop.f32.mrb[0].mxu0
        %v2445 = vadd.f32 0.0, %v2444
        %v2446 = vpop.f32.mrb[0].mxu0
        %2447 = vmatprep.mubr.bf16.mxu0 0
        %2448 = vmatmul.mubr.bf16.gmra.mrb[0].mxu0 %v1061
        %v2449 = vpop.f32.mrb[0].mxu0
        %v2450 = vadd.f32 0.0, %v2449
        %v2451 = vpop.f32.mrb[0].mxu0
        %v2452 = vpop.f32.mrb[0].mxu0
        %v2453 = vadd.f32 0.0, %v2452
        %v2454 = vpop.f32.mrb[0].mxu0
        %2455 = vmatprep.mubr.bf16.mxu0 0
        %2456 = vmatmul.mubr.bf16.gmra.mrb[0].mxu0 %v1660
        %v2457 = vpop.f32.mrb[0].mxu0
        %v2458 = vadd.f32 0.0, %v2457
        %v2459 = vpop.f32.mrb[0].mxu0
        %v2460 = vpop.f32.mrb[0].mxu0
        %v2461 = vadd.f32 0.0, %v2460
        %v2462 = vpop.f32.mrb[0].mxu0
        %2463 = vmatprep.mubr.bf16.mxu0 0
        %2464 = vmatmul.mubr.bf16.gmra.mrb[0].mxu0 %v2306
        %v2465 = vpop.f32.mrb[0].mxu0
        %v2466 = vadd.f32 0.0, %v2465
        %v2467 = vpop.f32.mrb[0].mxu0
        %v2468 = vpop.f32.mrb[0].mxu0
        %v2469 = vadd.f32 0.0, %v2468
        %v2470 = vpop.f32.mrb[0].mxu0
        %2471 = vdwg.mxu0
        %v2472 = vadd.f32 %v2266, %v2346
        %v2473 = vadd.f32 %v2267, %v2349
        %v2474 = vadd.f32 %v2268, %v2354
        %v2475 = vadd.f32 %v2269, %v2357
        %v2476 = vadd.f32 %v2270, %v2362
        %v2477 = vadd.f32 %v2271, %v2365
        %v2478 = vadd.f32 %v2272, %v2370
        %v2479 = vadd.f32 %v2273, %v2373
        %v2480 = vadd.f32 %v2274, %v2378
        %v2481 = vadd.f32 %v2275, %v2381
        %v2482 = vadd.f32 %v2276, %v2386
        %v2483 = vadd.f32 %v2277, %v2389
        %v2484 = vadd.f32 %v2278, %v2394
        %v2485 = vadd.f32 %v2279, %v2397
        %v2486 = vadd.f32 %v2280, %v2402
        %v2487 = vadd.f32 %v2281, %v2405
        %v2488 = vadd.f32 %v2282, %v2410
        %v2489 = vadd.f32 %v2283, %v2413
        %v2490 = vadd.f32 %v2284, %v2418
        %v2491 = vadd.f32 %v2285, %v2421
        %v2492 = vadd.f32 %v2286, %v2426
        %v2493 = vadd.f32 %v2287, %v2429
        %v2494 = vadd.f32 %v2288, %v2434
        %v2495 = vadd.f32 %v2289, %v2437
        %v2496 = vadd.f32 %v2290, %v2442
        %v2497 = vadd.f32 %v2291, %v2445
        %v2498 = vadd.f32 %v2292, %v2450
        %v2499 = vadd.f32 %v2293, %v2453
        %v2500 = vadd.f32 %v2294, %v2458
        %v2501 = vadd.f32 %v2295, %v2461
        %v2502 = vadd.f32 %v2296, %v2466
        %v2503 = vadd.f32 %v2297, %v2469
        %v2505 = vshrl.u32 %v280, 16
        %v2507 = vrot.slane %v2505, 4
        %v2508 = vshll.u32 %v280, 16
        %v2510 = vrot.slane %v2508, 5
        %v2511 = vor.u32 %v2507, %v2510
        %v2512 = vrot.slane %v2511, 4
        %v2514 = vshll.u32 %v281, 16
        %v2516 = vrot.slane %v2514, 5
        %v2517 = vsel %vm286, %v2512, %v2516
        %v2518 = vshrl.u32 %v281, 16
        %v2520 = vrot.slane %v2518, 4
        %v2521 = vor.u32 %v2520, %v2516
        %v2522 = vrot.slane %v2521, 4
        %v2524 = vshll.u32 %v282, 16
        %v2526 = vrot.slane %v2524, 5
        %v2527 = vsel %vm286, %v2522, %v2526
        %s2528 = scalar_lea.vmem %s219, 28
        %v2529 = vld [vmem:[%s2528] sm:$0xf]
        %v2530 = vunpack.c.l.b16 %v2517
        %v2531 = vunpack.c.l.b16 %v2527
        %v2532 = vpack.c.b16 %v2531, %v2530
        %v2534 = vsel %vm721, %v2532, 0
        %v2537 = vsel %vm770, %v2529, 0
        %2539 = vmatprep.subr.bf16.mxu0 0
        %2540 = vmatpush1.bf16.msra.mxu0 %v2537
        %2541 = vmatprep.subr.bf16.mxu0 0
        %2542 = vmatpush1.bf16.msra.mxu0 0
        %2543 = vmatprep.subr.bf16.mxu0 0
        %2544 = vmatpush1.bf16.msra.mxu0 0
        %2545 = vmatprep.subr.bf16.mxu0 0
        %2546 = vmatpush1.bf16.msra.mxu0 0
        %2547 = vmatprep.subr.bf16.mxu0 0
        %2548 = vmatpush1.bf16.msra.mxu0 0
        %2549 = vmatprep.subr.bf16.mxu0 0
        %2550 = vmatpush1.bf16.msra.mxu0 0
        %2551 = vmatprep.subr.bf16.mxu0 0
        %2552 = vmatpush1.bf16.msra.mxu0 0
        %2553 = vmatprep.subr.bf16.mxu0 0
        %2554 = vmatpush1.bf16.msra.mxu0 0
        %2555 = vmatprep.subr.bf16.mxu0 0
        %2556 = vmatpush1.bf16.msra.mxu0 0
        %2557 = vmatprep.subr.bf16.mxu0 0
        %2558 = vmatpush1.bf16.msra.mxu0 0
        %2559 = vmatprep.subr.bf16.mxu0 0
        %2560 = vmatpush1.bf16.msra.mxu0 0
        %2561 = vmatprep.subr.bf16.mxu0 0
        %2562 = vmatpush1.bf16.msra.mxu0 0
        %2563 = vmatprep.subr.bf16.mxu0 0
        %2564 = vmatpush1.bf16.msra.mxu0 0
        %2565 = vmatprep.subr.bf16.mxu0 0
        %2566 = vmatpush1.bf16.msra.mxu0 0
        %2567 = vmatprep.subr.bf16.mxu0 0
        %2568 = vmatpush1.bf16.msra.mxu0 0
        %2569 = vmatprep.subr.bf16.mxu0 0
        %2570 = vmatpush1.bf16.msra.mxu0 0
        %2571 = vmatprep.mubr.bf16.mxu0 0
        %2572 = vmatmul.mubr.bf16.gmra.mrb[0].mxu0 %v729
        %v2573 = vpop.f32.mrb[0].mxu0
        %v2574 = vadd.f32 0.0, %v2573
        %v2575 = vpop.f32.mrb[0].mxu0
        %v2576 = vpop.f32.mrb[0].mxu0
        %v2577 = vadd.f32 0.0, %v2576
        %v2578 = vpop.f32.mrb[0].mxu0
        %2579 = vmatprep.mubr.bf16.mxu0 0
        %2580 = vmatmul.mubr.bf16.gmra.mrb[0].mxu0 %v732
        %v2581 = vpop.f32.mrb[0].mxu0
        %v2582 = vadd.f32 0.0, %v2581
        %v2583 = vpop.f32.mrb[0].mxu0
        %v2584 = vpop.f32.mrb[0].mxu0
        %v2585 = vadd.f32 0.0, %v2584
        %v2586 = vpop.f32.mrb[0].mxu0
        %2587 = vmatprep.mubr.bf16.mxu0 0
        %2588 = vmatmul.mubr.bf16.gmra.mrb[0].mxu0 %v735
        %v2589 = vpop.f32.mrb[0].mxu0
        %v2590 = vadd.f32 0.0, %v2589
        %v2591 = vpop.f32.mrb[0].mxu0
        %v2592 = vpop.f32.mrb[0].mxu0
        %v2593 = vadd.f32 0.0, %v2592
        %v2594 = vpop.f32.mrb[0].mxu0
        %2595 = vmatprep.mubr.bf16.mxu0 0
        %2596 = vmatmul.mubr.bf16.gmra.mrb[0].mxu0 %v738
        %v2597 = vpop.f32.mrb[0].mxu0
        %v2598 = vadd.f32 0.0, %v2597
        %v2599 = vpop.f32.mrb[0].mxu0
        %v2600 = vpop.f32.mrb[0].mxu0
        %v2601 = vadd.f32 0.0, %v2600
        %v2602 = vpop.f32.mrb[0].mxu0
        %2603 = vmatprep.mubr.bf16.mxu0 0
        %2604 = vmatmul.mubr.bf16.gmra.mrb[0].mxu0 %v741
        %v2605 = vpop.f32.mrb[0].mxu0
        %v2606 = vadd.f32 0.0, %v2605
        %v2607 = vpop.f32.mrb[0].mxu0
        %v2608 = vpop.f32.mrb[0].mxu0
        %v2609 = vadd.f32 0.0, %v2608
        %v2610 = vpop.f32.mrb[0].mxu0
        %2611 = vmatprep.mubr.bf16.mxu0 0
        %2612 = vmatmul.mubr.bf16.gmra.mrb[0].mxu0 %v744
        %v2613 = vpop.f32.mrb[0].mxu0
        %v2614 = vadd.f32 0.0, %v2613
        %v2615 = vpop.f32.mrb[0].mxu0
        %v2616 = vpop.f32.mrb[0].mxu0
        %v2617 = vadd.f32 0.0, %v2616
        %v2618 = vpop.f32.mrb[0].mxu0
        %2619 = vmatprep.mubr.bf16.mxu0 0
        %2620 = vmatmul.mubr.bf16.gmra.mrb[0].mxu0 %v747
        %v2621 = vpop.f32.mrb[0].mxu0
        %v2622 = vadd.f32 0.0, %v2621
        %v2623 = vpop.f32.mrb[0].mxu0
        %v2624 = vpop.f32.mrb[0].mxu0
        %v2625 = vadd.f32 0.0, %v2624
        %v2626 = vpop.f32.mrb[0].mxu0
        %2627 = vmatprep.mubr.bf16.mxu0 0
        %2628 = vmatmul.mubr.bf16.gmra.mrb[0].mxu0 %v750
        %v2629 = vpop.f32.mrb[0].mxu0
        %v2630 = vadd.f32 0.0, %v2629
        %v2631 = vpop.f32.mrb[0].mxu0
        %v2632 = vpop.f32.mrb[0].mxu0
        %v2633 = vadd.f32 0.0, %v2632
        %v2634 = vpop.f32.mrb[0].mxu0
        %2635 = vmatprep.mubr.bf16.mxu0 0
        %2636 = vmatmul.mubr.bf16.gmra.mrb[0].mxu0 %v753
        %v2637 = vpop.f32.mrb[0].mxu0
        %v2638 = vadd.f32 0.0, %v2637
        %v2639 = vpop.f32.mrb[0].mxu0
        %v2640 = vpop.f32.mrb[0].mxu0
        %v2641 = vadd.f32 0.0, %v2640
        %v2642 = vpop.f32.mrb[0].mxu0
        %2643 = vmatprep.mubr.bf16.mxu0 0
        %2644 = vmatmul.mubr.bf16.gmra.mrb[0].mxu0 %v756
        %v2645 = vpop.f32.mrb[0].mxu0
        %v2646 = vadd.f32 0.0, %v2645
        %v2647 = vpop.f32.mrb[0].mxu0
        %v2648 = vpop.f32.mrb[0].mxu0
        %v2649 = vadd.f32 0.0, %v2648
        %v2650 = vpop.f32.mrb[0].mxu0
        %2651 = vmatprep.mubr.bf16.mxu0 0
        %2652 = vmatmul.mubr.bf16.gmra.mrb[0].mxu0 %v759
        %v2653 = vpop.f32.mrb[0].mxu0
        %v2654 = vadd.f32 0.0, %v2653
        %v2655 = vpop.f32.mrb[0].mxu0
        %v2656 = vpop.f32.mrb[0].mxu0
        %v2657 = vadd.f32 0.0, %v2656
        %v2658 = vpop.f32.mrb[0].mxu0
        %2659 = vmatprep.mubr.bf16.mxu0 0
        %2660 = vmatmul.mubr.bf16.gmra.mrb[0].mxu0 %v762
        %v2661 = vpop.f32.mrb[0].mxu0
        %v2662 = vadd.f32 0.0, %v2661
        %v2663 = vpop.f32.mrb[0].mxu0
        %v2664 = vpop.f32.mrb[0].mxu0
        %v2665 = vadd.f32 0.0, %v2664
        %v2666 = vpop.f32.mrb[0].mxu0
        %2667 = vmatprep.mubr.bf16.mxu0 0
        %2668 = vmatmul.mubr.bf16.gmra.mrb[0].mxu0 %v765
        %v2669 = vpop.f32.mrb[0].mxu0
        %v2670 = vadd.f32 0.0, %v2669
        %v2671 = vpop.f32.mrb[0].mxu0
        %v2672 = vpop.f32.mrb[0].mxu0
        %v2673 = vadd.f32 0.0, %v2672
        %v2674 = vpop.f32.mrb[0].mxu0
        %2675 = vmatprep.mubr.bf16.mxu0 0
        %2676 = vmatmul.mubr.bf16.gmra.mrb[0].mxu0 %v768
        %v2677 = vpop.f32.mrb[0].mxu0
        %v2678 = vadd.f32 0.0, %v2677
        %v2679 = vpop.f32.mrb[0].mxu0
        %v2680 = vpop.f32.mrb[0].mxu0
        %v2681 = vadd.f32 0.0, %v2680
        %v2682 = vpop.f32.mrb[0].mxu0
        %2683 = vmatprep.mubr.bf16.mxu0 0
        %2684 = vmatmul.mubr.bf16.gmra.mrb[0].mxu0 %v1888
        %v2685 = vpop.f32.mrb[0].mxu0
        %v2686 = vadd.f32 0.0, %v2685
        %v2687 = vpop.f32.mrb[0].mxu0
        %v2688 = vpop.f32.mrb[0].mxu0
        %v2689 = vadd.f32 0.0, %v2688
        %v2690 = vpop.f32.mrb[0].mxu0
        %2691 = vmatprep.mubr.bf16.mxu0 0
        %2692 = vmatmul.mubr.bf16.gmra.mrb[0].mxu0 %v2534
        %v2693 = vpop.f32.mrb[0].mxu0
        %v2694 = vadd.f32 0.0, %v2693
        %v2695 = vpop.f32.mrb[0].mxu0
        %v2696 = vpop.f32.mrb[0].mxu0
        %v2697 = vadd.f32 0.0, %v2696
        %v2698 = vpop.f32.mrb[0].mxu0
        %2699 = vdwg.mxu0
        %v2700 = vadd.f32 %v2472, %v2574
        %v2701 = vadd.f32 %v2473, %v2577
        %v2702 = vadd.f32 %v2474, %v2582
        %v2703 = vadd.f32 %v2475, %v2585
        %v2704 = vadd.f32 %v2476, %v2590
        %v2705 = vadd.f32 %v2477, %v2593
        %v2706 = vadd.f32 %v2478, %v2598
        %v2707 = vadd.f32 %v2479, %v2601
        %v2708 = vadd.f32 %v2480, %v2606
        %v2709 = vadd.f32 %v2481, %v2609
        %v2710 = vadd.f32 %v2482, %v2614
        %v2711 = vadd.f32 %v2483, %v2617
        %v2712 = vadd.f32 %v2484, %v2622
        %v2713 = vadd.f32 %v2485, %v2625
        %v2714 = vadd.f32 %v2486, %v2630
        %v2715 = vadd.f32 %v2487, %v2633
        %v2716 = vadd.f32 %v2488, %v2638
        %v2717 = vadd.f32 %v2489, %v2641
        %v2718 = vadd.f32 %v2490, %v2646
        %v2719 = vadd.f32 %v2491, %v2649
        %v2720 = vadd.f32 %v2492, %v2654
        %v2721 = vadd.f32 %v2493, %v2657
        %v2722 = vadd.f32 %v2494, %v2662
        %v2723 = vadd.f32 %v2495, %v2665
        %v2724 = vadd.f32 %v2496, %v2670
        %v2725 = vadd.f32 %v2497, %v2673
        %v2726 = vadd.f32 %v2498, %v2678
        %v2727 = vadd.f32 %v2499, %v2681
        %v2728 = vadd.f32 %v2500, %v2686
        %v2729 = vadd.f32 %v2501, %v2689
        %v2730 = vadd.f32 %v2502, %v2694
        %v2731 = vadd.f32 %v2503, %v2697
        %v2733 = vrot.slane %v280, 5
        %v2734 = vrot.slane %v2733, 4
        %v2735 = vrot.slane %v281, 5
        %v2736 = vsel %vm1245, %v2734, %v2735
        %v2737 = vrot.slane %v2735, 4
        %v2738 = vrot.slane %v282, 5
        %v2739 = vsel %vm1245, %v2737, %v2738
        %s2740 = scalar_lea.vmem %s219, 32
        %v2741 = vld [vmem:[%s2740] sm:$0xf]
        %v2742 = vunpack.c.l.b16 %v2736
        %v2743 = vunpack.c.l.b16 %v2739
        %v2744 = vpack.c.b16 %v2743, %v2742
        %v2746 = vsel %vm721, %v2744, 0
        %v2749 = vsel %vm770, %v2741, 0
        %2751 = vmatprep.subr.bf16.mxu0 0
        %2752 = vmatpush1.bf16.msra.mxu0 %v2749
        %2753 = vmatprep.subr.bf16.mxu0 0
        %2754 = vmatpush1.bf16.msra.mxu0 0
        %2755 = vmatprep.subr.bf16.mxu0 0
        %2756 = vmatpush1.bf16.msra.mxu0 0
        %2757 = vmatprep.subr.bf16.mxu0 0
        %2758 = vmatpush1.bf16.msra.mxu0 0
        %2759 = vmatprep.subr.bf16.mxu0 0
        %2760 = vmatpush1.bf16.msra.mxu0 0
        %2761 = vmatprep.subr.bf16.mxu0 0
        %2762 = vmatpush1.bf16.msra.mxu0 0
        %2763 = vmatprep.subr.bf16.mxu0 0
        %2764 = vmatpush1.bf16.msra.mxu0 0
        %2765 = vmatprep.subr.bf16.mxu0 0
        %2766 = vmatpush1.bf16.msra.mxu0 0
        %2767 = vmatprep.subr.bf16.mxu0 0
        %2768 = vmatpush1.bf16.msra.mxu0 0
        %2769 = vmatprep.subr.bf16.mxu0 0
        %2770 = vmatpush1.bf16.msra.mxu0 0
        %2771 = vmatprep.subr.bf16.mxu0 0
        %2772 = vmatpush1.bf16.msra.mxu0 0
        %2773 = vmatprep.subr.bf16.mxu0 0
        %2774 = vmatpush1.bf16.msra.mxu0 0
        %2775 = vmatprep.subr.bf16.mxu0 0
        %2776 = vmatpush1.bf16.msra.mxu0 0
        %2777 = vmatprep.subr.bf16.mxu0 0
        %2778 = vmatpush1.bf16.msra.mxu0 0
        %2779 = vmatprep.subr.bf16.mxu0 0
        %2780 = vmatpush1.bf16.msra.mxu0 0
        %2781 = vmatprep.subr.bf16.mxu0 0
        %2782 = vmatpush1.bf16.msra.mxu0 0
        %2783 = vmatprep.mubr.bf16.mxu0 0
        %2784 = vmatmul.mubr.bf16.gmra.mrb[0].mxu0 %v1415
        %v2785 = vpop.f32.mrb[0].mxu0
        %v2786 = vadd.f32 0.0, %v2785
        %v2787 = vpop.f32.mrb[0].mxu0
        %v2788 = vpop.f32.mrb[0].mxu0
        %v2789 = vadd.f32 0.0, %v2788
        %v2790 = vpop.f32.mrb[0].mxu0
        %2791 = vmatprep.mubr.bf16.mxu0 0
        %2792 = vmatmul.mubr.bf16.gmra.mrb[0].mxu0 %v1418
        %v2793 = vpop.f32.mrb[0].mxu0
        %v2794 = vadd.f32 0.0, %v2793
        %v2795 = vpop.f32.mrb[0].mxu0
        %v2796 = vpop.f32.mrb[0].mxu0
        %v2797 = vadd.f32 0.0, %v2796
        %v2798 = vpop.f32.mrb[0].mxu0
        %2799 = vmatprep.mubr.bf16.mxu0 0
        %2800 = vmatmul.mubr.bf16.gmra.mrb[0].mxu0 %v1421
        %v2801 = vpop.f32.mrb[0].mxu0
        %v2802 = vadd.f32 0.0, %v2801
        %v2803 = vpop.f32.mrb[0].mxu0
        %v2804 = vpop.f32.mrb[0].mxu0
        %v2805 = vadd.f32 0.0, %v2804
        %v2806 = vpop.f32.mrb[0].mxu0
        %2807 = vmatprep.mubr.bf16.mxu0 0
        %2808 = vmatmul.mubr.bf16.gmra.mrb[0].mxu0 %v1424
        %v2809 = vpop.f32.mrb[0].mxu0
        %v2810 = vadd.f32 0.0, %v2809
        %v2811 = vpop.f32.mrb[0].mxu0
        %v2812 = vpop.f32.mrb[0].mxu0
        %v2813 = vadd.f32 0.0, %v2812
        %v2814 = vpop.f32.mrb[0].mxu0
        %2815 = vmatprep.mubr.bf16.mxu0 0
        %2816 = vmatmul.mubr.bf16.gmra.mrb[0].mxu0 %v1427
        %v2817 = vpop.f32.mrb[0].mxu0
        %v2818 = vadd.f32 0.0, %v2817
        %v2819 = vpop.f32.mrb[0].mxu0
        %v2820 = vpop.f32.mrb[0].mxu0
        %v2821 = vadd.f32 0.0, %v2820
        %v2822 = vpop.f32.mrb[0].mxu0
        %2823 = vmatprep.mubr.bf16.mxu0 0
        %2824 = vmatmul.mubr.bf16.gmra.mrb[0].mxu0 %v1430
        %v2825 = vpop.f32.mrb[0].mxu0
        %v2826 = vadd.f32 0.0, %v2825
        %v2827 = vpop.f32.mrb[0].mxu0
        %v2828 = vpop.f32.mrb[0].mxu0
        %v2829 = vadd.f32 0.0, %v2828
        %v2830 = vpop.f32.mrb[0].mxu0
        %2831 = vmatprep.mubr.bf16.mxu0 0
        %2832 = vmatmul.mubr.bf16.gmra.mrb[0].mxu0 %v1433
        %v2833 = vpop.f32.mrb[0].mxu0
        %v2834 = vadd.f32 0.0, %v2833
        %v2835 = vpop.f32.mrb[0].mxu0
        %v2836 = vpop.f32.mrb[0].mxu0
        %v2837 = vadd.f32 0.0, %v2836
        %v2838 = vpop.f32.mrb[0].mxu0
        %2839 = vmatprep.mubr.bf16.mxu0 0
        %2840 = vmatmul.mubr.bf16.gmra.mrb[0].mxu0 %v1436
        %v2841 = vpop.f32.mrb[0].mxu0
        %v2842 = vadd.f32 0.0, %v2841
        %v2843 = vpop.f32.mrb[0].mxu0
        %v2844 = vpop.f32.mrb[0].mxu0
        %v2845 = vadd.f32 0.0, %v2844
        %v2846 = vpop.f32.mrb[0].mxu0
        %2847 = vmatprep.mubr.bf16.mxu0 0
        %2848 = vmatmul.mubr.bf16.gmra.mrb[0].mxu0 %v1439
        %v2849 = vpop.f32.mrb[0].mxu0
        %v2850 = vadd.f32 0.0, %v2849
        %v2851 = vpop.f32.mrb[0].mxu0
        %v2852 = vpop.f32.mrb[0].mxu0
        %v2853 = vadd.f32 0.0, %v2852
        %v2854 = vpop.f32.mrb[0].mxu0
        %2855 = vmatprep.mubr.bf16.mxu0 0
        %2856 = vmatmul.mubr.bf16.gmra.mrb[0].mxu0 %v1442
        %v2857 = vpop.f32.mrb[0].mxu0
        %v2858 = vadd.f32 0.0, %v2857
        %v2859 = vpop.f32.mrb[0].mxu0
        %v2860 = vpop.f32.mrb[0].mxu0
        %v2861 = vadd.f32 0.0, %v2860
        %v2862 = vpop.f32.mrb[0].mxu0
        %2863 = vmatprep.mubr.bf16.mxu0 0
        %2864 = vmatmul.mubr.bf16.gmra.mrb[0].mxu0 %v1445
        %v2865 = vpop.f32.mrb[0].mxu0
        %v2866 = vadd.f32 0.0, %v2865
        %v2867 = vpop.f32.mrb[0].mxu0
        %v2868 = vpop.f32.mrb[0].mxu0
        %v2869 = vadd.f32 0.0, %v2868
        %v2870 = vpop.f32.mrb[0].mxu0
        %2871 = vmatprep.mubr.bf16.mxu0 0
        %2872 = vmatmul.mubr.bf16.gmra.mrb[0].mxu0 %v1448
        %v2873 = vpop.f32.mrb[0].mxu0
        %v2874 = vadd.f32 0.0, %v2873
        %v2875 = vpop.f32.mrb[0].mxu0
        %v2876 = vpop.f32.mrb[0].mxu0
        %v2877 = vadd.f32 0.0, %v2876
        %v2878 = vpop.f32.mrb[0].mxu0
        %2879 = vmatprep.mubr.bf16.mxu0 0
        %2880 = vmatmul.mubr.bf16.gmra.mrb[0].mxu0 %v1451
        %v2881 = vpop.f32.mrb[0].mxu0
        %v2882 = vadd.f32 0.0, %v2881
        %v2883 = vpop.f32.mrb[0].mxu0
        %v2884 = vpop.f32.mrb[0].mxu0
        %v2885 = vadd.f32 0.0, %v2884
        %v2886 = vpop.f32.mrb[0].mxu0
        %2887 = vmatprep.mubr.bf16.mxu0 0
        %2888 = vmatmul.mubr.bf16.gmra.mrb[0].mxu0 %v1454
        %v2889 = vpop.f32.mrb[0].mxu0
        %v2890 = vadd.f32 0.0, %v2889
        %v2891 = vpop.f32.mrb[0].mxu0
        %v2892 = vpop.f32.mrb[0].mxu0
        %v2893 = vadd.f32 0.0, %v2892
        %v2894 = vpop.f32.mrb[0].mxu0
        %2895 = vmatprep.mubr.bf16.mxu0 0
        %2896 = vmatmul.mubr.bf16.gmra.mrb[0].mxu0 %v2100
        %v2897 = vpop.f32.mrb[0].mxu0
        %v2898 = vadd.f32 0.0, %v2897
        %v2899 = vpop.f32.mrb[0].mxu0
        %v2900 = vpop.f32.mrb[0].mxu0
        %v2901 = vadd.f32 0.0, %v2900
        %v2902 = vpop.f32.mrb[0].mxu0
        %2903 = vmatprep.mubr.bf16.mxu0 0
        %2904 = vmatmul.mubr.bf16.gmra.mrb[0].mxu0 %v2746
        %v2905 = vpop.f32.mrb[0].mxu0
        %v2906 = vadd.f32 0.0, %v2905
        %v2907 = vpop.f32.mrb[0].mxu0
        %v2908 = vpop.f32.mrb[0].mxu0
        %v2909 = vadd.f32 0.0, %v2908
        %v2910 = vpop.f32.mrb[0].mxu0
        %2911 = vdwg.mxu0
        %v2912 = vadd.f32 %v2700, %v2786
        %v2913 = vadd.f32 %v2701, %v2789
        %v2914 = vadd.f32 %v2702, %v2794
        %v2915 = vadd.f32 %v2703, %v2797
        %v2916 = vadd.f32 %v2704, %v2802
        %v2917 = vadd.f32 %v2705, %v2805
        %v2918 = vadd.f32 %v2706, %v2810
        %v2919 = vadd.f32 %v2707, %v2813
        %v2920 = vadd.f32 %v2708, %v2818
        %v2921 = vadd.f32 %v2709, %v2821
        %v2922 = vadd.f32 %v2710, %v2826
        %v2923 = vadd.f32 %v2711, %v2829
        %v2924 = vadd.f32 %v2712, %v2834
        %v2925 = vadd.f32 %v2713, %v2837
        %v2926 = vadd.f32 %v2714, %v2842
        %v2927 = vadd.f32 %v2715, %v2845
        %v2928 = vadd.f32 %v2716, %v2850
        %v2929 = vadd.f32 %v2717, %v2853
        %v2930 = vadd.f32 %v2718, %v2858
        %v2931 = vadd.f32 %v2719, %v2861
        %v2932 = vadd.f32 %v2720, %v2866
        %v2933 = vadd.f32 %v2721, %v2869
        %v2934 = vadd.f32 %v2722, %v2874
        %v2935 = vadd.f32 %v2723, %v2877
        %v2936 = vadd.f32 %v2724, %v2882
        %v2937 = vadd.f32 %v2725, %v2885
        %v2938 = vadd.f32 %v2726, %v2890
        %v2939 = vadd.f32 %v2727, %v2893
        %v2940 = vadd.f32 %v2728, %v2898
        %v2941 = vadd.f32 %v2729, %v2901
        %v2942 = vadd.f32 %v2730, %v2906
        %v2943 = vadd.f32 %v2731, %v2909
        %v2944 = vld [vmem:[%s222] sm:$0x1]
        %v2946 = vlaneseq
        %v2947 = vshrl.u32 %v2946, 7
        %v2948 = vsub.s32 0, %v2947
        %v2949 = vrot.slane %v2944, %v2948
        %v2951 = vadd.f32 %v2912, %v2949
        %v2952 = vadd.f32 %v2913, %v2949
        %v2953 = vadd.f32 %v2914, %v2949
        %v2954 = vadd.f32 %v2915, %v2949
        %v2955 = vadd.f32 %v2916, %v2949
        %v2956 = vadd.f32 %v2917, %v2949
        %v2957 = vadd.f32 %v2918, %v2949
        %v2958 = vadd.f32 %v2919, %v2949
        %v2959 = vadd.f32 %v2920, %v2949
        %v2960 = vadd.f32 %v2921, %v2949
        %v2961 = vadd.f32 %v2922, %v2949
        %v2962 = vadd.f32 %v2923, %v2949
        %v2963 = vadd.f32 %v2924, %v2949
        %v2964 = vadd.f32 %v2925, %v2949
        %v2965 = vadd.f32 %v2926, %v2949
        %v2966 = vadd.f32 %v2927, %v2949
        %v2967 = vadd.f32 %v2928, %v2949
        %v2968 = vadd.f32 %v2929, %v2949
        %v2969 = vadd.f32 %v2930, %v2949
        %v2970 = vadd.f32 %v2931, %v2949
        %v2971 = vadd.f32 %v2932, %v2949
        %v2972 = vadd.f32 %v2933, %v2949
        %v2973 = vadd.f32 %v2934, %v2949
        %v2974 = vadd.f32 %v2935, %v2949
        %v2975 = vadd.f32 %v2936, %v2949
        %v2976 = vadd.f32 %v2937, %v2949
        %v2977 = vadd.f32 %v2938, %v2949
        %v2978 = vadd.f32 %v2939, %v2949
        %v2979 = vadd.f32 %v2940, %v2949
        %v2980 = vadd.f32 %v2941, %v2949
        %v2981 = vadd.f32 %v2942, %v2949
        %v2982 = vadd.f32 %v2943, %v2949
        %v2983 = vxor.u32 %v2951, 2147483648
        %v2984 = vxor.u32 %v2952, 2147483648
        %v2985 = vxor.u32 %v2953, 2147483648
        %v2986 = vxor.u32 %v2954, 2147483648
        %v2987 = vxor.u32 %v2955, 2147483648
        %v2988 = vxor.u32 %v2956, 2147483648
        %v2989 = vxor.u32 %v2957, 2147483648
        %v2990 = vxor.u32 %v2958, 2147483648
        %v2991 = vxor.u32 %v2959, 2147483648
        %v2992 = vxor.u32 %v2960, 2147483648
        %v2993 = vxor.u32 %v2961, 2147483648
        %v2994 = vxor.u32 %v2962, 2147483648
        %v2995 = vxor.u32 %v2963, 2147483648
        %v2996 = vxor.u32 %v2964, 2147483648
        %v2997 = vxor.u32 %v2965, 2147483648
        %v2998 = vxor.u32 %v2966, 2147483648
        %v2999 = vxor.u32 %v2967, 2147483648
        %v3000 = vxor.u32 %v2968, 2147483648
        %v3001 = vxor.u32 %v2969, 2147483648
        %v3002 = vxor.u32 %v2970, 2147483648
        %v3003 = vxor.u32 %v2971, 2147483648
        %v3004 = vxor.u32 %v2972, 2147483648
        %v3005 = vxor.u32 %v2973, 2147483648
        %v3006 = vxor.u32 %v2974, 2147483648
        %v3007 = vxor.u32 %v2975, 2147483648
        %v3008 = vxor.u32 %v2976, 2147483648
        %v3009 = vxor.u32 %v2977, 2147483648
        %v3010 = vxor.u32 %v2978, 2147483648
        %v3011 = vxor.u32 %v2979, 2147483648
        %v3012 = vxor.u32 %v2980, 2147483648
        %v3013 = vxor.u32 %v2981, 2147483648
        %v3014 = vxor.u32 %v2982, 2147483648
        %v3015 = vmul.f32 %v2983, 1.442695
        %v3016 = vpow.pop %v3015
        %v3017 = vmul.f32 %v2984, 1.442695
        %v3018 = vpow.pop %v3017
        %v3019 = vmul.f32 %v2985, 1.442695
        %v3020 = vpow.pop %v3019
        %v3021 = vmul.f32 %v2986, 1.442695
        %v3022 = vpow.pop %v3021
        %v3023 = vmul.f32 %v2987, 1.442695
        %v3024 = vpow.pop %v3023
        %v3025 = vmul.f32 %v2988, 1.442695
        %v3026 = vpow.pop %v3025
        %v3027 = vmul.f32 %v2989, 1.442695
        %v3028 = vpow.pop %v3027
        %v3029 = vmul.f32 %v2990, 1.442695
        %v3030 = vpow.pop %v3029
        %v3031 = vmul.f32 %v2991, 1.442695
        %v3032 = vpow.pop %v3031
        %v3033 = vmul.f32 %v2992, 1.442695
        %v3034 = vpow.pop %v3033
        %v3035 = vmul.f32 %v2993, 1.442695
        %v3036 = vpow.pop %v3035
        %v3037 = vmul.f32 %v2994, 1.442695
        %v3038 = vpow.pop %v3037
        %v3039 = vmul.f32 %v2995, 1.442695
        %v3040 = vpow.pop %v3039
        %v3041 = vmul.f32 %v2996, 1.442695
        %v3042 = vpow.pop %v3041
        %v3043 = vmul.f32 %v2997, 1.442695
        %v3044 = vpow.pop %v3043
        %v3045 = vmul.f32 %v2998, 1.442695
        %v3046 = vpow.pop %v3045
        %v3047 = vmul.f32 %v2999, 1.442695
        %v3048 = vpow.pop %v3047
        %v3049 = vmul.f32 %v3000, 1.442695
        %v3050 = vpow.pop %v3049
        %v3051 = vmul.f32 %v3001, 1.442695
        %v3052 = vpow.pop %v3051
        %v3053 = vmul.f32 %v3002, 1.442695
        %v3054 = vpow.pop %v3053
        %v3055 = vmul.f32 %v3003, 1.442695
        %v3056 = vpow.pop %v3055
        %v3057 = vmul.f32 %v3004, 1.442695
        %v3058 = vpow.pop %v3057
        %v3059 = vmul.f32 %v3005, 1.442695
        %v3060 = vpow.pop %v3059
        %v3061 = vmul.f32 %v3006, 1.442695
        %v3062 = vpow.pop %v3061
        %v3063 = vmul.f32 %v3007, 1.442695
        %v3064 = vpow.pop %v3063
        %v3065 = vmul.f32 %v3008, 1.442695
        %v3066 = vpow.pop %v3065
        %v3067 = vmul.f32 %v3009, 1.442695
        %v3068 = vpow.pop %v3067
        %v3069 = vmul.f32 %v3010, 1.442695
        %v3070 = vpow.pop %v3069
        %v3071 = vmul.f32 %v3011, 1.442695
        %v3072 = vpow.pop %v3071
        %v3073 = vmul.f32 %v3012, 1.442695
        %v3074 = vpow.pop %v3073
        %v3075 = vmul.f32 %v3013, 1.442695
        %v3076 = vpow.pop %v3075
        %v3077 = vmul.f32 %v3014, 1.442695
        %v3078 = vpow.pop %v3077
        %v3079 = vadd.f32 %v3016, 1.0
        %v3080 = vadd.f32 %v3018, 1.0
        %v3081 = vadd.f32 %v3020, 1.0
        %v3082 = vadd.f32 %v3022, 1.0
        %v3083 = vadd.f32 %v3024, 1.0
        %v3084 = vadd.f32 %v3026, 1.0
        %v3085 = vadd.f32 %v3028, 1.0
        %v3086 = vadd.f32 %v3030, 1.0
        %v3087 = vadd.f32 %v3032, 1.0
        %v3088 = vadd.f32 %v3034, 1.0
        %v3089 = vadd.f32 %v3036, 1.0
        %v3090 = vadd.f32 %v3038, 1.0
        %v3091 = vadd.f32 %v3040, 1.0
        %v3092 = vadd.f32 %v3042, 1.0
        %v3093 = vadd.f32 %v3044, 1.0
        %v3094 = vadd.f32 %v3046, 1.0
        %v3095 = vadd.f32 %v3048, 1.0
        %v3096 = vadd.f32 %v3050, 1.0
        %v3097 = vadd.f32 %v3052, 1.0
        %v3098 = vadd.f32 %v3054, 1.0
        %v3099 = vadd.f32 %v3056, 1.0
        %v3100 = vadd.f32 %v3058, 1.0
        %v3101 = vadd.f32 %v3060, 1.0
        %v3102 = vadd.f32 %v3062, 1.0
        %v3103 = vadd.f32 %v3064, 1.0
        %v3104 = vadd.f32 %v3066, 1.0
        %v3105 = vadd.f32 %v3068, 1.0
        %v3106 = vadd.f32 %v3070, 1.0
        %v3107 = vadd.f32 %v3072, 1.0
        %v3108 = vadd.f32 %v3074, 1.0
        %v3109 = vadd.f32 %v3076, 1.0
        %v3110 = vadd.f32 %v3078, 1.0
        %v3111 = vrcp.pop %v3079
        %v3112 = vmul.f32 1.0, %v3111
        %v3113 = vrcp.pop %v3080
        %v3114 = vmul.f32 1.0, %v3113
        %v3115 = vrcp.pop %v3081
        %v3116 = vmul.f32 1.0, %v3115
        %v3117 = vrcp.pop %v3082
        %v3118 = vmul.f32 1.0, %v3117
        %v3119 = vrcp.pop %v3083
        %v3120 = vmul.f32 1.0, %v3119
        %v3121 = vrcp.pop %v3084
        %v3122 = vmul.f32 1.0, %v3121
        %v3123 = vrcp.pop %v3085
        %v3124 = vmul.f32 1.0, %v3123
        %v3125 = vrcp.pop %v3086
        %v3126 = vmul.f32 1.0, %v3125
        %v3127 = vrcp.pop %v3087
        %v3128 = vmul.f32 1.0, %v3127
        %v3129 = vrcp.pop %v3088
        %v3130 = vmul.f32 1.0, %v3129
        %v3131 = vrcp.pop %v3089
        %v3132 = vmul.f32 1.0, %v3131
        %v3133 = vrcp.pop %v3090
        %v3134 = vmul.f32 1.0, %v3133
        %v3135 = vrcp.pop %v3091
        %v3136 = vmul.f32 1.0, %v3135
        %v3137 = vrcp.pop %v3092
        %v3138 = vmul.f32 1.0, %v3137
        %v3139 = vrcp.pop %v3093
        %v3140 = vmul.f32 1.0, %v3139
        %v3141 = vrcp.pop %v3094
        %v3142 = vmul.f32 1.0, %v3141
        %v3143 = vrcp.pop %v3095
        %v3144 = vmul.f32 1.0, %v3143
        %v3145 = vrcp.pop %v3096
        %v3146 = vmul.f32 1.0, %v3145
        %v3147 = vrcp.pop %v3097
        %v3148 = vmul.f32 1.0, %v3147
        %v3149 = vrcp.pop %v3098
        %v3150 = vmul.f32 1.0, %v3149
        %v3151 = vrcp.pop %v3099
        %v3152 = vmul.f32 1.0, %v3151
        %v3153 = vrcp.pop %v3100
        %v3154 = vmul.f32 1.0, %v3153
        %v3155 = vrcp.pop %v3101
        %v3156 = vmul.f32 1.0, %v3155
        %v3157 = vrcp.pop %v3102
        %v3158 = vmul.f32 1.0, %v3157
        %v3159 = vrcp.pop %v3103
        %v3160 = vmul.f32 1.0, %v3159
        %v3161 = vrcp.pop %v3104
        %v3162 = vmul.f32 1.0, %v3161
        %v3163 = vrcp.pop %v3105
        %v3164 = vmul.f32 1.0, %v3163
        %v3165 = vrcp.pop %v3106
        %v3166 = vmul.f32 1.0, %v3165
        %v3167 = vrcp.pop %v3107
        %v3168 = vmul.f32 1.0, %v3167
        %v3169 = vrcp.pop %v3108
        %v3170 = vmul.f32 1.0, %v3169
        %v3171 = vrcp.pop %v3109
        %v3172 = vmul.f32 1.0, %v3171
        %v3173 = vrcp.pop %v3110
        %v3174 = vmul.f32 1.0, %v3173
        %v3175 = vmul.f32 %v2951, %v3112
        %v3176 = vmul.f32 %v2952, %v3114
        %v3177 = vmul.f32 %v2953, %v3116
        %v3178 = vmul.f32 %v2954, %v3118
        %v3179 = vmul.f32 %v2955, %v3120
        %v3180 = vmul.f32 %v2956, %v3122
        %v3181 = vmul.f32 %v2957, %v3124
        %v3182 = vmul.f32 %v2958, %v3126
        %v3183 = vmul.f32 %v2959, %v3128
        %v3184 = vmul.f32 %v2960, %v3130
        %v3185 = vmul.f32 %v2961, %v3132
        %v3186 = vmul.f32 %v2962, %v3134
        %v3187 = vmul.f32 %v2963, %v3136
        %v3188 = vmul.f32 %v2964, %v3138
        %v3189 = vmul.f32 %v2965, %v3140
        %v3190 = vmul.f32 %v2966, %v3142
        %v3191 = vmul.f32 %v2967, %v3144
        %v3192 = vmul.f32 %v2968, %v3146
        %v3193 = vmul.f32 %v2969, %v3148
        %v3194 = vmul.f32 %v2970, %v3150
        %v3195 = vmul.f32 %v2971, %v3152
        %v3196 = vmul.f32 %v2972, %v3154
        %v3197 = vmul.f32 %v2973, %v3156
        %v3198 = vmul.f32 %v2974, %v3158
        %v3199 = vmul.f32 %v2975, %v3160
        %v3200 = vmul.f32 %v2976, %v3162
        %v3201 = vmul.f32 %v2977, %v3164
        %v3202 = vmul.f32 %v2978, %v3166
        %v3203 = vmul.f32 %v2979, %v3168
        %v3204 = vmul.f32 %v2980, %v3170
        %v3205 = vmul.f32 %v2981, %v3172
        %v3206 = vmul.f32 %v2982, %v3174
        %3207 = vst [vmem:[%s210] sm:$0xff] %v3175
        %3208 = vst [vmem:[%s210 + $0x8] sm:$0xff] %v3176
        %3209 = vst [vmem:[%s210 + $0x10] sm:$0xff] %v3177
        %3210 = vst [vmem:[%s210 + $0x18] sm:$0xff] %v3178
        %3211 = vst [vmem:[%s210 + $0x20] sm:$0xff] %v3179
        %3212 = vst [vmem:[%s210 + $0x28] sm:$0xff] %v3180
        %3213 = vst [vmem:[%s210 + $0x30] sm:$0xff] %v3181
        %3214 = vst [vmem:[%s210 + $0x38] sm:$0xff] %v3182
        %3215 = vst [vmem:[%s210 + $0x40] sm:$0xff] %v3183
        %3216 = vst [vmem:[%s210 + $0x48] sm:$0xff] %v3184
        %3217 = vst [vmem:[%s210 + $0x50] sm:$0xff] %v3185
        %3218 = vst [vmem:[%s210 + $0x58] sm:$0xff] %v3186
        %3219 = vst [vmem:[%s210 + $0x60] sm:$0xff] %v3187
        %3220 = vst [vmem:[%s210 + $0x68] sm:$0xff] %v3188
        %3221 = vst [vmem:[%s210 + $0x70] sm:$0xff] %v3189
        %3222 = vst [vmem:[%s210 + $0x78] sm:$0xff] %v3190
        %3223 = vst [vmem:[%s210 + $0x80] sm:$0xff] %v3191
        %3224 = vst [vmem:[%s210 + $0x88] sm:$0xff] %v3192
        %3225 = vst [vmem:[%s210 + $0x90] sm:$0xff] %v3193
        %3226 = vst [vmem:[%s210 + $0x98] sm:$0xff] %v3194
        %3227 = vst [vmem:[%s210 + $0xa0] sm:$0xff] %v3195
        %3228 = vst [vmem:[%s210 + $0xa8] sm:$0xff] %v3196
        %3229 = vst [vmem:[%s210 + $0xb0] sm:$0xff] %v3197
        %3230 = vst [vmem:[%s210 + $0xb8] sm:$0xff] %v3198
        %3231 = vst [vmem:[%s210 + $0xc0] sm:$0xff] %v3199
        %3232 = vst [vmem:[%s210 + $0xc8] sm:$0xff] %v3200
        %3233 = vst [vmem:[%s210 + $0xd0] sm:$0xff] %v3201
        %3234 = vst [vmem:[%s210 + $0xd8] sm:$0xff] %v3202
        %3235 = vst [vmem:[%s210 + $0xe0] sm:$0xff] %v3203
        %3236 = vst [vmem:[%s210 + $0xe8] sm:$0xff] %v3204
        %3237 = vst [vmem:[%s210 + $0xf0] sm:$0xff] %v3205
        %3238 = vst [vmem:[%s210 + $0xf8] sm:$0xff] %v3206
        %s3239 = sand.u32 %s126, 1
        %s3240 = scalar_lea.sflag [#allocation3], %s3239
        %s3241 = sand.u32 %s126, 1
        %s3242 = smul.addr %s3241, 256
        %s3243 = scalar_lea.vmem [#allocation2], %s3242
        // Predicated region
        $region33: #{tpu_custom_call.1} parent=31 // pred_check
          %p3244 = pneg %p136
        $region34: #{tpu_custom_call.1} parent=31 // pred_check_branch
          %3246 = sbr.rel (%p3244) target = $region36
        $region35: #{tpu_custom_call.1} parent=31 // pred_region
          %s3247 = smul.u32 16, %s24
          %s3249 = ssub.s32 4096, 4096
          %3250 = vsyncadd %s3240, %s3249
          %s3251 = smul.addr %s3247, 2
          %s3252 = sadd.s32 %s23, %s3251
          %s3253 = smul.addr %s22, 32
          %s3254 = sadd.s32 %s3252, %s3253
          %s3255 = smul.addr %s3254, 128
          %s3256 = scalar_lea.hbm %s3, %s3255
          %s3257 = sshll.u32 %s3243, 4
          %s3258 = int_to_ptr.vmem [resolvable:$true] %s3257
          %3263 = dma.vmem_to_hbm [thread:$0]  %s3258, 4096, %s3256, %s3240, 128, 128, 8
        $region36: #{tpu_custom_call.1} parent=31 // pred_fallthru
          _
      $region32: #{tpu_custom_call.1} parent=5 // pred_fallthru
        _
      %p3264 = scmp.le.s32.totalorder 2, %s12
      // Predicated region
      $region37: #{tpu_custom_call.1} parent=5 // pred_check
        %p3265 = pneg %p3264
      $region38: #{tpu_custom_call.1} parent=5 // pred_check_branch
        %3267 = sbr.rel (%p3265) target = $region40
      $region39: #{tpu_custom_call.1} parent=5 // pred_region
        %s3268 = ssub.s32 %s12, 2
        // Predicated region
        $region41: #{tpu_custom_call.1} parent=39 // pred_check
          %p3269 = pneg %p142
        $region42: #{tpu_custom_call.1} parent=39 // pred_check_branch
          %3271 = sbr.rel (%p3269) target = $region44
        $region43: #{tpu_custom_call.1} parent=39 // pred_region
          %s3272 = sand.u32 %s127, 1
          %s3273 = scalar_lea.sflag [#allocation3], %s3272
          %s3274 = sand.u32 %s127, 1
          %s3275 = smul.addr %s3274, 256
          %s3276 = scalar_lea.vmem [#allocation2], %s3275
          %3277 = dma.done %s3273, 4096
        $region44: #{tpu_custom_call.1} parent=39 // pred_fallthru
          _
      $region40: #{tpu_custom_call.1} parent=5 // pred_fallthru
        _
    $region6: #{tpu_custom_call.1} parent=1 // loop_footer
      %s16 = sadd.s32 1, %s12
    $region7: #{tpu_custom_call.1} parent=1 // loop_footer_branch
      %11 = sbr.rel target = $region3
    $region8: #{tpu_custom_call.1} parent=1 // loop_exit
      _
    %3278 = vsyncpa [#allocation3], 1
    %s3279 = scalar_lea.sflag [#allocation3], 1
    %3280 = vsyncpa %s3279, 1

</llo_original>
